<compile_context>
chip_gen: v7x
topology: tpu7x:2x2x1
jax: 0.10.0
libtpu: 0.0.40
codegen_flags: <defaults>
</compile_context>

<pallas_src>
import functools

import jax
import jax.numpy as jnp
from jax.experimental import pallas as pl
from jax.experimental.pallas import tpu as pltpu

EPS = 1e-5  # torch nn.LayerNorm default eps


def _layernorm(x, g, b):
    mu = jnp.mean(x, axis=-1, keepdims=True)
    var = jnp.mean(jnp.square(x - mu), axis=-1, keepdims=True)
    return (x - mu) * jax.lax.rsqrt(var + EPS) * g + b


def _gelu(x):
    # TODO(synk): torch nn.GELU default is the exact erf form; tanh approximation is used
    # in-kernel (tanh has a native EUP lowering, lax.erf has no guaranteed Mosaic lowering).
    c = 0.7978845608028654  # sqrt(2/pi)
    return 0.5 * x * (1.0 + jnp.tanh(c * (x + 0.044715 * x * x * x)))


# ---------------------------------------------------------------------------
# Fused kernel: embedding -> depth x transformer block -> final LN -> output head
# (single invocation, no grid; everything VMEM-resident)
# ---------------------------------------------------------------------------
def fused_ee_transformer_kernel(
        tok_ref, embed_ref, lvec_ref, bff1_ref, wqkv_ref, wo_ref, w1_ref, w2_ref,
        hvec_ref, wv_ref, bv_ref, o_ref,
        *, batch, seq_len, heads, dim_head, depth):
    n_rows = batch * seq_len
    inner = heads * dim_head
    scale = dim_head ** -0.5
    cdt = jnp.bfloat16          # MXU input dtype; accumulation stays f32

    # ---- embedding lookup as a one-hot matmul (bf16 MXU, f32 accumulate) ----
    num_tok = embed_ref.shape[0]
    tok = tok_ref[...]                                               # (N, 1) int32
    vocab_ids = jax.lax.broadcasted_iota(jnp.int32, (n_rows, num_tok), 1)
    onehot = (vocab_ids == tok).astype(cdt)                          # (N, num_tok)
    x = jnp.dot(onehot, embed_ref[...],
                preferred_element_type=jnp.float32)                  # (N, D) f32

    # ---- depth pre-LN transformer blocks (static unroll; all weights resident) ----
    for d in range(depth):
        lv = lvec_ref[d]                                             # (6, D) f32
        g1, b1 = lv[0:1], lv[1:2]
        g2, b2 = lv[2:3], lv[3:4]
        bo, bff2 = lv[4:5], lv[5:6]
        bff1 = bff1_ref[d]                                           # (1, mlp_dim) f32

        # ---- attention: x + Wo( softmax(QK^T * scale) V ), per-sequence, non-causal ----
        xn = _layernorm(x, g1, b1)
        qkv = jnp.dot(xn.astype(cdt), wqkv_ref[d],
                      preferred_element_type=jnp.float32)            # (N, 3*inner) f32
        qkv = qkv.reshape(batch, seq_len, 3 * inner)                 # sublane split only

        ctx_parts = []
        for h in range(heads):                                       # static lane slices; no transposes
            off = h * dim_head
            qh = qkv[:, :, off:off + dim_head]
            kh = qkv[:, :, inner + off:inner + off + dim_head]
            vh = qkv[:, :, 2 * inner + off:2 * inner + off + dim_head]
            s = jnp.einsum('bqd,bkd->bqk', qh.astype(cdt), kh.astype(cdt),
                           preferred_element_type=jnp.float32) * scale   # (B, S, S) f32
            s = s - jnp.max(s, axis=-1, keepdims=True)
            p = jnp.exp(s)
            p = p * pl.reciprocal(jnp.sum(p, axis=-1, keepdims=True), approx=True)
            ch = jnp.einsum('bqk,bkd->bqd', p.astype(cdt), vh.astype(cdt),
                            preferred_element_type=jnp.float32)          # (B, S, Dh) f32
            ctx_parts.append(ch.reshape(n_rows, dim_head))
        ctx = jnp.concatenate(ctx_parts, axis=-1)                    # (N, inner)

        attn = jnp.dot(ctx.astype(cdt), wo_ref[d],
                       preferred_element_type=jnp.float32) + bo
        x = x + attn

        # ---- feed-forward: x + W2 gelu(W1 LN(x)) ----
        xn2 = _layernorm(x, g2, b2)
        hmid = jnp.dot(xn2.astype(cdt), w1_ref[d],
                       preferred_element_type=jnp.float32) + bff1
        hmid = _gelu(hmid)
        y = jnp.dot(hmid.astype(cdt), w2_ref[d],
                    preferred_element_type=jnp.float32) + bff2
        x = x + y

    # ---- Transformer final LN -> OutputHead (LN -> Linear -> Softmax) ----
    hv = hvec_ref[...]                                               # (4, D): [gf, bf, gh, bh]
    z = _layernorm(x, hv[0:1], hv[1:2])                              # Transformer trailing LN
    z = _layernorm(z, hv[2:3], hv[3:4])                              # OutputHead LN
    logits = jnp.dot(z.astype(cdt), wv_ref[...],
                     preferred_element_type=jnp.float32) + bv_ref[...]
    logits = logits - jnp.max(logits, axis=-1, keepdims=True)
    pr = jnp.exp(logits)
    # exact divide once so output rows sum to 1 within f32 rounding
    o_ref[...] = pr / jnp.sum(pr, axis=-1, keepdims=True)


# ---------------------------------------------------------------------------
# pallas_call wrapper (single fused call, no grid — whole problem is VMEM-resident)
# ---------------------------------------------------------------------------
def run_early_exit_transformer(tok_flat, params, *, batch, seq_len, heads, dim_head, depth):
    n_rows = batch * seq_len
    vocab = params["wv"].shape[1]

    vmem = pl.BlockSpec(memory_space=pltpu.MemorySpace.VMEM)
    kernel = functools.partial(
        fused_ee_transformer_kernel,
        batch=batch, seq_len=seq_len, heads=heads, dim_head=dim_head, depth=depth)

    args = (tok_flat, params["embed"], params["lvec"], params["bff1"],
            params["wqkv"], params["wo"], params["w1"], params["w2"],
            params["hvec"], params["wv"], params["bv"])

    return pl.pallas_call(
        kernel,
        out_shape=jax.ShapeDtypeStruct((n_rows, vocab), jnp.float32),
        in_specs=[vmem] * len(args),
        out_specs=vmem,
    )(*args)


# ---------------------------------------------------------------------------
# Model wrapper (parameter construction is plain-JAX glue)
# ---------------------------------------------------------------------------
class EarlyExitTransformerPallas:
    def __init__(self, dim, depth, heads, num_tokens, seq_len, dim_head, num_robots,
                 vocab_out=128, key=jax.random.PRNGKey(0)):
        # NOTE: the torch module builds Transformer(dim, dim_head=dim, ...), so the effective
        # per-head dim is `dim`; the dim_head / num_robots / seq_len ctor args are unused by
        # forward(), matching the reference.
        self.dim = dim
        self.depth = depth
        self.heads = heads
        self.dim_head_eff = dim            # dim_head=dim as in the torch __init__
        self.mlp_dim = 4 * dim             # TODO(synk): zeta FeedForward default assumed = 4*dim
        inner = heads * self.dim_head_eff

        keys = list(jax.random.split(key, 4 * depth + 3))

        def nrm(k, shape, scale=0.02, dtype=jnp.float32):
            return (scale * jax.random.normal(k, shape)).astype(dtype)

        p = {}
        # nn.Embedding init ~ N(0, 1); stored bf16 (MXU-native for the one-hot gather matmul)
        p["embed"] = nrm(keys.pop(), (num_tokens, dim), scale=1.0, dtype=jnp.bfloat16)

        wqkv_l, wo_l, w1_l, w2_l = [], [], [], []
        for _ in range(depth):
            wqkv_l.append(nrm(keys.pop(), (dim, 3 * inner)))
            wo_l.append(nrm(keys.pop(), (inner, dim)))
            w1_l.append(nrm(keys.pop(), (dim, self.mlp_dim)))
            w2_l.append(nrm(keys.pop(), (self.mlp_dim, dim)))
        p["wqkv"] = jnp.stack(wqkv_l).astype(jnp.bfloat16)            # (depth, dim, 3*inner)
        p["wo"] = jnp.stack(wo_l).astype(jnp.bfloat16)                # (depth, inner, dim)
        p["w1"] = jnp.stack(w1_l).astype(jnp.bfloat16)                # (depth, dim, mlp_dim)
        p["w2"] = jnp.stack(w2_l).astype(jnp.bfloat16)                # (depth, mlp_dim, dim)

        # packed per-layer vectors: rows = [g1, b1, g2, b2, bo, bff2]  -> (depth, 6, dim) f32
        ones = jnp.ones((depth, 1, dim), jnp.float32)
        zeros = jnp.zeros((depth, 1, dim), jnp.float32)
        p["lvec"] = jnp.concatenate([ones, zeros, ones, zeros, zeros, zeros], axis=1)
        p["bff1"] = jnp.zeros((depth, 1, self.mlp_dim), jnp.float32)

        # packed head vectors: rows = [gf, bf, gh, bh] (transformer final LN + OutputHead LN)
        p["hvec"] = jnp.concatenate(
            [jnp.ones((1, dim)), jnp.zeros((1, dim)),
             jnp.ones((1, dim)), jnp.zeros((1, dim))], axis=0).astype(jnp.float32)
        p["wv"] = nrm(keys.pop(), (dim, vocab_out), dtype=jnp.bfloat16)
        p["bv"] = nrm(keys.pop(), (1, vocab_out))
        self.params = p

    def __call__(self, tokens):
        B, S = tokens.shape
        tok_flat = tokens.reshape(B * S, 1).astype(jnp.int32)   # batch flattened into rows
        out = run_early_exit_transformer(
            tok_flat, self.params, batch=B, seq_len=S,
            heads=self.heads, dim_head=self.dim_head_eff, depth=self.depth)
        return out.reshape(B, S, -1)


if __name__ == "__main__":
    B, S = 2, 8
    DIM, DEPTH, HEADS = 32, 2, 4
    NUM_TOKENS, DIM_HEAD, NUM_ROBOTS = 64, 16, 3
    VOCAB_OUT = 128

    root = jax.random.PRNGKey(0)
    k_tok, k_param = jax.random.split(root)
    tokens = jax.random.randint(k_tok, (B, S), 0, NUM_TOKENS, dtype=jnp.int32)

    model = EarlyExitTransformerPallas(
        dim=DIM, depth=DEPTH, heads=HEADS, num_tokens=NUM_TOKENS, seq_len=S,
        dim_head=DIM_HEAD, num_robots=NUM_ROBOTS, vocab_out=VOCAB_OUT, key=k_param)

    out = jax.block_until_ready(model(tokens))

    assert out.shape == (B, S, VOCAB_OUT)
    # softmax rows sum to 1 (final softmax uses an exact divide)
    assert bool(jnp.allclose(jnp.sum(out, axis=-1), 1.0, atol=1e-4))
    assert bool(jnp.all(jnp.isfinite(out)))
    print("KERNEL_OK")
</pallas_src>

<mosaic_0001>
module attributes {stable_mosaic.version = 11 : i64} {
  func.func @fused_ee_transformer_kernel(%arg0: memref<16x1xi32, #tpu.memory_space<vmem>>, %arg1: memref<64x32xbf16, #tpu.memory_space<vmem>>, %arg2: memref<2x6x32xf32, #tpu.memory_space<vmem>>, %arg3: memref<2x1x128xf32, #tpu.memory_space<vmem>>, %arg4: memref<2x32x384xbf16, #tpu.memory_space<vmem>>, %arg5: memref<2x128x32xbf16, #tpu.memory_space<vmem>>, %arg6: memref<2x32x128xbf16, #tpu.memory_space<vmem>>, %arg7: memref<2x128x32xbf16, #tpu.memory_space<vmem>>, %arg8: memref<4x32xf32, #tpu.memory_space<vmem>>, %arg9: memref<32x128xbf16, #tpu.memory_space<vmem>>, %arg10: memref<1x128xf32, #tpu.memory_space<vmem>>, %arg11: memref<16x128xf32, #tpu.memory_space<vmem>>) attributes {dimension_semantics = [], scalar_prefetch = 0 : i64, scratch_operands = 0 : i64, tpu.core_type = #tpu.core_type<tc>} {
    %c0 = arith.constant 0 : index
    %c0_0 = arith.constant 0 : index
    %0 = vector.load %arg0[%c0, %c0_0] : memref<16x1xi32, #tpu.memory_space<vmem>>, vector<16x1xi32>
    %1 = tpu.iota {dimensions = array<i32: 1>} : vector<16x64xi32>
    %2 = vector.broadcast %0 : vector<16x1xi32> to vector<16x64xi32>
    %3 = arith.cmpi eq, %1, %2 : vector<16x64xi32>
    %4 = arith.extui %3 : vector<16x64xi1> to vector<16x64xi32>
    %5 = arith.sitofp %4 : vector<16x64xi32> to vector<16x64xf32>
    %6 = arith.truncf %5 : vector<16x64xf32> to vector<16x64xbf16>
    %c0_1 = arith.constant 0 : index
    %c0_2 = arith.constant 0 : index
    %7 = vector.load %arg1[%c0_1, %c0_2] : memref<64x32xbf16, #tpu.memory_space<vmem>>, vector<64x32xbf16>
    %cst = arith.constant dense<0.000000e+00> : vector<16x32xf32>
    %8 = tpu.matmul %6, %7, %cst {dimension_numbers = #tpu.dot_dimension_numbers<[1], [0], [0], [1], [0, 0, 1, 1], [], []>} : vector<16x64xbf16>, vector<64x32xbf16>, vector<16x32xf32> -> vector<16x32xf32>
    %c0_3 = arith.constant 0 : index
    %c0_4 = arith.constant 0 : index
    %c0_5 = arith.constant 0 : index
    %9 = vector.load %arg2[%c0_3, %c0_4, %c0_5] : memref<2x6x32xf32, #tpu.memory_space<vmem>>, vector<1x6x32xf32>
    %10 = vector.shape_cast %9 : vector<1x6x32xf32> to vector<6x32xf32>
    %11 = vector.extract_strided_slice %10 {offsets = [0, 0], sizes = [1, 32], strides = [1, 1]} : vector<6x32xf32> to vector<1x32xf32>
    %12 = vector.extract_strided_slice %10 {offsets = [1, 0], sizes = [1, 32], strides = [1, 1]} : vector<6x32xf32> to vector<1x32xf32>
    %13 = vector.extract_strided_slice %10 {offsets = [2, 0], sizes = [1, 32], strides = [1, 1]} : vector<6x32xf32> to vector<1x32xf32>
    %14 = vector.extract_strided_slice %10 {offsets = [3, 0], sizes = [1, 32], strides = [1, 1]} : vector<6x32xf32> to vector<1x32xf32>
    %15 = vector.extract_strided_slice %10 {offsets = [4, 0], sizes = [1, 32], strides = [1, 1]} : vector<6x32xf32> to vector<1x32xf32>
    %16 = vector.extract_strided_slice %10 {offsets = [5, 0], sizes = [1, 32], strides = [1, 1]} : vector<6x32xf32> to vector<1x32xf32>
    %c0_6 = arith.constant 0 : index
    %c0_7 = arith.constant 0 : index
    %c0_8 = arith.constant 0 : index
    %17 = vector.load %arg3[%c0_6, %c0_7, %c0_8] : memref<2x1x128xf32, #tpu.memory_space<vmem>>, vector<1x1x128xf32>
    %18 = vector.shape_cast %17 : vector<1x1x128xf32> to vector<1x128xf32>
    %cst_9 = arith.constant dense<0.000000e+00> : vector<16xf32>
    %19 = vector.multi_reduction <add>, %8, %cst_9 [1] : vector<16x32xf32> to vector<16xf32>
    %20 = vector.shape_cast %19 : vector<16xf32> to vector<16x1xf32>
    %cst_10 = arith.constant 3.200000e+01 : f32
    %21 = vector.broadcast %cst_10 : f32 to vector<16x1xf32>
    %22 = arith.divf %20, %21 : vector<16x1xf32>
    %23 = vector.broadcast %22 : vector<16x1xf32> to vector<16x32xf32>
    %24 = arith.subf %8, %23 : vector<16x32xf32>
    %25 = arith.mulf %24, %24 : vector<16x32xf32>
    %cst_11 = arith.constant dense<0.000000e+00> : vector<16xf32>
    %26 = vector.multi_reduction <add>, %25, %cst_11 [1] : vector<16x32xf32> to vector<16xf32>
    %27 = vector.shape_cast %26 : vector<16xf32> to vector<16x1xf32>
    %cst_12 = arith.constant 3.200000e+01 : f32
    %28 = vector.broadcast %cst_12 : f32 to vector<16x1xf32>
    %29 = arith.divf %27, %28 : vector<16x1xf32>
    %30 = vector.broadcast %22 : vector<16x1xf32> to vector<16x32xf32>
    %31 = arith.subf %8, %30 : vector<16x32xf32>
    %cst_13 = arith.constant 9.99999974E-6 : f32
    %32 = vector.broadcast %cst_13 : f32 to vector<16x1xf32>
    %33 = arith.addf %29, %32 : vector<16x1xf32>
    %34 = math.rsqrt %33 : vector<16x1xf32>
    %35 = vector.broadcast %34 : vector<16x1xf32> to vector<16x32xf32>
    %36 = arith.mulf %31, %35 : vector<16x32xf32>
    %37 = vector.broadcast %11 : vector<1x32xf32> to vector<16x32xf32>
    %38 = arith.mulf %36, %37 : vector<16x32xf32>
    %39 = vector.broadcast %12 : vector<1x32xf32> to vector<16x32xf32>
    %40 = arith.addf %38, %39 : vector<16x32xf32>
    %41 = arith.truncf %40 : vector<16x32xf32> to vector<16x32xbf16>
    %c0_14 = arith.constant 0 : index
    %c0_15 = arith.constant 0 : index
    %c0_16 = arith.constant 0 : index
    %42 = vector.load %arg4[%c0_14, %c0_15, %c0_16] : memref<2x32x384xbf16, #tpu.memory_space<vmem>>, vector<1x32x384xbf16>
    %43 = vector.shape_cast %42 : vector<1x32x384xbf16> to vector<32x384xbf16>
    %cst_17 = arith.constant dense<0.000000e+00> : vector<16x384xf32>
    %44 = tpu.matmul %41, %43, %cst_17 {dimension_numbers = #tpu.dot_dimension_numbers<[1], [0], [0], [1], [0, 0, 1, 1], [], []>} : vector<16x32xbf16>, vector<32x384xbf16>, vector<16x384xf32> -> vector<16x384xf32>
    %45 = vector.shape_cast %44 : vector<16x384xf32> to vector<2x8x384xf32>
    %46 = vector.extract_strided_slice %45 {offsets = [0, 0, 0], sizes = [2, 8, 32], strides = [1, 1, 1]} : vector<2x8x384xf32> to vector<2x8x32xf32>
    %47 = vector.extract_strided_slice %45 {offsets = [0, 0, 128], sizes = [2, 8, 32], strides = [1, 1, 1]} : vector<2x8x384xf32> to vector<2x8x32xf32>
    %48 = vector.extract_strided_slice %45 {offsets = [0, 0, 256], sizes = [2, 8, 32], strides = [1, 1, 1]} : vector<2x8x384xf32> to vector<2x8x32xf32>
    %49 = arith.truncf %46 : vector<2x8x32xf32> to vector<2x8x32xbf16>
    %50 = arith.truncf %47 : vector<2x8x32xf32> to vector<2x8x32xbf16>
    "tpu.trace_start"() <{level = 10 : i32, message = "bqd,bkd->bqk"}> : () -> ()
    %cst_18 = arith.constant dense<0.000000e+00> : vector<2x8x8xf32>
    %51 = tpu.matmul %49, %50, %cst_18 {dimension_numbers = #tpu.dot_dimension_numbers<[2], [2], [1], [1], [0, 0, 0, 1, 1, 1], [0], [0]>} : vector<2x8x32xbf16>, vector<2x8x32xbf16>, vector<2x8x8xf32> -> vector<2x8x8xf32>
    "tpu.trace_stop"() : () -> ()
    %cst_19 = arith.constant 0.176776692 : f32
    %52 = vector.broadcast %cst_19 : f32 to vector<2x8x8xf32>
    %53 = arith.mulf %51, %52 : vector<2x8x8xf32>
    %cst_20 = arith.constant dense<0xFF800000> : vector<2x8xf32>
    %54 = vector.multi_reduction <maximumf>, %53, %cst_20 [2] : vector<2x8x8xf32> to vector<2x8xf32>
    %55 = vector.shape_cast %54 : vector<2x8xf32> to vector<2x8x1xf32>
    %56 = vector.broadcast %55 : vector<2x8x1xf32> to vector<2x8x8xf32>
    %57 = arith.subf %53, %56 : vector<2x8x8xf32>
    %58 = math.exp %57 : vector<2x8x8xf32>
    %cst_21 = arith.constant dense<0.000000e+00> : vector<2x8xf32>
    %59 = vector.multi_reduction <add>, %58, %cst_21 [2] : vector<2x8x8xf32> to vector<2x8xf32>
    %60 = vector.shape_cast %59 : vector<2x8xf32> to vector<2x8x1xf32>
    %61 = tpu.reciprocal %60 {approx = true} : vector<2x8x1xf32> -> vector<2x8x1xf32>
    %62 = vector.broadcast %61 : vector<2x8x1xf32> to vector<2x8x8xf32>
    %63 = arith.mulf %58, %62 : vector<2x8x8xf32>
    %64 = arith.truncf %63 : vector<2x8x8xf32> to vector<2x8x8xbf16>
    %65 = arith.truncf %48 : vector<2x8x32xf32> to vector<2x8x32xbf16>
    "tpu.trace_start"() <{level = 10 : i32, message = "bqk,bkd->bqd"}> : () -> ()
    %cst_22 = arith.constant dense<0.000000e+00> : vector<2x8x32xf32>
    %66 = tpu.matmul %64, %65, %cst_22 {dimension_numbers = #tpu.dot_dimension_numbers<[2], [1], [1], [2], [0, 0, 0, 1, 1, 2], [0], [0]>} : vector<2x8x8xbf16>, vector<2x8x32xbf16>, vector<2x8x32xf32> -> vector<2x8x32xf32>
    "tpu.trace_stop"() : () -> ()
    %67 = vector.shape_cast %66 : vector<2x8x32xf32> to vector<16x32xf32>
    %68 = vector.extract_strided_slice %45 {offsets = [0, 0, 32], sizes = [2, 8, 32], strides = [1, 1, 1]} : vector<2x8x384xf32> to vector<2x8x32xf32>
    %69 = vector.extract_strided_slice %45 {offsets = [0, 0, 160], sizes = [2, 8, 32], strides = [1, 1, 1]} : vector<2x8x384xf32> to vector<2x8x32xf32>
    %70 = vector.extract_strided_slice %45 {offsets = [0, 0, 288], sizes = [2, 8, 32], strides = [1, 1, 1]} : vector<2x8x384xf32> to vector<2x8x32xf32>
    %71 = arith.truncf %68 : vector<2x8x32xf32> to vector<2x8x32xbf16>
    %72 = arith.truncf %69 : vector<2x8x32xf32> to vector<2x8x32xbf16>
    "tpu.trace_start"() <{level = 10 : i32, message = "bqd,bkd->bqk"}> : () -> ()
    %cst_23 = arith.constant dense<0.000000e+00> : vector<2x8x8xf32>
    %73 = tpu.matmul %71, %72, %cst_23 {dimension_numbers = #tpu.dot_dimension_numbers<[2], [2], [1], [1], [0, 0, 0, 1, 1, 1], [0], [0]>} : vector<2x8x32xbf16>, vector<2x8x32xbf16>, vector<2x8x8xf32> -> vector<2x8x8xf32>
    "tpu.trace_stop"() : () -> ()
    %cst_24 = arith.constant 0.176776692 : f32
    %74 = vector.broadcast %cst_24 : f32 to vector<2x8x8xf32>
    %75 = arith.mulf %73, %74 : vector<2x8x8xf32>
    %cst_25 = arith.constant dense<0xFF800000> : vector<2x8xf32>
    %76 = vector.multi_reduction <maximumf>, %75, %cst_25 [2] : vector<2x8x8xf32> to vector<2x8xf32>
    %77 = vector.shape_cast %76 : vector<2x8xf32> to vector<2x8x1xf32>
    %78 = vector.broadcast %77 : vector<2x8x1xf32> to vector<2x8x8xf32>
    %79 = arith.subf %75, %78 : vector<2x8x8xf32>
    %80 = math.exp %79 : vector<2x8x8xf32>
    %cst_26 = arith.constant dense<0.000000e+00> : vector<2x8xf32>
    %81 = vector.multi_reduction <add>, %80, %cst_26 [2] : vector<2x8x8xf32> to vector<2x8xf32>
    %82 = vector.shape_cast %81 : vector<2x8xf32> to vector<2x8x1xf32>
    %83 = tpu.reciprocal %82 {approx = true} : vector<2x8x1xf32> -> vector<2x8x1xf32>
    %84 = vector.broadcast %83 : vector<2x8x1xf32> to vector<2x8x8xf32>
    %85 = arith.mulf %80, %84 : vector<2x8x8xf32>
    %86 = arith.truncf %85 : vector<2x8x8xf32> to vector<2x8x8xbf16>
    %87 = arith.truncf %70 : vector<2x8x32xf32> to vector<2x8x32xbf16>
    "tpu.trace_start"() <{level = 10 : i32, message = "bqk,bkd->bqd"}> : () -> ()
    %cst_27 = arith.constant dense<0.000000e+00> : vector<2x8x32xf32>
    %88 = tpu.matmul %86, %87, %cst_27 {dimension_numbers = #tpu.dot_dimension_numbers<[2], [1], [1], [2], [0, 0, 0, 1, 1, 2], [0], [0]>} : vector<2x8x8xbf16>, vector<2x8x32xbf16>, vector<2x8x32xf32> -> vector<2x8x32xf32>
    "tpu.trace_stop"() : () -> ()
    %89 = vector.shape_cast %88 : vector<2x8x32xf32> to vector<16x32xf32>
    %90 = vector.extract_strided_slice %45 {offsets = [0, 0, 64], sizes = [2, 8, 32], strides = [1, 1, 1]} : vector<2x8x384xf32> to vector<2x8x32xf32>
    %91 = vector.extract_strided_slice %45 {offsets = [0, 0, 192], sizes = [2, 8, 32], strides = [1, 1, 1]} : vector<2x8x384xf32> to vector<2x8x32xf32>
    %92 = vector.extract_strided_slice %45 {offsets = [0, 0, 320], sizes = [2, 8, 32], strides = [1, 1, 1]} : vector<2x8x384xf32> to vector<2x8x32xf32>
    %93 = arith.truncf %90 : vector<2x8x32xf32> to vector<2x8x32xbf16>
    %94 = arith.truncf %91 : vector<2x8x32xf32> to vector<2x8x32xbf16>
    "tpu.trace_start"() <{level = 10 : i32, message = "bqd,bkd->bqk"}> : () -> ()
    %cst_28 = arith.constant dense<0.000000e+00> : vector<2x8x8xf32>
    %95 = tpu.matmul %93, %94, %cst_28 {dimension_numbers = #tpu.dot_dimension_numbers<[2], [2], [1], [1], [0, 0, 0, 1, 1, 1], [0], [0]>} : vector<2x8x32xbf16>, vector<2x8x32xbf16>, vector<2x8x8xf32> -> vector<2x8x8xf32>
    "tpu.trace_stop"() : () -> ()
    %cst_29 = arith.constant 0.176776692 : f32
    %96 = vector.broadcast %cst_29 : f32 to vector<2x8x8xf32>
    %97 = arith.mulf %95, %96 : vector<2x8x8xf32>
    %cst_30 = arith.constant dense<0xFF800000> : vector<2x8xf32>
    %98 = vector.multi_reduction <maximumf>, %97, %cst_30 [2] : vector<2x8x8xf32> to vector<2x8xf32>
    %99 = vector.shape_cast %98 : vector<2x8xf32> to vector<2x8x1xf32>
    %100 = vector.broadcast %99 : vector<2x8x1xf32> to vector<2x8x8xf32>
    %101 = arith.subf %97, %100 : vector<2x8x8xf32>
    %102 = math.exp %101 : vector<2x8x8xf32>
    %cst_31 = arith.constant dense<0.000000e+00> : vector<2x8xf32>
    %103 = vector.multi_reduction <add>, %102, %cst_31 [2] : vector<2x8x8xf32> to vector<2x8xf32>
    %104 = vector.shape_cast %103 : vector<2x8xf32> to vector<2x8x1xf32>
    %105 = tpu.reciprocal %104 {approx = true} : vector<2x8x1xf32> -> vector<2x8x1xf32>
    %106 = vector.broadcast %105 : vector<2x8x1xf32> to vector<2x8x8xf32>
    %107 = arith.mulf %102, %106 : vector<2x8x8xf32>
    %108 = arith.truncf %107 : vector<2x8x8xf32> to vector<2x8x8xbf16>
    %109 = arith.truncf %92 : vector<2x8x32xf32> to vector<2x8x32xbf16>
    "tpu.trace_start"() <{level = 10 : i32, message = "bqk,bkd->bqd"}> : () -> ()
    %cst_32 = arith.constant dense<0.000000e+00> : vector<2x8x32xf32>
    %110 = tpu.matmul %108, %109, %cst_32 {dimension_numbers = #tpu.dot_dimension_numbers<[2], [1], [1], [2], [0, 0, 0, 1, 1, 2], [0], [0]>} : vector<2x8x8xbf16>, vector<2x8x32xbf16>, vector<2x8x32xf32> -> vector<2x8x32xf32>
    "tpu.trace_stop"() : () -> ()
    %111 = vector.shape_cast %110 : vector<2x8x32xf32> to vector<16x32xf32>
    %112 = vector.extract_strided_slice %45 {offsets = [0, 0, 96], sizes = [2, 8, 32], strides = [1, 1, 1]} : vector<2x8x384xf32> to vector<2x8x32xf32>
    %113 = vector.extract_strided_slice %45 {offsets = [0, 0, 224], sizes = [2, 8, 32], strides = [1, 1, 1]} : vector<2x8x384xf32> to vector<2x8x32xf32>
    %114 = vector.extract_strided_slice %45 {offsets = [0, 0, 352], sizes = [2, 8, 32], strides = [1, 1, 1]} : vector<2x8x384xf32> to vector<2x8x32xf32>
    %115 = arith.truncf %112 : vector<2x8x32xf32> to vector<2x8x32xbf16>
    %116 = arith.truncf %113 : vector<2x8x32xf32> to vector<2x8x32xbf16>
    "tpu.trace_start"() <{level = 10 : i32, message = "bqd,bkd->bqk"}> : () -> ()
    %cst_33 = arith.constant dense<0.000000e+00> : vector<2x8x8xf32>
    %117 = tpu.matmul %115, %116, %cst_33 {dimension_numbers = #tpu.dot_dimension_numbers<[2], [2], [1], [1], [0, 0, 0, 1, 1, 1], [0], [0]>} : vector<2x8x32xbf16>, vector<2x8x32xbf16>, vector<2x8x8xf32> -> vector<2x8x8xf32>
    "tpu.trace_stop"() : () -> ()
    %cst_34 = arith.constant 0.176776692 : f32
    %118 = vector.broadcast %cst_34 : f32 to vector<2x8x8xf32>
    %119 = arith.mulf %117, %118 : vector<2x8x8xf32>
    %cst_35 = arith.constant dense<0xFF800000> : vector<2x8xf32>
    %120 = vector.multi_reduction <maximumf>, %119, %cst_35 [2] : vector<2x8x8xf32> to vector<2x8xf32>
    %121 = vector.shape_cast %120 : vector<2x8xf32> to vector<2x8x1xf32>
    %122 = vector.broadcast %121 : vector<2x8x1xf32> to vector<2x8x8xf32>
    %123 = arith.subf %119, %122 : vector<2x8x8xf32>
    %124 = math.exp %123 : vector<2x8x8xf32>
    %cst_36 = arith.constant dense<0.000000e+00> : vector<2x8xf32>
    %125 = vector.multi_reduction <add>, %124, %cst_36 [2] : vector<2x8x8xf32> to vector<2x8xf32>
    %126 = vector.shape_cast %125 : vector<2x8xf32> to vector<2x8x1xf32>
    %127 = tpu.reciprocal %126 {approx = true} : vector<2x8x1xf32> -> vector<2x8x1xf32>
    %128 = vector.broadcast %127 : vector<2x8x1xf32> to vector<2x8x8xf32>
    %129 = arith.mulf %124, %128 : vector<2x8x8xf32>
    %130 = arith.truncf %129 : vector<2x8x8xf32> to vector<2x8x8xbf16>
    %131 = arith.truncf %114 : vector<2x8x32xf32> to vector<2x8x32xbf16>
    "tpu.trace_start"() <{level = 10 : i32, message = "bqk,bkd->bqd"}> : () -> ()
    %cst_37 = arith.constant dense<0.000000e+00> : vector<2x8x32xf32>
    %132 = tpu.matmul %130, %131, %cst_37 {dimension_numbers = #tpu.dot_dimension_numbers<[2], [1], [1], [2], [0, 0, 0, 1, 1, 2], [0], [0]>} : vector<2x8x8xbf16>, vector<2x8x32xbf16>, vector<2x8x32xf32> -> vector<2x8x32xf32>
    "tpu.trace_stop"() : () -> ()
    %133 = vector.shape_cast %132 : vector<2x8x32xf32> to vector<16x32xf32>
    %134 = tpu.concatenate %67, %89, %111, %133 in 1 : vector<16x32xf32>, vector<16x32xf32>, vector<16x32xf32>, vector<16x32xf32> -> vector<16x128xf32>
    %135 = arith.truncf %134 : vector<16x128xf32> to vector<16x128xbf16>
    %c0_38 = arith.constant 0 : index
    %c0_39 = arith.constant 0 : index
    %c0_40 = arith.constant 0 : index
    %136 = vector.load %arg5[%c0_38, %c0_39, %c0_40] : memref<2x128x32xbf16, #tpu.memory_space<vmem>>, vector<1x128x32xbf16>
    %137 = vector.shape_cast %136 : vector<1x128x32xbf16> to vector<128x32xbf16>
    %cst_41 = arith.constant dense<0.000000e+00> : vector<16x32xf32>
    %138 = tpu.matmul %135, %137, %cst_41 {dimension_numbers = #tpu.dot_dimension_numbers<[1], [0], [0], [1], [0, 0, 1, 1], [], []>} : vector<16x128xbf16>, vector<128x32xbf16>, vector<16x32xf32> -> vector<16x32xf32>
    %139 = vector.broadcast %15 : vector<1x32xf32> to vector<16x32xf32>
    %140 = arith.addf %138, %139 : vector<16x32xf32>
    %141 = arith.addf %8, %140 : vector<16x32xf32>
    %cst_42 = arith.constant dense<0.000000e+00> : vector<16xf32>
    %142 = vector.multi_reduction <add>, %141, %cst_42 [1] : vector<16x32xf32> to vector<16xf32>
    %143 = vector.shape_cast %142 : vector<16xf32> to vector<16x1xf32>
    %cst_43 = arith.constant 3.200000e+01 : f32
    %144 = vector.broadcast %cst_43 : f32 to vector<16x1xf32>
    %145 = arith.divf %143, %144 : vector<16x1xf32>
    %146 = vector.broadcast %145 : vector<16x1xf32> to vector<16x32xf32>
    %147 = arith.subf %141, %146 : vector<16x32xf32>
    %148 = arith.mulf %147, %147 : vector<16x32xf32>
    %cst_44 = arith.constant dense<0.000000e+00> : vector<16xf32>
    %149 = vector.multi_reduction <add>, %148, %cst_44 [1] : vector<16x32xf32> to vector<16xf32>
    %150 = vector.shape_cast %149 : vector<16xf32> to vector<16x1xf32>
    %cst_45 = arith.constant 3.200000e+01 : f32
    %151 = vector.broadcast %cst_45 : f32 to vector<16x1xf32>
    %152 = arith.divf %150, %151 : vector<16x1xf32>
    %153 = vector.broadcast %145 : vector<16x1xf32> to vector<16x32xf32>
    %154 = arith.subf %141, %153 : vector<16x32xf32>
    %cst_46 = arith.constant 9.99999974E-6 : f32
    %155 = vector.broadcast %cst_46 : f32 to vector<16x1xf32>
    %156 = arith.addf %152, %155 : vector<16x1xf32>
    %157 = math.rsqrt %156 : vector<16x1xf32>
    %158 = vector.broadcast %157 : vector<16x1xf32> to vector<16x32xf32>
    %159 = arith.mulf %154, %158 : vector<16x32xf32>
    %160 = vector.broadcast %13 : vector<1x32xf32> to vector<16x32xf32>
    %161 = arith.mulf %159, %160 : vector<16x32xf32>
    %162 = vector.broadcast %14 : vector<1x32xf32> to vector<16x32xf32>
    %163 = arith.addf %161, %162 : vector<16x32xf32>
    %164 = arith.truncf %163 : vector<16x32xf32> to vector<16x32xbf16>
    %c0_47 = arith.constant 0 : index
    %c0_48 = arith.constant 0 : index
    %c0_49 = arith.constant 0 : index
    %165 = vector.load %arg6[%c0_47, %c0_48, %c0_49] : memref<2x32x128xbf16, #tpu.memory_space<vmem>>, vector<1x32x128xbf16>
    %166 = vector.shape_cast %165 : vector<1x32x128xbf16> to vector<32x128xbf16>
    %cst_50 = arith.constant dense<0.000000e+00> : vector<16x128xf32>
    %167 = tpu.matmul %164, %166, %cst_50 {dimension_numbers = #tpu.dot_dimension_numbers<[1], [0], [0], [1], [0, 0, 1, 1], [], []>} : vector<16x32xbf16>, vector<32x128xbf16>, vector<16x128xf32> -> vector<16x128xf32>
    %168 = vector.broadcast %18 : vector<1x128xf32> to vector<16x128xf32>
    %169 = arith.addf %167, %168 : vector<16x128xf32>
    %cst_51 = arith.constant 5.000000e-01 : f32
    %170 = vector.broadcast %cst_51 : f32 to vector<16x128xf32>
    %171 = arith.mulf %170, %169 : vector<16x128xf32>
    %cst_52 = arith.constant 4.471500e-02 : f32
    %172 = vector.broadcast %cst_52 : f32 to vector<16x128xf32>
    %173 = arith.mulf %172, %169 : vector<16x128xf32>
    %174 = arith.mulf %173, %169 : vector<16x128xf32>
    %175 = arith.mulf %174, %169 : vector<16x128xf32>
    %176 = arith.addf %169, %175 : vector<16x128xf32>
    %cst_53 = arith.constant 0.797884583 : f32
    %177 = vector.broadcast %cst_53 : f32 to vector<16x128xf32>
    %178 = arith.mulf %177, %176 : vector<16x128xf32>
    %179 = math.tanh %178 : vector<16x128xf32>
    %cst_54 = arith.constant 1.000000e+00 : f32
    %180 = vector.broadcast %cst_54 : f32 to vector<16x128xf32>
    %181 = arith.addf %180, %179 : vector<16x128xf32>
    %182 = arith.mulf %171, %181 : vector<16x128xf32>
    %183 = arith.truncf %182 : vector<16x128xf32> to vector<16x128xbf16>
    %c0_55 = arith.constant 0 : index
    %c0_56 = arith.constant 0 : index
    %c0_57 = arith.constant 0 : index
    %184 = vector.load %arg7[%c0_55, %c0_56, %c0_57] : memref<2x128x32xbf16, #tpu.memory_space<vmem>>, vector<1x128x32xbf16>
    %185 = vector.shape_cast %184 : vector<1x128x32xbf16> to vector<128x32xbf16>
    %cst_58 = arith.constant dense<0.000000e+00> : vector<16x32xf32>
    %186 = tpu.matmul %183, %185, %cst_58 {dimension_numbers = #tpu.dot_dimension_numbers<[1], [0], [0], [1], [0, 0, 1, 1], [], []>} : vector<16x128xbf16>, vector<128x32xbf16>, vector<16x32xf32> -> vector<16x32xf32>
    %187 = vector.broadcast %16 : vector<1x32xf32> to vector<16x32xf32>
    %188 = arith.addf %186, %187 : vector<16x32xf32>
    %189 = arith.addf %141, %188 : vector<16x32xf32>
    %c1 = arith.constant 1 : index
    %c0_59 = arith.constant 0 : index
    %c0_60 = arith.constant 0 : index
    %190 = vector.load %arg2[%c1, %c0_59, %c0_60] : memref<2x6x32xf32, #tpu.memory_space<vmem>>, vector<1x6x32xf32>
    %191 = vector.shape_cast %190 : vector<1x6x32xf32> to vector<6x32xf32>
    %192 = vector.extract_strided_slice %191 {offsets = [0, 0], sizes = [1, 32], strides = [1, 1]} : vector<6x32xf32> to vector<1x32xf32>
    %193 = vector.extract_strided_slice %191 {offsets = [1, 0], sizes = [1, 32], strides = [1, 1]} : vector<6x32xf32> to vector<1x32xf32>
    %194 = vector.extract_strided_slice %191 {offsets = [2, 0], sizes = [1, 32], strides = [1, 1]} : vector<6x32xf32> to vector<1x32xf32>
    %195 = vector.extract_strided_slice %191 {offsets = [3, 0], sizes = [1, 32], strides = [1, 1]} : vector<6x32xf32> to vector<1x32xf32>
    %196 = vector.extract_strided_slice %191 {offsets = [4, 0], sizes = [1, 32], strides = [1, 1]} : vector<6x32xf32> to vector<1x32xf32>
    %197 = vector.extract_strided_slice %191 {offsets = [5, 0], sizes = [1, 32], strides = [1, 1]} : vector<6x32xf32> to vector<1x32xf32>
    %c1_61 = arith.constant 1 : index
    %c0_62 = arith.constant 0 : index
    %c0_63 = arith.constant 0 : index
    %198 = vector.load %arg3[%c1_61, %c0_62, %c0_63] : memref<2x1x128xf32, #tpu.memory_space<vmem>>, vector<1x1x128xf32>
    %199 = vector.shape_cast %198 : vector<1x1x128xf32> to vector<1x128xf32>
    %cst_64 = arith.constant dense<0.000000e+00> : vector<16xf32>
    %200 = vector.multi_reduction <add>, %189, %cst_64 [1] : vector<16x32xf32> to vector<16xf32>
    %201 = vector.shape_cast %200 : vector<16xf32> to vector<16x1xf32>
    %cst_65 = arith.constant 3.200000e+01 : f32
    %202 = vector.broadcast %cst_65 : f32 to vector<16x1xf32>
    %203 = arith.divf %201, %202 : vector<16x1xf32>
    %204 = vector.broadcast %203 : vector<16x1xf32> to vector<16x32xf32>
    %205 = arith.subf %189, %204 : vector<16x32xf32>
    %206 = arith.mulf %205, %205 : vector<16x32xf32>
    %cst_66 = arith.constant dense<0.000000e+00> : vector<16xf32>
    %207 = vector.multi_reduction <add>, %206, %cst_66 [1] : vector<16x32xf32> to vector<16xf32>
    %208 = vector.shape_cast %207 : vector<16xf32> to vector<16x1xf32>
    %cst_67 = arith.constant 3.200000e+01 : f32
    %209 = vector.broadcast %cst_67 : f32 to vector<16x1xf32>
    %210 = arith.divf %208, %209 : vector<16x1xf32>
    %211 = vector.broadcast %203 : vector<16x1xf32> to vector<16x32xf32>
    %212 = arith.subf %189, %211 : vector<16x32xf32>
    %cst_68 = arith.constant 9.99999974E-6 : f32
    %213 = vector.broadcast %cst_68 : f32 to vector<16x1xf32>
    %214 = arith.addf %210, %213 : vector<16x1xf32>
    %215 = math.rsqrt %214 : vector<16x1xf32>
    %216 = vector.broadcast %215 : vector<16x1xf32> to vector<16x32xf32>
    %217 = arith.mulf %212, %216 : vector<16x32xf32>
    %218 = vector.broadcast %192 : vector<1x32xf32> to vector<16x32xf32>
    %219 = arith.mulf %217, %218 : vector<16x32xf32>
    %220 = vector.broadcast %193 : vector<1x32xf32> to vector<16x32xf32>
    %221 = arith.addf %219, %220 : vector<16x32xf32>
    %222 = arith.truncf %221 : vector<16x32xf32> to vector<16x32xbf16>
    %c1_69 = arith.constant 1 : index
    %c0_70 = arith.constant 0 : index
    %c0_71 = arith.constant 0 : index
    %223 = vector.load %arg4[%c1_69, %c0_70, %c0_71] : memref<2x32x384xbf16, #tpu.memory_space<vmem>>, vector<1x32x384xbf16>
    %224 = vector.shape_cast %223 : vector<1x32x384xbf16> to vector<32x384xbf16>
    %cst_72 = arith.constant dense<0.000000e+00> : vector<16x384xf32>
    %225 = tpu.matmul %222, %224, %cst_72 {dimension_numbers = #tpu.dot_dimension_numbers<[1], [0], [0], [1], [0, 0, 1, 1], [], []>} : vector<16x32xbf16>, vector<32x384xbf16>, vector<16x384xf32> -> vector<16x384xf32>
    %226 = vector.shape_cast %225 : vector<16x384xf32> to vector<2x8x384xf32>
    %227 = vector.extract_strided_slice %226 {offsets = [0, 0, 0], sizes = [2, 8, 32], strides = [1, 1, 1]} : vector<2x8x384xf32> to vector<2x8x32xf32>
    %228 = vector.extract_strided_slice %226 {offsets = [0, 0, 128], sizes = [2, 8, 32], strides = [1, 1, 1]} : vector<2x8x384xf32> to vector<2x8x32xf32>
    %229 = vector.extract_strided_slice %226 {offsets = [0, 0, 256], sizes = [2, 8, 32], strides = [1, 1, 1]} : vector<2x8x384xf32> to vector<2x8x32xf32>
    %230 = arith.truncf %227 : vector<2x8x32xf32> to vector<2x8x32xbf16>
    %231 = arith.truncf %228 : vector<2x8x32xf32> to vector<2x8x32xbf16>
    "tpu.trace_start"() <{level = 10 : i32, message = "bqd,bkd->bqk"}> : () -> ()
    %cst_73 = arith.constant dense<0.000000e+00> : vector<2x8x8xf32>
    %232 = tpu.matmul %230, %231, %cst_73 {dimension_numbers = #tpu.dot_dimension_numbers<[2], [2], [1], [1], [0, 0, 0, 1, 1, 1], [0], [0]>} : vector<2x8x32xbf16>, vector<2x8x32xbf16>, vector<2x8x8xf32> -> vector<2x8x8xf32>
    "tpu.trace_stop"() : () -> ()
    %cst_74 = arith.constant 0.176776692 : f32
    %233 = vector.broadcast %cst_74 : f32 to vector<2x8x8xf32>
    %234 = arith.mulf %232, %233 : vector<2x8x8xf32>
    %cst_75 = arith.constant dense<0xFF800000> : vector<2x8xf32>
    %235 = vector.multi_reduction <maximumf>, %234, %cst_75 [2] : vector<2x8x8xf32> to vector<2x8xf32>
    %236 = vector.shape_cast %235 : vector<2x8xf32> to vector<2x8x1xf32>
    %237 = vector.broadcast %236 : vector<2x8x1xf32> to vector<2x8x8xf32>
    %238 = arith.subf %234, %237 : vector<2x8x8xf32>
    %239 = math.exp %238 : vector<2x8x8xf32>
    %cst_76 = arith.constant dense<0.000000e+00> : vector<2x8xf32>
    %240 = vector.multi_reduction <add>, %239, %cst_76 [2] : vector<2x8x8xf32> to vector<2x8xf32>
    %241 = vector.shape_cast %240 : vector<2x8xf32> to vector<2x8x1xf32>
    %242 = tpu.reciprocal %241 {approx = true} : vector<2x8x1xf32> -> vector<2x8x1xf32>
    %243 = vector.broadcast %242 : vector<2x8x1xf32> to vector<2x8x8xf32>
    %244 = arith.mulf %239, %243 : vector<2x8x8xf32>
    %245 = arith.truncf %244 : vector<2x8x8xf32> to vector<2x8x8xbf16>
    %246 = arith.truncf %229 : vector<2x8x32xf32> to vector<2x8x32xbf16>
    "tpu.trace_start"() <{level = 10 : i32, message = "bqk,bkd->bqd"}> : () -> ()
    %cst_77 = arith.constant dense<0.000000e+00> : vector<2x8x32xf32>
    %247 = tpu.matmul %245, %246, %cst_77 {dimension_numbers = #tpu.dot_dimension_numbers<[2], [1], [1], [2], [0, 0, 0, 1, 1, 2], [0], [0]>} : vector<2x8x8xbf16>, vector<2x8x32xbf16>, vector<2x8x32xf32> -> vector<2x8x32xf32>
    "tpu.trace_stop"() : () -> ()
    %248 = vector.shape_cast %247 : vector<2x8x32xf32> to vector<16x32xf32>
    %249 = vector.extract_strided_slice %226 {offsets = [0, 0, 32], sizes = [2, 8, 32], strides = [1, 1, 1]} : vector<2x8x384xf32> to vector<2x8x32xf32>
    %250 = vector.extract_strided_slice %226 {offsets = [0, 0, 160], sizes = [2, 8, 32], strides = [1, 1, 1]} : vector<2x8x384xf32> to vector<2x8x32xf32>
    %251 = vector.extract_strided_slice %226 {offsets = [0, 0, 288], sizes = [2, 8, 32], strides = [1, 1, 1]} : vector<2x8x384xf32> to vector<2x8x32xf32>
    %252 = arith.truncf %249 : vector<2x8x32xf32> to vector<2x8x32xbf16>
    %253 = arith.truncf %250 : vector<2x8x32xf32> to vector<2x8x32xbf16>
    "tpu.trace_start"() <{level = 10 : i32, message = "bqd,bkd->bqk"}> : () -> ()
    %cst_78 = arith.constant dense<0.000000e+00> : vector<2x8x8xf32>
    %254 = tpu.matmul %252, %253, %cst_78 {dimension_numbers = #tpu.dot_dimension_numbers<[2], [2], [1], [1], [0, 0, 0, 1, 1, 1], [0], [0]>} : vector<2x8x32xbf16>, vector<2x8x32xbf16>, vector<2x8x8xf32> -> vector<2x8x8xf32>
    "tpu.trace_stop"() : () -> ()
    %cst_79 = arith.constant 0.176776692 : f32
    %255 = vector.broadcast %cst_79 : f32 to vector<2x8x8xf32>
    %256 = arith.mulf %254, %255 : vector<2x8x8xf32>
    %cst_80 = arith.constant dense<0xFF800000> : vector<2x8xf32>
    %257 = vector.multi_reduction <maximumf>, %256, %cst_80 [2] : vector<2x8x8xf32> to vector<2x8xf32>
    %258 = vector.shape_cast %257 : vector<2x8xf32> to vector<2x8x1xf32>
    %259 = vector.broadcast %258 : vector<2x8x1xf32> to vector<2x8x8xf32>
    %260 = arith.subf %256, %259 : vector<2x8x8xf32>
    %261 = math.exp %260 : vector<2x8x8xf32>
    %cst_81 = arith.constant dense<0.000000e+00> : vector<2x8xf32>
    %262 = vector.multi_reduction <add>, %261, %cst_81 [2] : vector<2x8x8xf32> to vector<2x8xf32>
    %263 = vector.shape_cast %262 : vector<2x8xf32> to vector<2x8x1xf32>
    %264 = tpu.reciprocal %263 {approx = true} : vector<2x8x1xf32> -> vector<2x8x1xf32>
    %265 = vector.broadcast %264 : vector<2x8x1xf32> to vector<2x8x8xf32>
    %266 = arith.mulf %261, %265 : vector<2x8x8xf32>
    %267 = arith.truncf %266 : vector<2x8x8xf32> to vector<2x8x8xbf16>
    %268 = arith.truncf %251 : vector<2x8x32xf32> to vector<2x8x32xbf16>
    "tpu.trace_start"() <{level = 10 : i32, message = "bqk,bkd->bqd"}> : () -> ()
    %cst_82 = arith.constant dense<0.000000e+00> : vector<2x8x32xf32>
    %269 = tpu.matmul %267, %268, %cst_82 {dimension_numbers = #tpu.dot_dimension_numbers<[2], [1], [1], [2], [0, 0, 0, 1, 1, 2], [0], [0]>} : vector<2x8x8xbf16>, vector<2x8x32xbf16>, vector<2x8x32xf32> -> vector<2x8x32xf32>
    "tpu.trace_stop"() : () -> ()
    %270 = vector.shape_cast %269 : vector<2x8x32xf32> to vector<16x32xf32>
    %271 = vector.extract_strided_slice %226 {offsets = [0, 0, 64], sizes = [2, 8, 32], strides = [1, 1, 1]} : vector<2x8x384xf32> to vector<2x8x32xf32>
    %272 = vector.extract_strided_slice %226 {offsets = [0, 0, 192], sizes = [2, 8, 32], strides = [1, 1, 1]} : vector<2x8x384xf32> to vector<2x8x32xf32>
    %273 = vector.extract_strided_slice %226 {offsets = [0, 0, 320], sizes = [2, 8, 32], strides = [1, 1, 1]} : vector<2x8x384xf32> to vector<2x8x32xf32>
    %274 = arith.truncf %271 : vector<2x8x32xf32> to vector<2x8x32xbf16>
    %275 = arith.truncf %272 : vector<2x8x32xf32> to vector<2x8x32xbf16>
    "tpu.trace_start"() <{level = 10 : i32, message = "bqd,bkd->bqk"}> : () -> ()
    %cst_83 = arith.constant dense<0.000000e+00> : vector<2x8x8xf32>
    %276 = tpu.matmul %274, %275, %cst_83 {dimension_numbers = #tpu.dot_dimension_numbers<[2], [2], [1], [1], [0, 0, 0, 1, 1, 1], [0], [0]>} : vector<2x8x32xbf16>, vector<2x8x32xbf16>, vector<2x8x8xf32> -> vector<2x8x8xf32>
    "tpu.trace_stop"() : () -> ()
    %cst_84 = arith.constant 0.176776692 : f32
    %277 = vector.broadcast %cst_84 : f32 to vector<2x8x8xf32>
    %278 = arith.mulf %276, %277 : vector<2x8x8xf32>
    %cst_85 = arith.constant dense<0xFF800000> : vector<2x8xf32>
    %279 = vector.multi_reduction <maximumf>, %278, %cst_85 [2] : vector<2x8x8xf32> to vector<2x8xf32>
    %280 = vector.shape_cast %279 : vector<2x8xf32> to vector<2x8x1xf32>
    %281 = vector.broadcast %280 : vector<2x8x1xf32> to vector<2x8x8xf32>
    %282 = arith.subf %278, %281 : vector<2x8x8xf32>
    %283 = math.exp %282 : vector<2x8x8xf32>
    %cst_86 = arith.constant dense<0.000000e+00> : vector<2x8xf32>
    %284 = vector.multi_reduction <add>, %283, %cst_86 [2] : vector<2x8x8xf32> to vector<2x8xf32>
    %285 = vector.shape_cast %284 : vector<2x8xf32> to vector<2x8x1xf32>
    %286 = tpu.reciprocal %285 {approx = true} : vector<2x8x1xf32> -> vector<2x8x1xf32>
    %287 = vector.broadcast %286 : vector<2x8x1xf32> to vector<2x8x8xf32>
    %288 = arith.mulf %283, %287 : vector<2x8x8xf32>
    %289 = arith.truncf %288 : vector<2x8x8xf32> to vector<2x8x8xbf16>
    %290 = arith.truncf %273 : vector<2x8x32xf32> to vector<2x8x32xbf16>
    "tpu.trace_start"() <{level = 10 : i32, message = "bqk,bkd->bqd"}> : () -> ()
    %cst_87 = arith.constant dense<0.000000e+00> : vector<2x8x32xf32>
    %291 = tpu.matmul %289, %290, %cst_87 {dimension_numbers = #tpu.dot_dimension_numbers<[2], [1], [1], [2], [0, 0, 0, 1, 1, 2], [0], [0]>} : vector<2x8x8xbf16>, vector<2x8x32xbf16>, vector<2x8x32xf32> -> vector<2x8x32xf32>
    "tpu.trace_stop"() : () -> ()
    %292 = vector.shape_cast %291 : vector<2x8x32xf32> to vector<16x32xf32>
    %293 = vector.extract_strided_slice %226 {offsets = [0, 0, 96], sizes = [2, 8, 32], strides = [1, 1, 1]} : vector<2x8x384xf32> to vector<2x8x32xf32>
    %294 = vector.extract_strided_slice %226 {offsets = [0, 0, 224], sizes = [2, 8, 32], strides = [1, 1, 1]} : vector<2x8x384xf32> to vector<2x8x32xf32>
    %295 = vector.extract_strided_slice %226 {offsets = [0, 0, 352], sizes = [2, 8, 32], strides = [1, 1, 1]} : vector<2x8x384xf32> to vector<2x8x32xf32>
    %296 = arith.truncf %293 : vector<2x8x32xf32> to vector<2x8x32xbf16>
    %297 = arith.truncf %294 : vector<2x8x32xf32> to vector<2x8x32xbf16>
    "tpu.trace_start"() <{level = 10 : i32, message = "bqd,bkd->bqk"}> : () -> ()
    %cst_88 = arith.constant dense<0.000000e+00> : vector<2x8x8xf32>
    %298 = tpu.matmul %296, %297, %cst_88 {dimension_numbers = #tpu.dot_dimension_numbers<[2], [2], [1], [1], [0, 0, 0, 1, 1, 1], [0], [0]>} : vector<2x8x32xbf16>, vector<2x8x32xbf16>, vector<2x8x8xf32> -> vector<2x8x8xf32>
    "tpu.trace_stop"() : () -> ()
    %cst_89 = arith.constant 0.176776692 : f32
    %299 = vector.broadcast %cst_89 : f32 to vector<2x8x8xf32>
    %300 = arith.mulf %298, %299 : vector<2x8x8xf32>
    %cst_90 = arith.constant dense<0xFF800000> : vector<2x8xf32>
    %301 = vector.multi_reduction <maximumf>, %300, %cst_90 [2] : vector<2x8x8xf32> to vector<2x8xf32>
    %302 = vector.shape_cast %301 : vector<2x8xf32> to vector<2x8x1xf32>
    %303 = vector.broadcast %302 : vector<2x8x1xf32> to vector<2x8x8xf32>
    %304 = arith.subf %300, %303 : vector<2x8x8xf32>
    %305 = math.exp %304 : vector<2x8x8xf32>
    %cst_91 = arith.constant dense<0.000000e+00> : vector<2x8xf32>
    %306 = vector.multi_reduction <add>, %305, %cst_91 [2] : vector<2x8x8xf32> to vector<2x8xf32>
    %307 = vector.shape_cast %306 : vector<2x8xf32> to vector<2x8x1xf32>
    %308 = tpu.reciprocal %307 {approx = true} : vector<2x8x1xf32> -> vector<2x8x1xf32>
    %309 = vector.broadcast %308 : vector<2x8x1xf32> to vector<2x8x8xf32>
    %310 = arith.mulf %305, %309 : vector<2x8x8xf32>
    %311 = arith.truncf %310 : vector<2x8x8xf32> to vector<2x8x8xbf16>
    %312 = arith.truncf %295 : vector<2x8x32xf32> to vector<2x8x32xbf16>
    "tpu.trace_start"() <{level = 10 : i32, message = "bqk,bkd->bqd"}> : () -> ()
    %cst_92 = arith.constant dense<0.000000e+00> : vector<2x8x32xf32>
    %313 = tpu.matmul %311, %312, %cst_92 {dimension_numbers = #tpu.dot_dimension_numbers<[2], [1], [1], [2], [0, 0, 0, 1, 1, 2], [0], [0]>} : vector<2x8x8xbf16>, vector<2x8x32xbf16>, vector<2x8x32xf32> -> vector<2x8x32xf32>
    "tpu.trace_stop"() : () -> ()
    %314 = vector.shape_cast %313 : vector<2x8x32xf32> to vector<16x32xf32>
    %315 = tpu.concatenate %248, %270, %292, %314 in 1 : vector<16x32xf32>, vector<16x32xf32>, vector<16x32xf32>, vector<16x32xf32> -> vector<16x128xf32>
    %316 = arith.truncf %315 : vector<16x128xf32> to vector<16x128xbf16>
    %c1_93 = arith.constant 1 : index
    %c0_94 = arith.constant 0 : index
    %c0_95 = arith.constant 0 : index
    %317 = vector.load %arg5[%c1_93, %c0_94, %c0_95] : memref<2x128x32xbf16, #tpu.memory_space<vmem>>, vector<1x128x32xbf16>
    %318 = vector.shape_cast %317 : vector<1x128x32xbf16> to vector<128x32xbf16>
    %cst_96 = arith.constant dense<0.000000e+00> : vector<16x32xf32>
    %319 = tpu.matmul %316, %318, %cst_96 {dimension_numbers = #tpu.dot_dimension_numbers<[1], [0], [0], [1], [0, 0, 1, 1], [], []>} : vector<16x128xbf16>, vector<128x32xbf16>, vector<16x32xf32> -> vector<16x32xf32>
    %320 = vector.broadcast %196 : vector<1x32xf32> to vector<16x32xf32>
    %321 = arith.addf %319, %320 : vector<16x32xf32>
    %322 = arith.addf %189, %321 : vector<16x32xf32>
    %cst_97 = arith.constant dense<0.000000e+00> : vector<16xf32>
    %323 = vector.multi_reduction <add>, %322, %cst_97 [1] : vector<16x32xf32> to vector<16xf32>
    %324 = vector.shape_cast %323 : vector<16xf32> to vector<16x1xf32>
    %cst_98 = arith.constant 3.200000e+01 : f32
    %325 = vector.broadcast %cst_98 : f32 to vector<16x1xf32>
    %326 = arith.divf %324, %325 : vector<16x1xf32>
    %327 = vector.broadcast %326 : vector<16x1xf32> to vector<16x32xf32>
    %328 = arith.subf %322, %327 : vector<16x32xf32>
    %329 = arith.mulf %328, %328 : vector<16x32xf32>
    %cst_99 = arith.constant dense<0.000000e+00> : vector<16xf32>
    %330 = vector.multi_reduction <add>, %329, %cst_99 [1] : vector<16x32xf32> to vector<16xf32>
    %331 = vector.shape_cast %330 : vector<16xf32> to vector<16x1xf32>
    %cst_100 = arith.constant 3.200000e+01 : f32
    %332 = vector.broadcast %cst_100 : f32 to vector<16x1xf32>
    %333 = arith.divf %331, %332 : vector<16x1xf32>
    %334 = vector.broadcast %326 : vector<16x1xf32> to vector<16x32xf32>
    %335 = arith.subf %322, %334 : vector<16x32xf32>
    %cst_101 = arith.constant 9.99999974E-6 : f32
    %336 = vector.broadcast %cst_101 : f32 to vector<16x1xf32>
    %337 = arith.addf %333, %336 : vector<16x1xf32>
    %338 = math.rsqrt %337 : vector<16x1xf32>
    %339 = vector.broadcast %338 : vector<16x1xf32> to vector<16x32xf32>
    %340 = arith.mulf %335, %339 : vector<16x32xf32>
    %341 = vector.broadcast %194 : vector<1x32xf32> to vector<16x32xf32>
    %342 = arith.mulf %340, %341 : vector<16x32xf32>
    %343 = vector.broadcast %195 : vector<1x32xf32> to vector<16x32xf32>
    %344 = arith.addf %342, %343 : vector<16x32xf32>
    %345 = arith.truncf %344 : vector<16x32xf32> to vector<16x32xbf16>
    %c1_102 = arith.constant 1 : index
    %c0_103 = arith.constant 0 : index
    %c0_104 = arith.constant 0 : index
    %346 = vector.load %arg6[%c1_102, %c0_103, %c0_104] : memref<2x32x128xbf16, #tpu.memory_space<vmem>>, vector<1x32x128xbf16>
    %347 = vector.shape_cast %346 : vector<1x32x128xbf16> to vector<32x128xbf16>
    %cst_105 = arith.constant dense<0.000000e+00> : vector<16x128xf32>
    %348 = tpu.matmul %345, %347, %cst_105 {dimension_numbers = #tpu.dot_dimension_numbers<[1], [0], [0], [1], [0, 0, 1, 1], [], []>} : vector<16x32xbf16>, vector<32x128xbf16>, vector<16x128xf32> -> vector<16x128xf32>
    %349 = vector.broadcast %199 : vector<1x128xf32> to vector<16x128xf32>
    %350 = arith.addf %348, %349 : vector<16x128xf32>
    %cst_106 = arith.constant 5.000000e-01 : f32
    %351 = vector.broadcast %cst_106 : f32 to vector<16x128xf32>
    %352 = arith.mulf %351, %350 : vector<16x128xf32>
    %cst_107 = arith.constant 4.471500e-02 : f32
    %353 = vector.broadcast %cst_107 : f32 to vector<16x128xf32>
    %354 = arith.mulf %353, %350 : vector<16x128xf32>
    %355 = arith.mulf %354, %350 : vector<16x128xf32>
    %356 = arith.mulf %355, %350 : vector<16x128xf32>
    %357 = arith.addf %350, %356 : vector<16x128xf32>
    %cst_108 = arith.constant 0.797884583 : f32
    %358 = vector.broadcast %cst_108 : f32 to vector<16x128xf32>
    %359 = arith.mulf %358, %357 : vector<16x128xf32>
    %360 = math.tanh %359 : vector<16x128xf32>
    %cst_109 = arith.constant 1.000000e+00 : f32
    %361 = vector.broadcast %cst_109 : f32 to vector<16x128xf32>
    %362 = arith.addf %361, %360 : vector<16x128xf32>
    %363 = arith.mulf %352, %362 : vector<16x128xf32>
    %364 = arith.truncf %363 : vector<16x128xf32> to vector<16x128xbf16>
    %c1_110 = arith.constant 1 : index
    %c0_111 = arith.constant 0 : index
    %c0_112 = arith.constant 0 : index
    %365 = vector.load %arg7[%c1_110, %c0_111, %c0_112] : memref<2x128x32xbf16, #tpu.memory_space<vmem>>, vector<1x128x32xbf16>
    %366 = vector.shape_cast %365 : vector<1x128x32xbf16> to vector<128x32xbf16>
    %cst_113 = arith.constant dense<0.000000e+00> : vector<16x32xf32>
    %367 = tpu.matmul %364, %366, %cst_113 {dimension_numbers = #tpu.dot_dimension_numbers<[1], [0], [0], [1], [0, 0, 1, 1], [], []>} : vector<16x128xbf16>, vector<128x32xbf16>, vector<16x32xf32> -> vector<16x32xf32>
    %368 = vector.broadcast %197 : vector<1x32xf32> to vector<16x32xf32>
    %369 = arith.addf %367, %368 : vector<16x32xf32>
    %370 = arith.addf %322, %369 : vector<16x32xf32>
    %c0_114 = arith.constant 0 : index
    %c0_115 = arith.constant 0 : index
    %371 = vector.load %arg8[%c0_114, %c0_115] : memref<4x32xf32, #tpu.memory_space<vmem>>, vector<4x32xf32>
    %372 = vector.extract_strided_slice %371 {offsets = [0, 0], sizes = [1, 32], strides = [1, 1]} : vector<4x32xf32> to vector<1x32xf32>
    %373 = vector.extract_strided_slice %371 {offsets = [1, 0], sizes = [1, 32], strides = [1, 1]} : vector<4x32xf32> to vector<1x32xf32>
    %cst_116 = arith.constant dense<0.000000e+00> : vector<16xf32>
    %374 = vector.multi_reduction <add>, %370, %cst_116 [1] : vector<16x32xf32> to vector<16xf32>
    %375 = vector.shape_cast %374 : vector<16xf32> to vector<16x1xf32>
    %cst_117 = arith.constant 3.200000e+01 : f32
    %376 = vector.broadcast %cst_117 : f32 to vector<16x1xf32>
    %377 = arith.divf %375, %376 : vector<16x1xf32>
    %378 = vector.broadcast %377 : vector<16x1xf32> to vector<16x32xf32>
    %379 = arith.subf %370, %378 : vector<16x32xf32>
    %380 = arith.mulf %379, %379 : vector<16x32xf32>
    %cst_118 = arith.constant dense<0.000000e+00> : vector<16xf32>
    %381 = vector.multi_reduction <add>, %380, %cst_118 [1] : vector<16x32xf32> to vector<16xf32>
    %382 = vector.shape_cast %381 : vector<16xf32> to vector<16x1xf32>
    %cst_119 = arith.constant 3.200000e+01 : f32
    %383 = vector.broadcast %cst_119 : f32 to vector<16x1xf32>
    %384 = arith.divf %382, %383 : vector<16x1xf32>
    %385 = vector.broadcast %377 : vector<16x1xf32> to vector<16x32xf32>
    %386 = arith.subf %370, %385 : vector<16x32xf32>
    %cst_120 = arith.constant 9.99999974E-6 : f32
    %387 = vector.broadcast %cst_120 : f32 to vector<16x1xf32>
    %388 = arith.addf %384, %387 : vector<16x1xf32>
    %389 = math.rsqrt %388 : vector<16x1xf32>
    %390 = vector.broadcast %389 : vector<16x1xf32> to vector<16x32xf32>
    %391 = arith.mulf %386, %390 : vector<16x32xf32>
    %392 = vector.broadcast %372 : vector<1x32xf32> to vector<16x32xf32>
    %393 = arith.mulf %391, %392 : vector<16x32xf32>
    %394 = vector.broadcast %373 : vector<1x32xf32> to vector<16x32xf32>
    %395 = arith.addf %393, %394 : vector<16x32xf32>
    %396 = vector.extract_strided_slice %371 {offsets = [2, 0], sizes = [1, 32], strides = [1, 1]} : vector<4x32xf32> to vector<1x32xf32>
    %397 = vector.extract_strided_slice %371 {offsets = [3, 0], sizes = [1, 32], strides = [1, 1]} : vector<4x32xf32> to vector<1x32xf32>
    %cst_121 = arith.constant dense<0.000000e+00> : vector<16xf32>
    %398 = vector.multi_reduction <add>, %395, %cst_121 [1] : vector<16x32xf32> to vector<16xf32>
    %399 = vector.shape_cast %398 : vector<16xf32> to vector<16x1xf32>
    %cst_122 = arith.constant 3.200000e+01 : f32
    %400 = vector.broadcast %cst_122 : f32 to vector<16x1xf32>
    %401 = arith.divf %399, %400 : vector<16x1xf32>
    %402 = vector.broadcast %401 : vector<16x1xf32> to vector<16x32xf32>
    %403 = arith.subf %395, %402 : vector<16x32xf32>
    %404 = arith.mulf %403, %403 : vector<16x32xf32>
    %cst_123 = arith.constant dense<0.000000e+00> : vector<16xf32>
    %405 = vector.multi_reduction <add>, %404, %cst_123 [1] : vector<16x32xf32> to vector<16xf32>
    %406 = vector.shape_cast %405 : vector<16xf32> to vector<16x1xf32>
    %cst_124 = arith.constant 3.200000e+01 : f32
    %407 = vector.broadcast %cst_124 : f32 to vector<16x1xf32>
    %408 = arith.divf %406, %407 : vector<16x1xf32>
    %409 = vector.broadcast %401 : vector<16x1xf32> to vector<16x32xf32>
    %410 = arith.subf %395, %409 : vector<16x32xf32>
    %cst_125 = arith.constant 9.99999974E-6 : f32
    %411 = vector.broadcast %cst_125 : f32 to vector<16x1xf32>
    %412 = arith.addf %408, %411 : vector<16x1xf32>
    %413 = math.rsqrt %412 : vector<16x1xf32>
    %414 = vector.broadcast %413 : vector<16x1xf32> to vector<16x32xf32>
    %415 = arith.mulf %410, %414 : vector<16x32xf32>
    %416 = vector.broadcast %396 : vector<1x32xf32> to vector<16x32xf32>
    %417 = arith.mulf %415, %416 : vector<16x32xf32>
    %418 = vector.broadcast %397 : vector<1x32xf32> to vector<16x32xf32>
    %419 = arith.addf %417, %418 : vector<16x32xf32>
    %420 = arith.truncf %419 : vector<16x32xf32> to vector<16x32xbf16>
    %c0_126 = arith.constant 0 : index
    %c0_127 = arith.constant 0 : index
    %421 = vector.load %arg9[%c0_126, %c0_127] : memref<32x128xbf16, #tpu.memory_space<vmem>>, vector<32x128xbf16>
    %cst_128 = arith.constant dense<0.000000e+00> : vector<16x128xf32>
    %422 = tpu.matmul %420, %421, %cst_128 {dimension_numbers = #tpu.dot_dimension_numbers<[1], [0], [0], [1], [0, 0, 1, 1], [], []>} : vector<16x32xbf16>, vector<32x128xbf16>, vector<16x128xf32> -> vector<16x128xf32>
    %c0_129 = arith.constant 0 : index
    %c0_130 = arith.constant 0 : index
    %423 = vector.load %arg10[%c0_129, %c0_130] : memref<1x128xf32, #tpu.memory_space<vmem>>, vector<1x128xf32>
    %424 = vector.broadcast %423 : vector<1x128xf32> to vector<16x128xf32>
    %425 = arith.addf %422, %424 : vector<16x128xf32>
    %cst_131 = arith.constant dense<0xFF800000> : vector<16xf32>
    %426 = vector.multi_reduction <maximumf>, %425, %cst_131 [1] : vector<16x128xf32> to vector<16xf32>
    %427 = vector.shape_cast %426 : vector<16xf32> to vector<16x1xf32>
    %428 = vector.broadcast %427 : vector<16x1xf32> to vector<16x128xf32>
    %429 = arith.subf %425, %428 : vector<16x128xf32>
    %430 = math.exp %429 : vector<16x128xf32>
    %cst_132 = arith.constant dense<0.000000e+00> : vector<16xf32>
    %431 = vector.multi_reduction <add>, %430, %cst_132 [1] : vector<16x128xf32> to vector<16xf32>
    %432 = vector.shape_cast %431 : vector<16xf32> to vector<16x1xf32>
    %433 = vector.broadcast %432 : vector<16x1xf32> to vector<16x128xf32>
    %434 = arith.divf %430, %433 : vector<16x128xf32>
    %c0_133 = arith.constant 0 : index
    %c0_134 = arith.constant 0 : index
    %435 = vector.load %arg11[%c0_133, %c0_134] : memref<16x128xf32, #tpu.memory_space<vmem>>, vector<16x128xf32>
    tpu.vector_store %arg11[%c0_133, %c0_134], %434 {strides = array<i32>} : memref<16x128xf32, #tpu.memory_space<vmem>>, vector<16x128xf32>,
    return
  }
}

</mosaic_0001>

<llo_original>
// kernel: tpu_custom_call.1
$region0: #{tpu_custom_call.1}
  #allocation0 [shape = 'u32[]', space=smem, size = 0x4, offset = 0x4, fixed_abs, tag = 'smem constant byte address 0x4 - core index']
  #allocation1 [shape = 'u32[144,128]{1,0:T(1,128)}', space=vmem, size = 0x12000, scoped, tag = 'internal scratch']
  %s0 = inlined_call_operand.vmem [shape: s32[16,1], index: 0, kind: input, shape index: {}]
  %s1 = inlined_call_operand.vmem [shape: bf16[64,32], index: 1, kind: input, shape index: {}]
  %s2 = inlined_call_operand.vmem [shape: f32[2,6,32], index: 2, kind: input, shape index: {}]
  %s3 = inlined_call_operand.vmem [shape: f32[2,1,128], index: 3, kind: input, shape index: {}]
  %s4 = inlined_call_operand.vmem [shape: bf16[2,32,384], index: 4, kind: input, shape index: {}]
  %s5 = inlined_call_operand.vmem [shape: bf16[2,128,32], index: 5, kind: input, shape index: {}]
  %s6 = inlined_call_operand.vmem [shape: bf16[2,32,128], index: 6, kind: input, shape index: {}]
  %s7 = inlined_call_operand.vmem [shape: bf16[2,128,32], index: 7, kind: input, shape index: {}]
  %s8 = inlined_call_operand.vmem [shape: f32[4,32], index: 8, kind: input, shape index: {}]
  %s9 = inlined_call_operand.vmem [shape: bf16[32,128], index: 9, kind: input, shape index: {}]
  %s10 = inlined_call_operand.vmem [shape: f32[1,128], index: 10, kind: input, shape index: {}]
  %s11 = inlined_call_operand.hbm [shape: f32[16,128], index: 11, kind: output, shape index: {}]
  %s12 = sld [smem:[#allocation0]]
  $region54: #{tpu_custom_call.1} parent=0
    _
  %s14 = ssub.s32 1, %s12
  %s15 = scalar_select 0, %s14, %s12
  $region1: #{tpu_custom_call.1} parent=0
    #allocation2 [shape = 'u8[8192]{0}', space=vmem, size = 0x2000, scoped, tag = 'output window, operand 0, single buffered']
    #allocation3 [shape = 's32[1]{0}', space=sflag, size = 0x4, scoped, tag = 'scoped memory for tpu_custom_call.1']
    %16 = vsyncpa [#allocation3], 0
    // Predicated region
    $region2: #{tpu_custom_call.1} parent=1 // pred_check
      _
    $region3: #{tpu_custom_call.1} parent=1 // pred_check_branch
      %18 = sbr.rel (0) target = $region5
    $region4: #{tpu_custom_call.1} parent=1 // pred_region
      _
    $region5: #{tpu_custom_call.1} parent=1 // pred_fallthru
      _
    // Predicated region
    $region6: #{tpu_custom_call.1} parent=1 // pred_check
      _
    $region7: #{tpu_custom_call.1} parent=1 // pred_check_branch
      %20 = sbr.rel (0) target = $region9
    $region8: #{tpu_custom_call.1} parent=1 // pred_region
      _
    $region9: #{tpu_custom_call.1} parent=1 // pred_fallthru
      _
    // Predicated region
    $region10: #{tpu_custom_call.1} parent=1 // pred_check
      _
    $region11: #{tpu_custom_call.1} parent=1 // pred_check_branch
      %22 = sbr.rel (0) target = $region13
    $region12: #{tpu_custom_call.1} parent=1 // pred_region
      _
    $region13: #{tpu_custom_call.1} parent=1 // pred_fallthru
      _
    // Predicated region
    $region14: #{tpu_custom_call.1} parent=1 // pred_check
      _
    $region15: #{tpu_custom_call.1} parent=1 // pred_check_branch
      %24 = sbr.rel (0) target = $region17
    $region16: #{tpu_custom_call.1} parent=1 // pred_region
      _
    $region17: #{tpu_custom_call.1} parent=1 // pred_fallthru
      _
    // Predicated region
    $region18: #{tpu_custom_call.1} parent=1 // pred_check
      _
    $region19: #{tpu_custom_call.1} parent=1 // pred_check_branch
      %26 = sbr.rel (0) target = $region21
    $region20: #{tpu_custom_call.1} parent=1 // pred_region
      _
    $region21: #{tpu_custom_call.1} parent=1 // pred_fallthru
      _
    // Predicated region
    $region22: #{tpu_custom_call.1} parent=1 // pred_check
      _
    $region23: #{tpu_custom_call.1} parent=1 // pred_check_branch
      %28 = sbr.rel (0) target = $region25
    $region24: #{tpu_custom_call.1} parent=1 // pred_region
      _
    $region25: #{tpu_custom_call.1} parent=1 // pred_fallthru
      _
    // Predicated region
    $region26: #{tpu_custom_call.1} parent=1 // pred_check
      _
    $region27: #{tpu_custom_call.1} parent=1 // pred_check_branch
      %30 = sbr.rel (0) target = $region29
    $region28: #{tpu_custom_call.1} parent=1 // pred_region
      _
    $region29: #{tpu_custom_call.1} parent=1 // pred_fallthru
      _
    // Predicated region
    $region30: #{tpu_custom_call.1} parent=1 // pred_check
      _
    $region31: #{tpu_custom_call.1} parent=1 // pred_check_branch
      %32 = sbr.rel (0) target = $region33
    $region32: #{tpu_custom_call.1} parent=1 // pred_region
      _
    $region33: #{tpu_custom_call.1} parent=1 // pred_fallthru
      _
    // Predicated region
    $region34: #{tpu_custom_call.1} parent=1 // pred_check
      _
    $region35: #{tpu_custom_call.1} parent=1 // pred_check_branch
      %34 = sbr.rel (0) target = $region37
    $region36: #{tpu_custom_call.1} parent=1 // pred_region
      _
    $region37: #{tpu_custom_call.1} parent=1 // pred_fallthru
      _
    // Predicated region
    $region38: #{tpu_custom_call.1} parent=1 // pred_check
      _
    $region39: #{tpu_custom_call.1} parent=1 // pred_check_branch
      %36 = sbr.rel (0) target = $region41
    $region40: #{tpu_custom_call.1} parent=1 // pred_region
      _
    $region41: #{tpu_custom_call.1} parent=1 // pred_fallthru
      _
    // Predicated region
    $region42: #{tpu_custom_call.1} parent=1 // pred_check
      _
    $region43: #{tpu_custom_call.1} parent=1 // pred_check_branch
      %38 = sbr.rel (0) target = $region45
    $region44: #{tpu_custom_call.1} parent=1 // pred_region
      _
    $region45: #{tpu_custom_call.1} parent=1 // pred_fallthru
      _
    %v40 = vld [vmem:[%s0] sm:$0xff]
    %v41 = vld [vmem:[%s0 + $0x8] sm:$0xff]
    %v42 = vlaneseq
    %v43 = vand.u32 %v42, 127
    %44 = vset.pattern.permute.xlu0 0
    %45 = vperm.xlu0 %44, %v40
    %v46 = vpop.permute.xlu0 %45
    %47 = vset.pattern.permute.xlu0 0
    %48 = vperm.xlu0 %47, %v41
    %v49 = vpop.permute.xlu0 %48
    %vm50 = vcmp.eq.s32.totalorder %v43, %v46
    %vm51 = vcmp.eq.s32.totalorder %v43, %v49
    %v52 = vsel %vm50, 1, 0
    %v53 = vsel %vm51, 1, 0
    %v54 = vcvt.s32.f32 %v52
    %v55 = vcvt.s32.f32 %v53
    %v56 = vpack.c.bf16 %v55, %v54
    %v57 = vld [vmem:[%s1] sm:$0xf]
    %v58 = vld [vmem:[%s1 + $0x4] sm:$0xf]
    %v59 = vld [vmem:[%s1 + $0x8] sm:$0xf]
    %v60 = vld [vmem:[%s1 + $0xc] sm:$0xf]
    %v61 = vld [vmem:[%s1 + $0x10] sm:$0xf]
    %v62 = vld [vmem:[%s1 + $0x14] sm:$0xf]
    %v63 = vld [vmem:[%s1 + $0x18] sm:$0xf]
    %v64 = vld [vmem:[%s1 + $0x1c] sm:$0xf]
    %v73 = vunpack.c.l.b16 %v57
    %v74 = vunpack.c.l.b16 %v58
    %v75 = vunpack.c.l.b16 %v59
    %v76 = vunpack.c.l.b16 %v60
    %v77 = vunpack.c.l.b16 %v61
    %v78 = vunpack.c.l.b16 %v62
    %v79 = vunpack.c.l.b16 %v63
    %v80 = vunpack.c.l.b16 %v64
    %v81 = vpack.c.b16 %v74, %v73
    %v82 = vpack.c.b16 %v76, %v75
    %v83 = vpack.c.b16 %v78, %v77
    %v84 = vpack.c.b16 %v80, %v79
    %vm89 = vcmask 523264
    %v91 = vsel %vm89, %v56, 0
    %93 = vmatprep.subr.bf16.mxu0 0
    %94 = vmatpush1.bf16.msra.mxu0 %v81
    %95 = vmatprep.subr.bf16.mxu0 0
    %96 = vmatpush1.bf16.msra.mxu0 %v82
    %97 = vmatprep.subr.bf16.mxu0 0
    %98 = vmatpush1.bf16.msra.mxu0 %v83
    %99 = vmatprep.subr.bf16.mxu0 0
    %100 = vmatpush1.bf16.msra.mxu0 %v84
    %101 = vmatprep.subr.bf16.mxu0 0
    %102 = vmatpush1.bf16.msra.mxu0 0
    %103 = vmatprep.subr.bf16.mxu0 0
    %104 = vmatpush1.bf16.msra.mxu0 0
    %105 = vmatprep.subr.bf16.mxu0 0
    %106 = vmatpush1.bf16.msra.mxu0 0
    %107 = vmatprep.subr.bf16.mxu0 0
    %108 = vmatpush1.bf16.msra.mxu0 0
    %109 = vmatprep.subr.bf16.mxu0 0
    %110 = vmatpush1.bf16.msra.mxu0 0
    %111 = vmatprep.subr.bf16.mxu0 0
    %112 = vmatpush1.bf16.msra.mxu0 0
    %113 = vmatprep.subr.bf16.mxu0 0
    %114 = vmatpush1.bf16.msra.mxu0 0
    %115 = vmatprep.subr.bf16.mxu0 0
    %116 = vmatpush1.bf16.msra.mxu0 0
    %117 = vmatprep.subr.bf16.mxu0 0
    %118 = vmatpush1.bf16.msra.mxu0 0
    %119 = vmatprep.subr.bf16.mxu0 0
    %120 = vmatpush1.bf16.msra.mxu0 0
    %121 = vmatprep.subr.bf16.mxu0 0
    %122 = vmatpush1.bf16.msra.mxu0 0
    %123 = vmatprep.subr.bf16.mxu0 0
    %124 = vmatpush1.bf16.msra.mxu0 0
    %125 = vmatprep.mubr.bf16.mxu0 0
    %126 = vmatmul.mubr.bf16.gmra.mrb[0].mxu0 %v91
    %v127 = vpop.f32.mrb[0].mxu0
    %v128 = vadd.f32 0.0, %v127
    %v129 = vpop.f32.mrb[0].mxu0
    %v130 = vpop.f32.mrb[0].mxu0
    %v131 = vadd.f32 0.0, %v130
    %v132 = vpop.f32.mrb[0].mxu0
    %133 = vdwg.mxu0
    %v134 = vld [vmem:[%s2] sm:$0x3f]
    %v135 = vld [vmem:[%s3] sm:$0x1]
    %vm136 = vcmask 261120
    %v137 = vsel %vm136, %v128, 0.0
    %138 = vadd.xlane.f32.xlu0 %v137
    %v139 = vpop.xlane.xlu0 %138
    %v140 = vsel %vm136, %v131, 0.0
    %141 = vadd.xlane.f32.xlu0 %v140
    %v142 = vpop.xlane.xlu0 %141
    %v143 = vrcp.pop 32.0
    %v144 = vmul.f32 %v139, %v143
    %v145 = vmul.f32 %v142, %v143
    %v146 = vsub.f32 %v128, %v144
    %v147 = vsub.f32 %v131, %v145
    %v148 = vmul.f32 %v146, %v146
    %v149 = vmul.f32 %v147, %v147
    %v150 = vsel %vm136, %v148, 0.0
    %151 = vadd.xlane.f32.xlu0 %v150
    %v152 = vpop.xlane.xlu0 %151
    %v153 = vsel %vm136, %v149, 0.0
    %154 = vadd.xlane.f32.xlu0 %v153
    %v155 = vpop.xlane.xlu0 %154
    %v156 = vmul.f32 %v152, %v143
    %v157 = vmul.f32 %v155, %v143
    %v158 = vadd.f32 %v156, 1e-05
    %v159 = vadd.f32 %v157, 1e-05
    %v160 = vrsqrt.pop %v158
    %v161 = vrsqrt.pop %v159
    %v162 = vmul.f32 %v146, %v160
    %v163 = vmul.f32 %v147, %v161
    %v164 = vlaneseq
    %v165 = vshrl.u32 %v164, 7
    %v166 = vsub.s32 0, %v165
    %v167 = vrot.slane %v134, %v166
    %v168 = vmul.f32 %v162, %v167
    %v169 = vmul.f32 %v163, %v167
    %v170 = vlaneseq
    %v171 = vshrl.u32 %v170, 7
    %v172 = vsub.s32 1, %v171
    %v173 = vrot.slane %v134, %v172
    %v174 = vadd.f32 %v168, %v173
    %v175 = vadd.f32 %v169, %v173
    %v176 = vpack.c.bf16 %v175, %v174
    %v177 = vld [vmem:[%s4] sm:$0xff]
    %v178 = vld [vmem:[%s4 + $0x8] sm:$0xf]
    %v179 = vld [vmem:[%s4 + $0xc] sm:$0xff]
    %v180 = vld [vmem:[%s4 + $0x14] sm:$0xf]
    %v181 = vld [vmem:[%s4 + $0x18] sm:$0xff]
    %v182 = vld [vmem:[%s4 + $0x20] sm:$0xf]
    %v183 = vld [vmem:[%s4 + $0x24] sm:$0xff]
    %v184 = vld [vmem:[%s4 + $0x2c] sm:$0xf]
    %v193 = vunpack.c.l.b16 %v177
    %v194 = vunpack.c.h.b16 %v177
    %v195 = vunpack.c.l.b16 %v178
    %v196 = vunpack.c.l.b16 %v179
    %v197 = vunpack.c.h.b16 %v179
    %v198 = vunpack.c.l.b16 %v180
    %v199 = vunpack.c.l.b16 %v181
    %v200 = vunpack.c.h.b16 %v181
    %v201 = vunpack.c.l.b16 %v182
    %v202 = vunpack.c.l.b16 %v183
    %v203 = vunpack.c.h.b16 %v183
    %v204 = vunpack.c.l.b16 %v184
    %v205 = vpack.c.b16 %v196, %v193
    %v206 = vpack.c.b16 %v197, %v194
    %v207 = vpack.c.b16 %v198, %v195
    %v208 = vpack.c.b16 %v202, %v199
    %v209 = vpack.c.b16 %v203, %v200
    %v210 = vpack.c.b16 %v204, %v201
    %v218 = vsel %vm136, %v176, 0
    %220 = vmatprep.subr.bf16.mxu0 %v206
    %221 = vmatpush1.bf16.msra.mxu0 %v205
    %222 = vmatprep.subr.bf16.mxu0 %v209
    %223 = vmatpush1.bf16.msra.mxu0 %v208
    %224 = vmatprep.subr.bf16.mxu0 0
    %225 = vmatpush1.bf16.msra.mxu0 0
    %226 = vmatprep.subr.bf16.mxu0 0
    %227 = vmatpush1.bf16.msra.mxu0 0
    %228 = vmatprep.subr.bf16.mxu0 0
    %229 = vmatpush1.bf16.msra.mxu0 0
    %230 = vmatprep.subr.bf16.mxu0 0
    %231 = vmatpush1.bf16.msra.mxu0 0
    %232 = vmatprep.subr.bf16.mxu0 0
    %233 = vmatpush1.bf16.msra.mxu0 0
    %234 = vmatprep.subr.bf16.mxu0 0
    %235 = vmatpush1.bf16.msra.mxu0 0
    %236 = vmatprep.subr.bf16.mxu0 0
    %237 = vmatpush1.bf16.msra.mxu0 0
    %238 = vmatprep.subr.bf16.mxu0 0
    %239 = vmatpush1.bf16.msra.mxu0 0
    %240 = vmatprep.subr.bf16.mxu0 0
    %241 = vmatpush1.bf16.msra.mxu0 0
    %242 = vmatprep.subr.bf16.mxu0 0
    %243 = vmatpush1.bf16.msra.mxu0 0
    %244 = vmatprep.subr.bf16.mxu0 0
    %245 = vmatpush1.bf16.msra.mxu0 0
    %246 = vmatprep.subr.bf16.mxu0 0
    %247 = vmatpush1.bf16.msra.mxu0 0
    %248 = vmatprep.subr.bf16.mxu0 0
    %249 = vmatpush1.bf16.msra.mxu0 0
    %250 = vmatprep.subr.bf16.mxu0 0
    %251 = vmatpush1.bf16.msra.mxu0 0
    %252 = vmatprep.mubr.bf16.mxu0 0
    %253 = vmatmul.mubr.bf16.gmra.mrb[0].mxu0 %v218
    %v254 = vpop.f32.mrb[0].mxu0
    %v255 = vadd.f32 0.0, %v254
    %v256 = vpop.f32.mrb[0].mxu0
    %v257 = vadd.f32 0.0, %v256
    %v258 = vpop.f32.mrb[0].mxu0
    %v259 = vadd.f32 0.0, %v258
    %v260 = vpop.f32.mrb[0].mxu0
    %v261 = vadd.f32 0.0, %v260
    %262 = vdwg.mxu0
    %263 = vmatprep.subr.bf16.mxu0 0
    %264 = vmatpush1.bf16.msra.mxu0 %v207
    %265 = vmatprep.subr.bf16.mxu0 0
    %266 = vmatpush1.bf16.msra.mxu0 %v210
    %267 = vmatprep.subr.bf16.mxu0 0
    %268 = vmatpush1.bf16.msra.mxu0 0
    %269 = vmatprep.subr.bf16.mxu0 0
    %270 = vmatpush1.bf16.msra.mxu0 0
    %271 = vmatprep.subr.bf16.mxu0 0
    %272 = vmatpush1.bf16.msra.mxu0 0
    %273 = vmatprep.subr.bf16.mxu0 0
    %274 = vmatpush1.bf16.msra.mxu0 0
    %275 = vmatprep.subr.bf16.mxu0 0
    %276 = vmatpush1.bf16.msra.mxu0 0
    %277 = vmatprep.subr.bf16.mxu0 0
    %278 = vmatpush1.bf16.msra.mxu0 0
    %279 = vmatprep.subr.bf16.mxu0 0
    %280 = vmatpush1.bf16.msra.mxu0 0
    %281 = vmatprep.subr.bf16.mxu0 0
    %282 = vmatpush1.bf16.msra.mxu0 0
    %283 = vmatprep.subr.bf16.mxu0 0
    %284 = vmatpush1.bf16.msra.mxu0 0
    %285 = vmatprep.subr.bf16.mxu0 0
    %286 = vmatpush1.bf16.msra.mxu0 0
    %287 = vmatprep.subr.bf16.mxu0 0
    %288 = vmatpush1.bf16.msra.mxu0 0
    %289 = vmatprep.subr.bf16.mxu0 0
    %290 = vmatpush1.bf16.msra.mxu0 0
    %291 = vmatprep.subr.bf16.mxu0 0
    %292 = vmatpush1.bf16.msra.mxu0 0
    %293 = vmatprep.subr.bf16.mxu0 0
    %294 = vmatpush1.bf16.msra.mxu0 0
    %295 = vmatprep.mubr.bf16.mxu0 0
    %296 = vmatmul.mubr.bf16.gmra.mrb[0].mxu0 %v218
    %v297 = vpop.f32.mrb[0].mxu0
    %v298 = vadd.f32 0.0, %v297
    %v299 = vpop.f32.mrb[0].mxu0
    %v300 = vpop.f32.mrb[0].mxu0
    %v301 = vadd.f32 0.0, %v300
    %v302 = vpop.f32.mrb[0].mxu0
    %303 = vdwg.mxu0
    %v304 = vpack.c.bf16 %v255, %v255
    %v305 = vpack.c.bf16 %v259, %v259
    %v306 = vpack.c.bf16 %v257, %v257
    %v307 = vpack.c.bf16 %v261, %v261
    %v309 = vsel %vm136, %v304, 0
    %v312 = vsel %vm136, %v306, 0
    %314 = vmatprep.subr.bf16.mxu0 0
    %315 = vmatpush1.bf16.xpose.msra.mxu0 %v312
    %316 = vmatprep.subr.bf16.mxu0 0
    %317 = vmatpush1.bf16.xpose.msra.mxu0 0
    %318 = vmatprep.subr.bf16.mxu0 0
    %319 = vmatpush1.bf16.xpose.msra.mxu0 0
    %320 = vmatprep.subr.bf16.mxu0 0
    %321 = vmatpush1.bf16.xpose.msra.mxu0 0
    %322 = vmatprep.subr.bf16.mxu0 0
    %323 = vmatpush1.bf16.xpose.msra.mxu0 0
    %324 = vmatprep.subr.bf16.mxu0 0
    %325 = vmatpush1.bf16.xpose.msra.mxu0 0
    %326 = vmatprep.subr.bf16.mxu0 0
    %327 = vmatpush1.bf16.xpose.msra.mxu0 0
    %328 = vmatprep.subr.bf16.mxu0 0
    %329 = vmatpush1.bf16.xpose.msra.mxu0 0
    %330 = vmatprep.subr.bf16.mxu0 0
    %331 = vmatpush1.bf16.xpose.msra.mxu0 0
    %332 = vmatprep.subr.bf16.mxu0 0
    %333 = vmatpush1.bf16.xpose.msra.mxu0 0
    %334 = vmatprep.subr.bf16.mxu0 0
    %335 = vmatpush1.bf16.xpose.msra.mxu0 0
    %336 = vmatprep.subr.bf16.mxu0 0
    %337 = vmatpush1.bf16.xpose.msra.mxu0 0
    %338 = vmatprep.subr.bf16.mxu0 0
    %339 = vmatpush1.bf16.xpose.msra.mxu0 0
    %340 = vmatprep.subr.bf16.mxu0 0
    %341 = vmatpush1.bf16.xpose.msra.mxu0 0
    %342 = vmatprep.subr.bf16.mxu0 0
    %343 = vmatpush1.bf16.xpose.msra.mxu0 0
    %344 = vmatprep.subr.bf16.mxu0 0
    %345 = vmatpush1.bf16.xpose.msra.mxu0 0
    %346 = vmatprep.mubr.bf16.mxu0 0
    %347 = vmatmul.mubr.bf16.gmra.mrb[0].mxu0 %v309
    %v348 = vpop.f32.mrb[0].mxu0
    %v349 = vadd.f32 0.0, %v348
    %v350 = vpop.f32.mrb[0].mxu0
    %v351 = vpop.f32.mrb[0].mxu0
    %v352 = vpop.f32.mrb[0].mxu0
    %353 = vdwg.mxu0
    %v355 = vsel %vm136, %v305, 0
    %v358 = vsel %vm136, %v307, 0
    %360 = vmatprep.subr.bf16.mxu0 0
    %361 = vmatpush1.bf16.xpose.msra.mxu0 %v358
    %362 = vmatprep.subr.bf16.mxu0 0
    %363 = vmatpush1.bf16.xpose.msra.mxu0 0
    %364 = vmatprep.subr.bf16.mxu0 0
    %365 = vmatpush1.bf16.xpose.msra.mxu0 0
    %366 = vmatprep.subr.bf16.mxu0 0
    %367 = vmatpush1.bf16.xpose.msra.mxu0 0
    %368 = vmatprep.subr.bf16.mxu0 0
    %369 = vmatpush1.bf16.xpose.msra.mxu0 0
    %370 = vmatprep.subr.bf16.mxu0 0
    %371 = vmatpush1.bf16.xpose.msra.mxu0 0
    %372 = vmatprep.subr.bf16.mxu0 0
    %373 = vmatpush1.bf16.xpose.msra.mxu0 0
    %374 = vmatprep.subr.bf16.mxu0 0
    %375 = vmatpush1.bf16.xpose.msra.mxu0 0
    %376 = vmatprep.subr.bf16.mxu0 0
    %377 = vmatpush1.bf16.xpose.msra.mxu0 0
    %378 = vmatprep.subr.bf16.mxu0 0
    %379 = vmatpush1.bf16.xpose.msra.mxu0 0
    %380 = vmatprep.subr.bf16.mxu0 0
    %381 = vmatpush1.bf16.xpose.msra.mxu0 0
    %382 = vmatprep.subr.bf16.mxu0 0
    %383 = vmatpush1.bf16.xpose.msra.mxu0 0
    %384 = vmatprep.subr.bf16.mxu0 0
    %385 = vmatpush1.bf16.xpose.msra.mxu0 0
    %386 = vmatprep.subr.bf16.mxu0 0
    %387 = vmatpush1.bf16.xpose.msra.mxu0 0
    %388 = vmatprep.subr.bf16.mxu0 0
    %389 = vmatpush1.bf16.xpose.msra.mxu0 0
    %390 = vmatprep.subr.bf16.mxu0 0
    %391 = vmatpush1.bf16.xpose.msra.mxu0 0
    %392 = vmatprep.mubr.bf16.mxu0 0
    %393 = vmatmul.mubr.bf16.gmra.mrb[0].mxu0 %v355
    %v394 = vpop.f32.mrb[0].mxu0
    %v395 = vadd.f32 0.0, %v394
    %v396 = vpop.f32.mrb[0].mxu0
    %v397 = vpop.f32.mrb[0].mxu0
    %v398 = vpop.f32.mrb[0].mxu0
    %399 = vdwg.mxu0
    %v400 = vmul.f32 %v349, 0.17677669
    %v401 = vmul.f32 %v395, 0.17677669
    %vm402 = vcmask 64512
    %v403 = vsel %vm402, %v400, -inf
    %404 = vmax.xlane.f32.xlu0 %v403
    %v405 = vpop.xlane.xlu0 %404
    %v406 = vsel %vm402, %v401, -inf
    %407 = vmax.xlane.f32.xlu0 %v406
    %v408 = vpop.xlane.xlu0 %407
    %v409 = vsub.f32 %v400, %v405
    %v410 = vsub.f32 %v401, %v408
    %v411 = vmul.f32 %v409, 1.442695
    %v412 = vpow.pop %v411
    %v413 = vmul.f32 %v410, 1.442695
    %v414 = vpow.pop %v413
    %v415 = vsel %vm402, %v412, 0.0
    %416 = vadd.xlane.f32.xlu0 %v415
    %v417 = vpop.xlane.xlu0 %416
    %v418 = vsel %vm402, %v414, 0.0
    %419 = vadd.xlane.f32.xlu0 %v418
    %v420 = vpop.xlane.xlu0 %419
    %v421 = vrcp.pop %v417
    %v422 = vrcp.pop %v420
    %v423 = vmul.f32 %v412, %v421
    %v424 = vmul.f32 %v414, %v422
    %v425 = vpack.c.bf16 %v423, %v423
    %v426 = vpack.c.bf16 %v424, %v424
    %v427 = vpack.c.bf16 %v298, %v298
    %v428 = vpack.c.bf16 %v301, %v301
    %v430 = vsel %vm402, %v425, 0
    %vm432 = vcmask 1043456
    %v434 = vsel %vm432, %v427, 0
    %436 = vmatprep.subr.bf16.mxu0 0
    %437 = vmatpush1.bf16.msra.mxu0 %v434
    %438 = vmatprep.subr.bf16.mxu0 0
    %439 = vmatpush1.bf16.msra.mxu0 0
    %440 = vmatprep.subr.bf16.mxu0 0
    %441 = vmatpush1.bf16.msra.mxu0 0
    %442 = vmatprep.subr.bf16.mxu0 0
    %443 = vmatpush1.bf16.msra.mxu0 0
    %444 = vmatprep.subr.bf16.mxu0 0
    %445 = vmatpush1.bf16.msra.mxu0 0
    %446 = vmatprep.subr.bf16.mxu0 0
    %447 = vmatpush1.bf16.msra.mxu0 0
    %448 = vmatprep.subr.bf16.mxu0 0
    %449 = vmatpush1.bf16.msra.mxu0 0
    %450 = vmatprep.subr.bf16.mxu0 0
    %451 = vmatpush1.bf16.msra.mxu0 0
    %452 = vmatprep.subr.bf16.mxu0 0
    %453 = vmatpush1.bf16.msra.mxu0 0
    %454 = vmatprep.subr.bf16.mxu0 0
    %455 = vmatpush1.bf16.msra.mxu0 0
    %456 = vmatprep.subr.bf16.mxu0 0
    %457 = vmatpush1.bf16.msra.mxu0 0
    %458 = vmatprep.subr.bf16.mxu0 0
    %459 = vmatpush1.bf16.msra.mxu0 0
    %460 = vmatprep.subr.bf16.mxu0 0
    %461 = vmatpush1.bf16.msra.mxu0 0
    %462 = vmatprep.subr.bf16.mxu0 0
    %463 = vmatpush1.bf16.msra.mxu0 0
    %464 = vmatprep.subr.bf16.mxu0 0
    %465 = vmatpush1.bf16.msra.mxu0 0
    %466 = vmatprep.subr.bf16.mxu0 0
    %467 = vmatpush1.bf16.msra.mxu0 0
    %468 = vmatprep.mubr.bf16.mxu0 0
    %469 = vmatmul.mubr.bf16.gmra.mrb[0].mxu0 %v430
    %v470 = vpop.f32.mrb[0].mxu0
    %v471 = vadd.f32 0.0, %v470
    %v472 = vpop.f32.mrb[0].mxu0
    %v473 = vpop.f32.mrb[0].mxu0
    %v474 = vpop.f32.mrb[0].mxu0
    %475 = vdwg.mxu0
    %v477 = vsel %vm402, %v426, 0
    %v480 = vsel %vm432, %v428, 0
    %482 = vmatprep.subr.bf16.mxu0 0
    %483 = vmatpush1.bf16.msra.mxu0 %v480
    %484 = vmatprep.subr.bf16.mxu0 0
    %485 = vmatpush1.bf16.msra.mxu0 0
    %486 = vmatprep.subr.bf16.mxu0 0
    %487 = vmatpush1.bf16.msra.mxu0 0
    %488 = vmatprep.subr.bf16.mxu0 0
    %489 = vmatpush1.bf16.msra.mxu0 0
    %490 = vmatprep.subr.bf16.mxu0 0
    %491 = vmatpush1.bf16.msra.mxu0 0
    %492 = vmatprep.subr.bf16.mxu0 0
    %493 = vmatpush1.bf16.msra.mxu0 0
    %494 = vmatprep.subr.bf16.mxu0 0
    %495 = vmatpush1.bf16.msra.mxu0 0
    %496 = vmatprep.subr.bf16.mxu0 0
    %497 = vmatpush1.bf16.msra.mxu0 0
    %498 = vmatprep.subr.bf16.mxu0 0
    %499 = vmatpush1.bf16.msra.mxu0 0
    %500 = vmatprep.subr.bf16.mxu0 0
    %501 = vmatpush1.bf16.msra.mxu0 0
    %502 = vmatprep.subr.bf16.mxu0 0
    %503 = vmatpush1.bf16.msra.mxu0 0
    %504 = vmatprep.subr.bf16.mxu0 0
    %505 = vmatpush1.bf16.msra.mxu0 0
    %506 = vmatprep.subr.bf16.mxu0 0
    %507 = vmatpush1.bf16.msra.mxu0 0
    %508 = vmatprep.subr.bf16.mxu0 0
    %509 = vmatpush1.bf16.msra.mxu0 0
    %510 = vmatprep.subr.bf16.mxu0 0
    %511 = vmatpush1.bf16.msra.mxu0 0
    %512 = vmatprep.subr.bf16.mxu0 0
    %513 = vmatpush1.bf16.msra.mxu0 0
    %514 = vmatprep.mubr.bf16.mxu0 0
    %515 = vmatmul.mubr.bf16.gmra.mrb[0].mxu0 %v477
    %v516 = vpop.f32.mrb[0].mxu0
    %v517 = vadd.f32 0.0, %v516
    %v518 = vpop.f32.mrb[0].mxu0
    %v519 = vpop.f32.mrb[0].mxu0
    %v520 = vpop.f32.mrb[0].mxu0
    %521 = vdwg.mxu0
    %523 = vrot.lane.b32.xlu0 %v304, 96
    %v524 = vpop.permute.xlu0 %523
    %526 = vrot.lane.b32.xlu0 %v306, 96
    %v527 = vpop.permute.xlu0 %526
    %v529 = vsel %vm136, %v524, 0
    %v532 = vsel %vm136, %v527, 0
    %534 = vmatprep.subr.bf16.mxu0 0
    %535 = vmatpush1.bf16.xpose.msra.mxu0 %v532
    %536 = vmatprep.subr.bf16.mxu0 0
    %537 = vmatpush1.bf16.xpose.msra.mxu0 0
    %538 = vmatprep.subr.bf16.mxu0 0
    %539 = vmatpush1.bf16.xpose.msra.mxu0 0
    %540 = vmatprep.subr.bf16.mxu0 0
    %541 = vmatpush1.bf16.xpose.msra.mxu0 0
    %542 = vmatprep.subr.bf16.mxu0 0
    %543 = vmatpush1.bf16.xpose.msra.mxu0 0
    %544 = vmatprep.subr.bf16.mxu0 0
    %545 = vmatpush1.bf16.xpose.msra.mxu0 0
    %546 = vmatprep.subr.bf16.mxu0 0
    %547 = vmatpush1.bf16.xpose.msra.mxu0 0
    %548 = vmatprep.subr.bf16.mxu0 0
    %549 = vmatpush1.bf16.xpose.msra.mxu0 0
    %550 = vmatprep.subr.bf16.mxu0 0
    %551 = vmatpush1.bf16.xpose.msra.mxu0 0
    %552 = vmatprep.subr.bf16.mxu0 0
    %553 = vmatpush1.bf16.xpose.msra.mxu0 0
    %554 = vmatprep.subr.bf16.mxu0 0
    %555 = vmatpush1.bf16.xpose.msra.mxu0 0
    %556 = vmatprep.subr.bf16.mxu0 0
    %557 = vmatpush1.bf16.xpose.msra.mxu0 0
    %558 = vmatprep.subr.bf16.mxu0 0
    %559 = vmatpush1.bf16.xpose.msra.mxu0 0
    %560 = vmatprep.subr.bf16.mxu0 0
    %561 = vmatpush1.bf16.xpose.msra.mxu0 0
    %562 = vmatprep.subr.bf16.mxu0 0
    %563 = vmatpush1.bf16.xpose.msra.mxu0 0
    %564 = vmatprep.subr.bf16.mxu0 0
    %565 = vmatpush1.bf16.xpose.msra.mxu0 0
    %566 = vmatprep.mubr.bf16.mxu0 0
    %567 = vmatmul.mubr.bf16.gmra.mrb[0].mxu0 %v529
    %v568 = vpop.f32.mrb[0].mxu0
    %v569 = vadd.f32 0.0, %v568
    %v570 = vpop.f32.mrb[0].mxu0
    %v571 = vpop.f32.mrb[0].mxu0
    %v572 = vpop.f32.mrb[0].mxu0
    %573 = vdwg.mxu0
    %575 = vrot.lane.b32.xlu0 %v305, 96
    %v576 = vpop.permute.xlu0 %575
    %578 = vrot.lane.b32.xlu0 %v307, 96
    %v579 = vpop.permute.xlu0 %578
    %v581 = vsel %vm136, %v576, 0
    %v584 = vsel %vm136, %v579, 0
    %586 = vmatprep.subr.bf16.mxu0 0
    %587 = vmatpush1.bf16.xpose.msra.mxu0 %v584
    %588 = vmatprep.subr.bf16.mxu0 0
    %589 = vmatpush1.bf16.xpose.msra.mxu0 0
    %590 = vmatprep.subr.bf16.mxu0 0
    %591 = vmatpush1.bf16.xpose.msra.mxu0 0
    %592 = vmatprep.subr.bf16.mxu0 0
    %593 = vmatpush1.bf16.xpose.msra.mxu0 0
    %594 = vmatprep.subr.bf16.mxu0 0
    %595 = vmatpush1.bf16.xpose.msra.mxu0 0
    %596 = vmatprep.subr.bf16.mxu0 0
    %597 = vmatpush1.bf16.xpose.msra.mxu0 0
    %598 = vmatprep.subr.bf16.mxu0 0
    %599 = vmatpush1.bf16.xpose.msra.mxu0 0
    %600 = vmatprep.subr.bf16.mxu0 0
    %601 = vmatpush1.bf16.xpose.msra.mxu0 0
    %602 = vmatprep.subr.bf16.mxu0 0
    %603 = vmatpush1.bf16.xpose.msra.mxu0 0
    %604 = vmatprep.subr.bf16.mxu0 0
    %605 = vmatpush1.bf16.xpose.msra.mxu0 0
    %606 = vmatprep.subr.bf16.mxu0 0
    %607 = vmatpush1.bf16.xpose.msra.mxu0 0
    %608 = vmatprep.subr.bf16.mxu0 0
    %609 = vmatpush1.bf16.xpose.msra.mxu0 0
    %610 = vmatprep.subr.bf16.mxu0 0
    %611 = vmatpush1.bf16.xpose.msra.mxu0 0
    %612 = vmatprep.subr.bf16.mxu0 0
    %613 = vmatpush1.bf16.xpose.msra.mxu0 0
    %614 = vmatprep.subr.bf16.mxu0 0
    %615 = vmatpush1.bf16.xpose.msra.mxu0 0
    %616 = vmatprep.subr.bf16.mxu0 0
    %617 = vmatpush1.bf16.xpose.msra.mxu0 0
    %618 = vmatprep.mubr.bf16.mxu0 0
    %619 = vmatmul.mubr.bf16.gmra.mrb[0].mxu0 %v581
    %v620 = vpop.f32.mrb[0].mxu0
    %v621 = vadd.f32 0.0, %v620
    %v622 = vpop.f32.mrb[0].mxu0
    %v623 = vpop.f32.mrb[0].mxu0
    %v624 = vpop.f32.mrb[0].mxu0
    %625 = vdwg.mxu0
    %v626 = vmul.f32 %v569, 0.17677669
    %v627 = vmul.f32 %v621, 0.17677669
    %v628 = vsel %vm402, %v626, -inf
    %629 = vmax.xlane.f32.xlu0 %v628
    %v630 = vpop.xlane.xlu0 %629
    %v631 = vsel %vm402, %v627, -inf
    %632 = vmax.xlane.f32.xlu0 %v631
    %v633 = vpop.xlane.xlu0 %632
    %v634 = vsub.f32 %v626, %v630
    %v635 = vsub.f32 %v627, %v633
    %v636 = vmul.f32 %v634, 1.442695
    %v637 = vpow.pop %v636
    %v638 = vmul.f32 %v635, 1.442695
    %v639 = vpow.pop %v638
    %v640 = vsel %vm402, %v637, 0.0
    %641 = vadd.xlane.f32.xlu0 %v640
    %v642 = vpop.xlane.xlu0 %641
    %v643 = vsel %vm402, %v639, 0.0
    %644 = vadd.xlane.f32.xlu0 %v643
    %v645 = vpop.xlane.xlu0 %644
    %v646 = vrcp.pop %v642
    %v647 = vrcp.pop %v645
    %v648 = vmul.f32 %v637, %v646
    %v649 = vmul.f32 %v639, %v647
    %v650 = vpack.c.bf16 %v648, %v648
    %v651 = vpack.c.bf16 %v649, %v649
    %653 = vrot.lane.b32.xlu0 %v427, 96
    %v654 = vpop.permute.xlu0 %653
    %v656 = vsel %vm402, %v650, 0
    %v659 = vsel %vm432, %v654, 0
    %661 = vmatprep.subr.bf16.mxu0 0
    %662 = vmatpush1.bf16.msra.mxu0 %v659
    %663 = vmatprep.subr.bf16.mxu0 0
    %664 = vmatpush1.bf16.msra.mxu0 0
    %665 = vmatprep.subr.bf16.mxu0 0
    %666 = vmatpush1.bf16.msra.mxu0 0
    %667 = vmatprep.subr.bf16.mxu0 0
    %668 = vmatpush1.bf16.msra.mxu0 0
    %669 = vmatprep.subr.bf16.mxu0 0
    %670 = vmatpush1.bf16.msra.mxu0 0
    %671 = vmatprep.subr.bf16.mxu0 0
    %672 = vmatpush1.bf16.msra.mxu0 0
    %673 = vmatprep.subr.bf16.mxu0 0
    %674 = vmatpush1.bf16.msra.mxu0 0
    %675 = vmatprep.subr.bf16.mxu0 0
    %676 = vmatpush1.bf16.msra.mxu0 0
    %677 = vmatprep.subr.bf16.mxu0 0
    %678 = vmatpush1.bf16.msra.mxu0 0
    %679 = vmatprep.subr.bf16.mxu0 0
    %680 = vmatpush1.bf16.msra.mxu0 0
    %681 = vmatprep.subr.bf16.mxu0 0
    %682 = vmatpush1.bf16.msra.mxu0 0
    %683 = vmatprep.subr.bf16.mxu0 0
    %684 = vmatpush1.bf16.msra.mxu0 0
    %685 = vmatprep.subr.bf16.mxu0 0
    %686 = vmatpush1.bf16.msra.mxu0 0
    %687 = vmatprep.subr.bf16.mxu0 0
    %688 = vmatpush1.bf16.msra.mxu0 0
    %689 = vmatprep.subr.bf16.mxu0 0
    %690 = vmatpush1.bf16.msra.mxu0 0
    %691 = vmatprep.subr.bf16.mxu0 0
    %692 = vmatpush1.bf16.msra.mxu0 0
    %693 = vmatprep.mubr.bf16.mxu0 0
    %694 = vmatmul.mubr.bf16.gmra.mrb[0].mxu0 %v656
    %v695 = vpop.f32.mrb[0].mxu0
    %v696 = vadd.f32 0.0, %v695
    %v697 = vpop.f32.mrb[0].mxu0
    %v698 = vpop.f32.mrb[0].mxu0
    %v699 = vpop.f32.mrb[0].mxu0
    %700 = vdwg.mxu0
    %702 = vrot.lane.b32.xlu0 %v428, 96
    %v703 = vpop.permute.xlu0 %702
    %v705 = vsel %vm402, %v651, 0
    %v708 = vsel %vm432, %v703, 0
    %710 = vmatprep.subr.bf16.mxu0 0
    %711 = vmatpush1.bf16.msra.mxu0 %v708
    %712 = vmatprep.subr.bf16.mxu0 0
    %713 = vmatpush1.bf16.msra.mxu0 0
    %714 = vmatprep.subr.bf16.mxu0 0
    %715 = vmatpush1.bf16.msra.mxu0 0
    %716 = vmatprep.subr.bf16.mxu0 0
    %717 = vmatpush1.bf16.msra.mxu0 0
    %718 = vmatprep.subr.bf16.mxu0 0
    %719 = vmatpush1.bf16.msra.mxu0 0
    %720 = vmatprep.subr.bf16.mxu0 0
    %721 = vmatpush1.bf16.msra.mxu0 0
    %722 = vmatprep.subr.bf16.mxu0 0
    %723 = vmatpush1.bf16.msra.mxu0 0
    %724 = vmatprep.subr.bf16.mxu0 0
    %725 = vmatpush1.bf16.msra.mxu0 0
    %726 = vmatprep.subr.bf16.mxu0 0
    %727 = vmatpush1.bf16.msra.mxu0 0
    %728 = vmatprep.subr.bf16.mxu0 0
    %729 = vmatpush1.bf16.msra.mxu0 0
    %730 = vmatprep.subr.bf16.mxu0 0
    %731 = vmatpush1.bf16.msra.mxu0 0
    %732 = vmatprep.subr.bf16.mxu0 0
    %733 = vmatpush1.bf16.msra.mxu0 0
    %734 = vmatprep.subr.bf16.mxu0 0
    %735 = vmatpush1.bf16.msra.mxu0 0
    %736 = vmatprep.subr.bf16.mxu0 0
    %737 = vmatpush1.bf16.msra.mxu0 0
    %738 = vmatprep.subr.bf16.mxu0 0
    %739 = vmatpush1.bf16.msra.mxu0 0
    %740 = vmatprep.subr.bf16.mxu0 0
    %741 = vmatpush1.bf16.msra.mxu0 0
    %742 = vmatprep.mubr.bf16.mxu0 0
    %743 = vmatmul.mubr.bf16.gmra.mrb[0].mxu0 %v705
    %v744 = vpop.f32.mrb[0].mxu0
    %v745 = vadd.f32 0.0, %v744
    %v746 = vpop.f32.mrb[0].mxu0
    %v747 = vpop.f32.mrb[0].mxu0
    %v748 = vpop.f32.mrb[0].mxu0
    %749 = vdwg.mxu0
    %750 = vrot.lane.b32.xlu0 %v304, 64
    %v751 = vpop.permute.xlu0 %750
    %752 = vrot.lane.b32.xlu0 %v306, 64
    %v753 = vpop.permute.xlu0 %752
    %v755 = vsel %vm136, %v751, 0
    %v758 = vsel %vm136, %v753, 0
    %760 = vmatprep.subr.bf16.mxu0 0
    %761 = vmatpush1.bf16.xpose.msra.mxu0 %v758
    %762 = vmatprep.subr.bf16.mxu0 0
    %763 = vmatpush1.bf16.xpose.msra.mxu0 0
    %764 = vmatprep.subr.bf16.mxu0 0
    %765 = vmatpush1.bf16.xpose.msra.mxu0 0
    %766 = vmatprep.subr.bf16.mxu0 0
    %767 = vmatpush1.bf16.xpose.msra.mxu0 0
    %768 = vmatprep.subr.bf16.mxu0 0
    %769 = vmatpush1.bf16.xpose.msra.mxu0 0
    %770 = vmatprep.subr.bf16.mxu0 0
    %771 = vmatpush1.bf16.xpose.msra.mxu0 0
    %772 = vmatprep.subr.bf16.mxu0 0
    %773 = vmatpush1.bf16.xpose.msra.mxu0 0
    %774 = vmatprep.subr.bf16.mxu0 0
    %775 = vmatpush1.bf16.xpose.msra.mxu0 0
    %776 = vmatprep.subr.bf16.mxu0 0
    %777 = vmatpush1.bf16.xpose.msra.mxu0 0
    %778 = vmatprep.subr.bf16.mxu0 0
    %779 = vmatpush1.bf16.xpose.msra.mxu0 0
    %780 = vmatprep.subr.bf16.mxu0 0
    %781 = vmatpush1.bf16.xpose.msra.mxu0 0
    %782 = vmatprep.subr.bf16.mxu0 0
    %783 = vmatpush1.bf16.xpose.msra.mxu0 0
    %784 = vmatprep.subr.bf16.mxu0 0
    %785 = vmatpush1.bf16.xpose.msra.mxu0 0
    %786 = vmatprep.subr.bf16.mxu0 0
    %787 = vmatpush1.bf16.xpose.msra.mxu0 0
    %788 = vmatprep.subr.bf16.mxu0 0
    %789 = vmatpush1.bf16.xpose.msra.mxu0 0
    %790 = vmatprep.subr.bf16.mxu0 0
    %791 = vmatpush1.bf16.xpose.msra.mxu0 0
    %792 = vmatprep.mubr.bf16.mxu0 0
    %793 = vmatmul.mubr.bf16.gmra.mrb[0].mxu0 %v755
    %v794 = vpop.f32.mrb[0].mxu0
    %v795 = vadd.f32 0.0, %v794
    %v796 = vpop.f32.mrb[0].mxu0
    %v797 = vpop.f32.mrb[0].mxu0
    %v798 = vpop.f32.mrb[0].mxu0
    %799 = vdwg.mxu0
    %800 = vrot.lane.b32.xlu0 %v305, 64
    %v801 = vpop.permute.xlu0 %800
    %802 = vrot.lane.b32.xlu0 %v307, 64
    %v803 = vpop.permute.xlu0 %802
    %v805 = vsel %vm136, %v801, 0
    %v808 = vsel %vm136, %v803, 0
    %810 = vmatprep.subr.bf16.mxu0 0
    %811 = vmatpush1.bf16.xpose.msra.mxu0 %v808
    %812 = vmatprep.subr.bf16.mxu0 0
    %813 = vmatpush1.bf16.xpose.msra.mxu0 0
    %814 = vmatprep.subr.bf16.mxu0 0
    %815 = vmatpush1.bf16.xpose.msra.mxu0 0
    %816 = vmatprep.subr.bf16.mxu0 0
    %817 = vmatpush1.bf16.xpose.msra.mxu0 0
    %818 = vmatprep.subr.bf16.mxu0 0
    %819 = vmatpush1.bf16.xpose.msra.mxu0 0
    %820 = vmatprep.subr.bf16.mxu0 0
    %821 = vmatpush1.bf16.xpose.msra.mxu0 0
    %822 = vmatprep.subr.bf16.mxu0 0
    %823 = vmatpush1.bf16.xpose.msra.mxu0 0
    %824 = vmatprep.subr.bf16.mxu0 0
    %825 = vmatpush1.bf16.xpose.msra.mxu0 0
    %826 = vmatprep.subr.bf16.mxu0 0
    %827 = vmatpush1.bf16.xpose.msra.mxu0 0
    %828 = vmatprep.subr.bf16.mxu0 0
    %829 = vmatpush1.bf16.xpose.msra.mxu0 0
    %830 = vmatprep.subr.bf16.mxu0 0
    %831 = vmatpush1.bf16.xpose.msra.mxu0 0
    %832 = vmatprep.subr.bf16.mxu0 0
    %833 = vmatpush1.bf16.xpose.msra.mxu0 0
    %834 = vmatprep.subr.bf16.mxu0 0
    %835 = vmatpush1.bf16.xpose.msra.mxu0 0
    %836 = vmatprep.subr.bf16.mxu0 0
    %837 = vmatpush1.bf16.xpose.msra.mxu0 0
    %838 = vmatprep.subr.bf16.mxu0 0
    %839 = vmatpush1.bf16.xpose.msra.mxu0 0
    %840 = vmatprep.subr.bf16.mxu0 0
    %841 = vmatpush1.bf16.xpose.msra.mxu0 0
    %842 = vmatprep.mubr.bf16.mxu0 0
    %843 = vmatmul.mubr.bf16.gmra.mrb[0].mxu0 %v805
    %v844 = vpop.f32.mrb[0].mxu0
    %v845 = vadd.f32 0.0, %v844
    %v846 = vpop.f32.mrb[0].mxu0
    %v847 = vpop.f32.mrb[0].mxu0
    %v848 = vpop.f32.mrb[0].mxu0
    %849 = vdwg.mxu0
    %v850 = vmul.f32 %v795, 0.17677669
    %v851 = vmul.f32 %v845, 0.17677669
    %v852 = vsel %vm402, %v850, -inf
    %853 = vmax.xlane.f32.xlu0 %v852
    %v854 = vpop.xlane.xlu0 %853
    %v855 = vsel %vm402, %v851, -inf
    %856 = vmax.xlane.f32.xlu0 %v855
    %v857 = vpop.xlane.xlu0 %856
    %v858 = vsub.f32 %v850, %v854
    %v859 = vsub.f32 %v851, %v857
    %v860 = vmul.f32 %v858, 1.442695
    %v861 = vpow.pop %v860
    %v862 = vmul.f32 %v859, 1.442695
    %v863 = vpow.pop %v862
    %v864 = vsel %vm402, %v861, 0.0
    %865 = vadd.xlane.f32.xlu0 %v864
    %v866 = vpop.xlane.xlu0 %865
    %v867 = vsel %vm402, %v863, 0.0
    %868 = vadd.xlane.f32.xlu0 %v867
    %v869 = vpop.xlane.xlu0 %868
    %v870 = vrcp.pop %v866
    %v871 = vrcp.pop %v869
    %v872 = vmul.f32 %v861, %v870
    %v873 = vmul.f32 %v863, %v871
    %v874 = vpack.c.bf16 %v872, %v872
    %v875 = vpack.c.bf16 %v873, %v873
    %876 = vrot.lane.b32.xlu0 %v427, 64
    %v877 = vpop.permute.xlu0 %876
    %v879 = vsel %vm402, %v874, 0
    %v882 = vsel %vm432, %v877, 0
    %884 = vmatprep.subr.bf16.mxu0 0
    %885 = vmatpush1.bf16.msra.mxu0 %v882
    %886 = vmatprep.subr.bf16.mxu0 0
    %887 = vmatpush1.bf16.msra.mxu0 0
    %888 = vmatprep.subr.bf16.mxu0 0
    %889 = vmatpush1.bf16.msra.mxu0 0
    %890 = vmatprep.subr.bf16.mxu0 0
    %891 = vmatpush1.bf16.msra.mxu0 0
    %892 = vmatprep.subr.bf16.mxu0 0
    %893 = vmatpush1.bf16.msra.mxu0 0
    %894 = vmatprep.subr.bf16.mxu0 0
    %895 = vmatpush1.bf16.msra.mxu0 0
    %896 = vmatprep.subr.bf16.mxu0 0
    %897 = vmatpush1.bf16.msra.mxu0 0
    %898 = vmatprep.subr.bf16.mxu0 0
    %899 = vmatpush1.bf16.msra.mxu0 0
    %900 = vmatprep.subr.bf16.mxu0 0
    %901 = vmatpush1.bf16.msra.mxu0 0
    %902 = vmatprep.subr.bf16.mxu0 0
    %903 = vmatpush1.bf16.msra.mxu0 0
    %904 = vmatprep.subr.bf16.mxu0 0
    %905 = vmatpush1.bf16.msra.mxu0 0
    %906 = vmatprep.subr.bf16.mxu0 0
    %907 = vmatpush1.bf16.msra.mxu0 0
    %908 = vmatprep.subr.bf16.mxu0 0
    %909 = vmatpush1.bf16.msra.mxu0 0
    %910 = vmatprep.subr.bf16.mxu0 0
    %911 = vmatpush1.bf16.msra.mxu0 0
    %912 = vmatprep.subr.bf16.mxu0 0
    %913 = vmatpush1.bf16.msra.mxu0 0
    %914 = vmatprep.subr.bf16.mxu0 0
    %915 = vmatpush1.bf16.msra.mxu0 0
    %916 = vmatprep.mubr.bf16.mxu0 0
    %917 = vmatmul.mubr.bf16.gmra.mrb[0].mxu0 %v879
    %v918 = vpop.f32.mrb[0].mxu0
    %v919 = vadd.f32 0.0, %v918
    %v920 = vpop.f32.mrb[0].mxu0
    %v921 = vpop.f32.mrb[0].mxu0
    %v922 = vpop.f32.mrb[0].mxu0
    %923 = vdwg.mxu0
    %924 = vrot.lane.b32.xlu0 %v428, 64
    %v925 = vpop.permute.xlu0 %924
    %v927 = vsel %vm402, %v875, 0
    %v930 = vsel %vm432, %v925, 0
    %932 = vmatprep.subr.bf16.mxu0 0
    %933 = vmatpush1.bf16.msra.mxu0 %v930
    %934 = vmatprep.subr.bf16.mxu0 0
    %935 = vmatpush1.bf16.msra.mxu0 0
    %936 = vmatprep.subr.bf16.mxu0 0
    %937 = vmatpush1.bf16.msra.mxu0 0
    %938 = vmatprep.subr.bf16.mxu0 0
    %939 = vmatpush1.bf16.msra.mxu0 0
    %940 = vmatprep.subr.bf16.mxu0 0
    %941 = vmatpush1.bf16.msra.mxu0 0
    %942 = vmatprep.subr.bf16.mxu0 0
    %943 = vmatpush1.bf16.msra.mxu0 0
    %944 = vmatprep.subr.bf16.mxu0 0
    %945 = vmatpush1.bf16.msra.mxu0 0
    %946 = vmatprep.subr.bf16.mxu0 0
    %947 = vmatpush1.bf16.msra.mxu0 0
    %948 = vmatprep.subr.bf16.mxu0 0
    %949 = vmatpush1.bf16.msra.mxu0 0
    %950 = vmatprep.subr.bf16.mxu0 0
    %951 = vmatpush1.bf16.msra.mxu0 0
    %952 = vmatprep.subr.bf16.mxu0 0
    %953 = vmatpush1.bf16.msra.mxu0 0
    %954 = vmatprep.subr.bf16.mxu0 0
    %955 = vmatpush1.bf16.msra.mxu0 0
    %956 = vmatprep.subr.bf16.mxu0 0
    %957 = vmatpush1.bf16.msra.mxu0 0
    %958 = vmatprep.subr.bf16.mxu0 0
    %959 = vmatpush1.bf16.msra.mxu0 0
    %960 = vmatprep.subr.bf16.mxu0 0
    %961 = vmatpush1.bf16.msra.mxu0 0
    %962 = vmatprep.subr.bf16.mxu0 0
    %963 = vmatpush1.bf16.msra.mxu0 0
    %964 = vmatprep.mubr.bf16.mxu0 0
    %965 = vmatmul.mubr.bf16.gmra.mrb[0].mxu0 %v927
    %v966 = vpop.f32.mrb[0].mxu0
    %v967 = vadd.f32 0.0, %v966
    %v968 = vpop.f32.mrb[0].mxu0
    %v969 = vpop.f32.mrb[0].mxu0
    %v970 = vpop.f32.mrb[0].mxu0
    %971 = vdwg.mxu0
    %972 = vrot.lane.b32.xlu0 %v304, 32
    %v973 = vpop.permute.xlu0 %972
    %974 = vrot.lane.b32.xlu0 %v306, 32
    %v975 = vpop.permute.xlu0 %974
    %v977 = vsel %vm136, %v973, 0
    %v980 = vsel %vm136, %v975, 0
    %982 = vmatprep.subr.bf16.mxu0 0
    %983 = vmatpush1.bf16.xpose.msra.mxu0 %v980
    %984 = vmatprep.subr.bf16.mxu0 0
    %985 = vmatpush1.bf16.xpose.msra.mxu0 0
    %986 = vmatprep.subr.bf16.mxu0 0
    %987 = vmatpush1.bf16.xpose.msra.mxu0 0
    %988 = vmatprep.subr.bf16.mxu0 0
    %989 = vmatpush1.bf16.xpose.msra.mxu0 0
    %990 = vmatprep.subr.bf16.mxu0 0
    %991 = vmatpush1.bf16.xpose.msra.mxu0 0
    %992 = vmatprep.subr.bf16.mxu0 0
    %993 = vmatpush1.bf16.xpose.msra.mxu0 0
    %994 = vmatprep.subr.bf16.mxu0 0
    %995 = vmatpush1.bf16.xpose.msra.mxu0 0
    %996 = vmatprep.subr.bf16.mxu0 0
    %997 = vmatpush1.bf16.xpose.msra.mxu0 0
    %998 = vmatprep.subr.bf16.mxu0 0
    %999 = vmatpush1.bf16.xpose.msra.mxu0 0
    %1000 = vmatprep.subr.bf16.mxu0 0
    %1001 = vmatpush1.bf16.xpose.msra.mxu0 0
    %1002 = vmatprep.subr.bf16.mxu0 0
    %1003 = vmatpush1.bf16.xpose.msra.mxu0 0
    %1004 = vmatprep.subr.bf16.mxu0 0
    %1005 = vmatpush1.bf16.xpose.msra.mxu0 0
    %1006 = vmatprep.subr.bf16.mxu0 0
    %1007 = vmatpush1.bf16.xpose.msra.mxu0 0
    %1008 = vmatprep.subr.bf16.mxu0 0
    %1009 = vmatpush1.bf16.xpose.msra.mxu0 0
    %1010 = vmatprep.subr.bf16.mxu0 0
    %1011 = vmatpush1.bf16.xpose.msra.mxu0 0
    %1012 = vmatprep.subr.bf16.mxu0 0
    %1013 = vmatpush1.bf16.xpose.msra.mxu0 0
    %1014 = vmatprep.mubr.bf16.mxu0 0
    %1015 = vmatmul.mubr.bf16.gmra.mrb[0].mxu0 %v977
    %v1016 = vpop.f32.mrb[0].mxu0
    %v1017 = vadd.f32 0.0, %v1016
    %v1018 = vpop.f32.mrb[0].mxu0
    %v1019 = vpop.f32.mrb[0].mxu0
    %v1020 = vpop.f32.mrb[0].mxu0
    %1021 = vdwg.mxu0
    %1022 = vrot.lane.b32.xlu0 %v305, 32
    %v1023 = vpop.permute.xlu0 %1022
    %1024 = vrot.lane.b32.xlu0 %v307, 32
    %v1025 = vpop.permute.xlu0 %1024
    %v1027 = vsel %vm136, %v1023, 0
    %v1030 = vsel %vm136, %v1025, 0
    %1032 = vmatprep.subr.bf16.mxu0 0
    %1033 = vmatpush1.bf16.xpose.msra.mxu0 %v1030
    %1034 = vmatprep.subr.bf16.mxu0 0
    %1035 = vmatpush1.bf16.xpose.msra.mxu0 0
    %1036 = vmatprep.subr.bf16.mxu0 0
    %1037 = vmatpush1.bf16.xpose.msra.mxu0 0
    %1038 = vmatprep.subr.bf16.mxu0 0
    %1039 = vmatpush1.bf16.xpose.msra.mxu0 0
    %1040 = vmatprep.subr.bf16.mxu0 0
    %1041 = vmatpush1.bf16.xpose.msra.mxu0 0
    %1042 = vmatprep.subr.bf16.mxu0 0
    %1043 = vmatpush1.bf16.xpose.msra.mxu0 0
    %1044 = vmatprep.subr.bf16.mxu0 0
    %1045 = vmatpush1.bf16.xpose.msra.mxu0 0
    %1046 = vmatprep.subr.bf16.mxu0 0
    %1047 = vmatpush1.bf16.xpose.msra.mxu0 0
    %1048 = vmatprep.subr.bf16.mxu0 0
    %1049 = vmatpush1.bf16.xpose.msra.mxu0 0
    %1050 = vmatprep.subr.bf16.mxu0 0
    %1051 = vmatpush1.bf16.xpose.msra.mxu0 0
    %1052 = vmatprep.subr.bf16.mxu0 0
    %1053 = vmatpush1.bf16.xpose.msra.mxu0 0
    %1054 = vmatprep.subr.bf16.mxu0 0
    %1055 = vmatpush1.bf16.xpose.msra.mxu0 0
    %1056 = vmatprep.subr.bf16.mxu0 0
    %1057 = vmatpush1.bf16.xpose.msra.mxu0 0
    %1058 = vmatprep.subr.bf16.mxu0 0
    %1059 = vmatpush1.bf16.xpose.msra.mxu0 0
    %1060 = vmatprep.subr.bf16.mxu0 0
    %1061 = vmatpush1.bf16.xpose.msra.mxu0 0
    %1062 = vmatprep.subr.bf16.mxu0 0
    %1063 = vmatpush1.bf16.xpose.msra.mxu0 0
    %1064 = vmatprep.mubr.bf16.mxu0 0
    %1065 = vmatmul.mubr.bf16.gmra.mrb[0].mxu0 %v1027
    %v1066 = vpop.f32.mrb[0].mxu0
    %v1067 = vadd.f32 0.0, %v1066
    %v1068 = vpop.f32.mrb[0].mxu0
    %v1069 = vpop.f32.mrb[0].mxu0
    %v1070 = vpop.f32.mrb[0].mxu0
    %1071 = vdwg.mxu0
    %v1072 = vmul.f32 %v1017, 0.17677669
    %v1073 = vmul.f32 %v1067, 0.17677669
    %v1074 = vsel %vm402, %v1072, -inf
    %1075 = vmax.xlane.f32.xlu0 %v1074
    %v1076 = vpop.xlane.xlu0 %1075
    %v1077 = vsel %vm402, %v1073, -inf
    %1078 = vmax.xlane.f32.xlu0 %v1077
    %v1079 = vpop.xlane.xlu0 %1078
    %v1080 = vsub.f32 %v1072, %v1076
    %v1081 = vsub.f32 %v1073, %v1079
    %v1082 = vmul.f32 %v1080, 1.442695
    %v1083 = vpow.pop %v1082
    %v1084 = vmul.f32 %v1081, 1.442695
    %v1085 = vpow.pop %v1084
    %v1086 = vsel %vm402, %v1083, 0.0
    %1087 = vadd.xlane.f32.xlu0 %v1086
    %v1088 = vpop.xlane.xlu0 %1087
    %v1089 = vsel %vm402, %v1085, 0.0
    %1090 = vadd.xlane.f32.xlu0 %v1089
    %v1091 = vpop.xlane.xlu0 %1090
    %v1092 = vrcp.pop %v1088
    %v1093 = vrcp.pop %v1091
    %v1094 = vmul.f32 %v1083, %v1092
    %v1095 = vmul.f32 %v1085, %v1093
    %v1096 = vpack.c.bf16 %v1094, %v1094
    %v1097 = vpack.c.bf16 %v1095, %v1095
    %1098 = vrot.lane.b32.xlu0 %v427, 32
    %v1099 = vpop.permute.xlu0 %1098
    %v1101 = vsel %vm402, %v1096, 0
    %v1104 = vsel %vm432, %v1099, 0
    %1106 = vmatprep.subr.bf16.mxu0 0
    %1107 = vmatpush1.bf16.msra.mxu0 %v1104
    %1108 = vmatprep.subr.bf16.mxu0 0
    %1109 = vmatpush1.bf16.msra.mxu0 0
    %1110 = vmatprep.subr.bf16.mxu0 0
    %1111 = vmatpush1.bf16.msra.mxu0 0
    %1112 = vmatprep.subr.bf16.mxu0 0
    %1113 = vmatpush1.bf16.msra.mxu0 0
    %1114 = vmatprep.subr.bf16.mxu0 0
    %1115 = vmatpush1.bf16.msra.mxu0 0
    %1116 = vmatprep.subr.bf16.mxu0 0
    %1117 = vmatpush1.bf16.msra.mxu0 0
    %1118 = vmatprep.subr.bf16.mxu0 0
    %1119 = vmatpush1.bf16.msra.mxu0 0
    %1120 = vmatprep.subr.bf16.mxu0 0
    %1121 = vmatpush1.bf16.msra.mxu0 0
    %1122 = vmatprep.subr.bf16.mxu0 0
    %1123 = vmatpush1.bf16.msra.mxu0 0
    %1124 = vmatprep.subr.bf16.mxu0 0
    %1125 = vmatpush1.bf16.msra.mxu0 0
    %1126 = vmatprep.subr.bf16.mxu0 0
    %1127 = vmatpush1.bf16.msra.mxu0 0
    %1128 = vmatprep.subr.bf16.mxu0 0
    %1129 = vmatpush1.bf16.msra.mxu0 0
    %1130 = vmatprep.subr.bf16.mxu0 0
    %1131 = vmatpush1.bf16.msra.mxu0 0
    %1132 = vmatprep.subr.bf16.mxu0 0
    %1133 = vmatpush1.bf16.msra.mxu0 0
    %1134 = vmatprep.subr.bf16.mxu0 0
    %1135 = vmatpush1.bf16.msra.mxu0 0
    %1136 = vmatprep.subr.bf16.mxu0 0
    %1137 = vmatpush1.bf16.msra.mxu0 0
    %1138 = vmatprep.mubr.bf16.mxu0 0
    %1139 = vmatmul.mubr.bf16.gmra.mrb[0].mxu0 %v1101
    %v1140 = vpop.f32.mrb[0].mxu0
    %v1141 = vadd.f32 0.0, %v1140
    %v1142 = vpop.f32.mrb[0].mxu0
    %v1143 = vpop.f32.mrb[0].mxu0
    %v1144 = vpop.f32.mrb[0].mxu0
    %1145 = vdwg.mxu0
    %1146 = vrot.lane.b32.xlu0 %v428, 32
    %v1147 = vpop.permute.xlu0 %1146
    %v1149 = vsel %vm402, %v1097, 0
    %v1152 = vsel %vm432, %v1147, 0
    %1154 = vmatprep.subr.bf16.mxu0 0
    %1155 = vmatpush1.bf16.msra.mxu0 %v1152
    %1156 = vmatprep.subr.bf16.mxu0 0
    %1157 = vmatpush1.bf16.msra.mxu0 0
    %1158 = vmatprep.subr.bf16.mxu0 0
    %1159 = vmatpush1.bf16.msra.mxu0 0
    %1160 = vmatprep.subr.bf16.mxu0 0
    %1161 = vmatpush1.bf16.msra.mxu0 0
    %1162 = vmatprep.subr.bf16.mxu0 0
    %1163 = vmatpush1.bf16.msra.mxu0 0
    %1164 = vmatprep.subr.bf16.mxu0 0
    %1165 = vmatpush1.bf16.msra.mxu0 0
    %1166 = vmatprep.subr.bf16.mxu0 0
    %1167 = vmatpush1.bf16.msra.mxu0 0
    %1168 = vmatprep.subr.bf16.mxu0 0
    %1169 = vmatpush1.bf16.msra.mxu0 0
    %1170 = vmatprep.subr.bf16.mxu0 0
    %1171 = vmatpush1.bf16.msra.mxu0 0
    %1172 = vmatprep.subr.bf16.mxu0 0
    %1173 = vmatpush1.bf16.msra.mxu0 0
    %1174 = vmatprep.subr.bf16.mxu0 0
    %1175 = vmatpush1.bf16.msra.mxu0 0
    %1176 = vmatprep.subr.bf16.mxu0 0
    %1177 = vmatpush1.bf16.msra.mxu0 0
    %1178 = vmatprep.subr.bf16.mxu0 0
    %1179 = vmatpush1.bf16.msra.mxu0 0
    %1180 = vmatprep.subr.bf16.mxu0 0
    %1181 = vmatpush1.bf16.msra.mxu0 0
    %1182 = vmatprep.subr.bf16.mxu0 0
    %1183 = vmatpush1.bf16.msra.mxu0 0
    %1184 = vmatprep.subr.bf16.mxu0 0
    %1185 = vmatpush1.bf16.msra.mxu0 0
    %1186 = vmatprep.mubr.bf16.mxu0 0
    %1187 = vmatmul.mubr.bf16.gmra.mrb[0].mxu0 %v1149
    %v1188 = vpop.f32.mrb[0].mxu0
    %v1189 = vadd.f32 0.0, %v1188
    %v1190 = vpop.f32.mrb[0].mxu0
    %v1191 = vpop.f32.mrb[0].mxu0
    %v1192 = vpop.f32.mrb[0].mxu0
    %1193 = vdwg.mxu0
    %1196 = vrot.lane.b32.xlu0 %v696, 32
    %v1197 = vpop.permute.xlu0 %1196
    %1198 = vrot.lane.b32.xlu0 %v745, 32
    %v1199 = vpop.permute.xlu0 %1198
    %1204 = vrot.lane.b32.xlu0 %v919, 64
    %v1205 = vpop.permute.xlu0 %1204
    %1206 = vrot.lane.b32.xlu0 %v967, 64
    %v1207 = vpop.permute.xlu0 %1206
    %1212 = vrot.lane.b32.xlu0 %v1141, 96
    %v1213 = vpop.permute.xlu0 %1212
    %1214 = vrot.lane.b32.xlu0 %v1189, 96
    %v1215 = vpop.permute.xlu0 %1214
    %v1218 = vsel %vm136, %v471, %v1197
    %v1219 = vsel %vm136, %v517, %v1199
    %v1220 = vsel %vm89, %v1218, %v1205
    %v1221 = vsel %vm89, %v1219, %v1207
    %vm1222 = vcmask 785408
    %v1223 = vsel %vm1222, %v1220, %v1213
    %v1224 = vsel %vm1222, %v1221, %v1215
    %v1225 = vpack.c.bf16 %v1224, %v1223
    %v1226 = vld [vmem:[%s5] sm:$0xf]
    %v1227 = vld [vmem:[%s5 + $0x4] sm:$0xf]
    %v1228 = vld [vmem:[%s5 + $0x8] sm:$0xf]
    %v1229 = vld [vmem:[%s5 + $0xc] sm:$0xf]
    %v1230 = vld [vmem:[%s5 + $0x10] sm:$0xf]
    %v1231 = vld [vmem:[%s5 + $0x14] sm:$0xf]
    %v1232 = vld [vmem:[%s5 + $0x18] sm:$0xf]
    %v1233 = vld [vmem:[%s5 + $0x1c] sm:$0xf]
    %v1234 = vld [vmem:[%s5 + $0x20] sm:$0xf]
    %v1235 = vld [vmem:[%s5 + $0x24] sm:$0xf]
    %v1236 = vld [vmem:[%s5 + $0x28] sm:$0xf]
    %v1237 = vld [vmem:[%s5 + $0x2c] sm:$0xf]
    %v1238 = vld [vmem:[%s5 + $0x30] sm:$0xf]
    %v1239 = vld [vmem:[%s5 + $0x34] sm:$0xf]
    %v1240 = vld [vmem:[%s5 + $0x38] sm:$0xf]
    %v1241 = vld [vmem:[%s5 + $0x3c] sm:$0xf]
    %v1242 = vlaneseq
    %v1243 = vshrl.u32 %v1242, 7
    %v1244 = vsub.s32 4, %v1243
    %v1245 = vrot.slane %v134, %v1244
    %v1262 = vunpack.c.l.b16 %v1226
    %v1263 = vunpack.c.l.b16 %v1227
    %v1264 = vunpack.c.l.b16 %v1228
    %v1265 = vunpack.c.l.b16 %v1229
    %v1266 = vunpack.c.l.b16 %v1230
    %v1267 = vunpack.c.l.b16 %v1231
    %v1268 = vunpack.c.l.b16 %v1232
    %v1269 = vunpack.c.l.b16 %v1233
    %v1270 = vunpack.c.l.b16 %v1234
    %v1271 = vunpack.c.l.b16 %v1235
    %v1272 = vunpack.c.l.b16 %v1236
    %v1273 = vunpack.c.l.b16 %v1237
    %v1274 = vunpack.c.l.b16 %v1238
    %v1275 = vunpack.c.l.b16 %v1239
    %v1276 = vunpack.c.l.b16 %v1240
    %v1277 = vunpack.c.l.b16 %v1241
    %v1278 = vpack.c.b16 %v1263, %v1262
    %v1279 = vpack.c.b16 %v1265, %v1264
    %v1280 = vpack.c.b16 %v1267, %v1266
    %v1281 = vpack.c.b16 %v1269, %v1268
    %v1282 = vpack.c.b16 %v1271, %v1270
    %v1283 = vpack.c.b16 %v1273, %v1272
    %v1284 = vpack.c.b16 %v1275, %v1274
    %v1285 = vpack.c.b16 %v1277, %v1276
    %1294 = vmatprep.subr.bf16.mxu0 0
    %1295 = vmatpush1.bf16.msra.mxu0 %v1278
    %1296 = vmatprep.subr.bf16.mxu0 0
    %1297 = vmatpush1.bf16.msra.mxu0 %v1279
    %1298 = vmatprep.subr.bf16.mxu0 0
    %1299 = vmatpush1.bf16.msra.mxu0 %v1280
    %1300 = vmatprep.subr.bf16.mxu0 0
    %1301 = vmatpush1.bf16.msra.mxu0 %v1281
    %1302 = vmatprep.subr.bf16.mxu0 0
    %1303 = vmatpush1.bf16.msra.mxu0 %v1282
    %1304 = vmatprep.subr.bf16.mxu0 0
    %1305 = vmatpush1.bf16.msra.mxu0 %v1283
    %1306 = vmatprep.subr.bf16.mxu0 0
    %1307 = vmatpush1.bf16.msra.mxu0 %v1284
    %1308 = vmatprep.subr.bf16.mxu0 0
    %1309 = vmatpush1.bf16.msra.mxu0 %v1285
    %1310 = vmatprep.subr.bf16.mxu0 0
    %1311 = vmatpush1.bf16.msra.mxu0 0
    %1312 = vmatprep.subr.bf16.mxu0 0
    %1313 = vmatpush1.bf16.msra.mxu0 0
    %1314 = vmatprep.subr.bf16.mxu0 0
    %1315 = vmatpush1.bf16.msra.mxu0 0
    %1316 = vmatprep.subr.bf16.mxu0 0
    %1317 = vmatpush1.bf16.msra.mxu0 0
    %1318 = vmatprep.subr.bf16.mxu0 0
    %1319 = vmatpush1.bf16.msra.mxu0 0
    %1320 = vmatprep.subr.bf16.mxu0 0
    %1321 = vmatpush1.bf16.msra.mxu0 0
    %1322 = vmatprep.subr.bf16.mxu0 0
    %1323 = vmatpush1.bf16.msra.mxu0 0
    %1324 = vmatprep.subr.bf16.mxu0 0
    %1325 = vmatpush1.bf16.msra.mxu0 0
    %1326 = vmatprep.mubr.bf16.mxu0 0
    %1327 = vmatmul.mubr.bf16.gmra.mrb[0].mxu0 %v1225
    %v1328 = vpop.f32.mrb[0].mxu0
    %v1329 = vadd.f32 %v1245, %v1328
    %v1330 = vpop.f32.mrb[0].mxu0
    %v1331 = vpop.f32.mrb[0].mxu0
    %v1332 = vadd.f32 %v1245, %v1331
    %v1333 = vpop.f32.mrb[0].mxu0
    %1334 = vdwg.mxu0
    %v1335 = vadd.f32 %v128, %v1329
    %v1336 = vadd.f32 %v131, %v1332
    %v1337 = vsel %vm136, %v1335, 0.0
    %1338 = vadd.xlane.f32.xlu0 %v1337
    %v1339 = vpop.xlane.xlu0 %1338
    %v1340 = vsel %vm136, %v1336, 0.0
    %1341 = vadd.xlane.f32.xlu0 %v1340
    %v1342 = vpop.xlane.xlu0 %1341
    %v1343 = vmul.f32 %v1339, %v143
    %v1344 = vmul.f32 %v1342, %v143
    %v1345 = vsub.f32 %v1335, %v1343
    %v1346 = vsub.f32 %v1336, %v1344
    %v1347 = vmul.f32 %v1345, %v1345
    %v1348 = vmul.f32 %v1346, %v1346
    %v1349 = vsel %vm136, %v1347, 0.0
    %1350 = vadd.xlane.f32.xlu0 %v1349
    %v1351 = vpop.xlane.xlu0 %1350
    %v1352 = vsel %vm136, %v1348, 0.0
    %1353 = vadd.xlane.f32.xlu0 %v1352
    %v1354 = vpop.xlane.xlu0 %1353
    %v1355 = vmul.f32 %v1351, %v143
    %v1356 = vmul.f32 %v1354, %v143
    %v1357 = vadd.f32 %v1355, 1e-05
    %v1358 = vadd.f32 %v1356, 1e-05
    %v1359 = vrsqrt.pop %v1357
    %v1360 = vrsqrt.pop %v1358
    %v1361 = vmul.f32 %v1345, %v1359
    %v1362 = vmul.f32 %v1346, %v1360
    %v1363 = vlaneseq
    %v1364 = vshrl.u32 %v1363, 7
    %v1365 = vsub.s32 2, %v1364
    %v1366 = vrot.slane %v134, %v1365
    %v1367 = vmul.f32 %v1361, %v1366
    %v1368 = vmul.f32 %v1362, %v1366
    %v1369 = vlaneseq
    %v1370 = vshrl.u32 %v1369, 7
    %v1371 = vsub.s32 3, %v1370
    %v1372 = vrot.slane %v134, %v1371
    %v1373 = vadd.f32 %v1367, %v1372
    %v1374 = vadd.f32 %v1368, %v1372
    %v1375 = vpack.c.bf16 %v1374, %v1373
    %v1376 = vld [vmem:[%s6] sm:$0xf]
    %v1377 = vld [vmem:[%s6 + $0x4] sm:$0xf]
    %v1378 = vld [vmem:[%s6 + $0x8] sm:$0xf]
    %v1379 = vld [vmem:[%s6 + $0xc] sm:$0xf]
    %v1381 = vlaneseq
    %v1382 = vshrl.u32 %v1381, 7
    %v1383 = vsub.s32 0, %v1382
    %v1384 = vrot.slane %v135, %v1383
    %v1390 = vunpack.c.l.b16 %v1376
    %v1391 = vunpack.c.l.b16 %v1377
    %v1392 = vunpack.c.l.b16 %v1378
    %v1393 = vunpack.c.l.b16 %v1379
    %v1394 = vpack.c.b16 %v1391, %v1390
    %v1395 = vpack.c.b16 %v1393, %v1392
    %v1399 = vsel %vm136, %v1375, 0
    %1401 = vmatprep.subr.bf16.mxu0 0
    %1402 = vmatpush1.bf16.msra.mxu0 %v1394
    %1403 = vmatprep.subr.bf16.mxu0 0
    %1404 = vmatpush1.bf16.msra.mxu0 %v1395
    %1405 = vmatprep.subr.bf16.mxu0 0
    %1406 = vmatpush1.bf16.msra.mxu0 0
    %1407 = vmatprep.subr.bf16.mxu0 0
    %1408 = vmatpush1.bf16.msra.mxu0 0
    %1409 = vmatprep.subr.bf16.mxu0 0
    %1410 = vmatpush1.bf16.msra.mxu0 0
    %1411 = vmatprep.subr.bf16.mxu0 0
    %1412 = vmatpush1.bf16.msra.mxu0 0
    %1413 = vmatprep.subr.bf16.mxu0 0
    %1414 = vmatpush1.bf16.msra.mxu0 0
    %1415 = vmatprep.subr.bf16.mxu0 0
    %1416 = vmatpush1.bf16.msra.mxu0 0
    %1417 = vmatprep.subr.bf16.mxu0 0
    %1418 = vmatpush1.bf16.msra.mxu0 0
    %1419 = vmatprep.subr.bf16.mxu0 0
    %1420 = vmatpush1.bf16.msra.mxu0 0
    %1421 = vmatprep.subr.bf16.mxu0 0
    %1422 = vmatpush1.bf16.msra.mxu0 0
    %1423 = vmatprep.subr.bf16.mxu0 0
    %1424 = vmatpush1.bf16.msra.mxu0 0
    %1425 = vmatprep.subr.bf16.mxu0 0
    %1426 = vmatpush1.bf16.msra.mxu0 0
    %1427 = vmatprep.subr.bf16.mxu0 0
    %1428 = vmatpush1.bf16.msra.mxu0 0
    %1429 = vmatprep.subr.bf16.mxu0 0
    %1430 = vmatpush1.bf16.msra.mxu0 0
    %1431 = vmatprep.subr.bf16.mxu0 0
    %1432 = vmatpush1.bf16.msra.mxu0 0
    %1433 = vmatprep.mubr.bf16.mxu0 0
    %1434 = vmatmul.mubr.bf16.gmra.mrb[0].mxu0 %v1399
    %v1435 = vpop.f32.mrb[0].mxu0
    %v1436 = vadd.f32 %v1384, %v1435
    %v1437 = vpop.f32.mrb[0].mxu0
    %v1438 = vpop.f32.mrb[0].mxu0
    %v1439 = vadd.f32 %v1384, %v1438
    %v1440 = vpop.f32.mrb[0].mxu0
    %1441 = vdwg.mxu0
    %v1442 = vmul.f32 %v1436, 0.5
    %v1443 = vmul.f32 %v1439, 0.5
    %v1444 = vmul.f32 %v1436, 0.044715
    %v1445 = vmul.f32 %v1439, 0.044715
    %v1446 = vmul.f32 %v1444, %v1436
    %v1447 = vmul.f32 %v1445, %v1439
    %v1448 = vmul.f32 %v1446, %v1436
    %v1449 = vmul.f32 %v1447, %v1439
    %v1450 = vadd.f32 %v1436, %v1448
    %v1451 = vadd.f32 %v1439, %v1449
    %v1452 = vmul.f32 %v1450, 0.7978846
    %v1453 = vmul.f32 %v1451, 0.7978846
    %v1454 = vtanh.pop %v1452
    %v1455 = vtanh.pop %v1453
    %v1456 = vadd.f32 %v1454, 1.0
    %v1457 = vadd.f32 %v1455, 1.0
    %v1458 = vmul.f32 %v1442, %v1456
    %v1459 = vmul.f32 %v1443, %v1457
    %v1460 = vpack.c.bf16 %v1459, %v1458
    %v1461 = vld [vmem:[%s7] sm:$0xf]
    %v1462 = vld [vmem:[%s7 + $0x4] sm:$0xf]
    %v1463 = vld [vmem:[%s7 + $0x8] sm:$0xf]
    %v1464 = vld [vmem:[%s7 + $0xc] sm:$0xf]
    %v1465 = vld [vmem:[%s7 + $0x10] sm:$0xf]
    %v1466 = vld [vmem:[%s7 + $0x14] sm:$0xf]
    %v1467 = vld [vmem:[%s7 + $0x18] sm:$0xf]
    %v1468 = vld [vmem:[%s7 + $0x1c] sm:$0xf]
    %v1469 = vld [vmem:[%s7 + $0x20] sm:$0xf]
    %v1470 = vld [vmem:[%s7 + $0x24] sm:$0xf]
    %v1471 = vld [vmem:[%s7 + $0x28] sm:$0xf]
    %v1472 = vld [vmem:[%s7 + $0x2c] sm:$0xf]
    %v1473 = vld [vmem:[%s7 + $0x30] sm:$0xf]
    %v1474 = vld [vmem:[%s7 + $0x34] sm:$0xf]
    %v1475 = vld [vmem:[%s7 + $0x38] sm:$0xf]
    %v1476 = vld [vmem:[%s7 + $0x3c] sm:$0xf]
    %v1477 = vlaneseq
    %v1478 = vshrl.u32 %v1477, 7
    %v1479 = vsub.s32 5, %v1478
    %v1480 = vrot.slane %v134, %v1479
    %v1497 = vunpack.c.l.b16 %v1461
    %v1498 = vunpack.c.l.b16 %v1462
    %v1499 = vunpack.c.l.b16 %v1463
    %v1500 = vunpack.c.l.b16 %v1464
    %v1501 = vunpack.c.l.b16 %v1465
    %v1502 = vunpack.c.l.b16 %v1466
    %v1503 = vunpack.c.l.b16 %v1467
    %v1504 = vunpack.c.l.b16 %v1468
    %v1505 = vunpack.c.l.b16 %v1469
    %v1506 = vunpack.c.l.b16 %v1470
    %v1507 = vunpack.c.l.b16 %v1471
    %v1508 = vunpack.c.l.b16 %v1472
    %v1509 = vunpack.c.l.b16 %v1473
    %v1510 = vunpack.c.l.b16 %v1474
    %v1511 = vunpack.c.l.b16 %v1475
    %v1512 = vunpack.c.l.b16 %v1476
    %v1513 = vpack.c.b16 %v1498, %v1497
    %v1514 = vpack.c.b16 %v1500, %v1499
    %v1515 = vpack.c.b16 %v1502, %v1501
    %v1516 = vpack.c.b16 %v1504, %v1503
    %v1517 = vpack.c.b16 %v1506, %v1505
    %v1518 = vpack.c.b16 %v1508, %v1507
    %v1519 = vpack.c.b16 %v1510, %v1509
    %v1520 = vpack.c.b16 %v1512, %v1511
    %1529 = vmatprep.subr.bf16.mxu0 0
    %1530 = vmatpush1.bf16.msra.mxu0 %v1513
    %1531 = vmatprep.subr.bf16.mxu0 0
    %1532 = vmatpush1.bf16.msra.mxu0 %v1514
    %1533 = vmatprep.subr.bf16.mxu0 0
    %1534 = vmatpush1.bf16.msra.mxu0 %v1515
    %1535 = vmatprep.subr.bf16.mxu0 0
    %1536 = vmatpush1.bf16.msra.mxu0 %v1516
    %1537 = vmatprep.subr.bf16.mxu0 0
    %1538 = vmatpush1.bf16.msra.mxu0 %v1517
    %1539 = vmatprep.subr.bf16.mxu0 0
    %1540 = vmatpush1.bf16.msra.mxu0 %v1518
    %1541 = vmatprep.subr.bf16.mxu0 0
    %1542 = vmatpush1.bf16.msra.mxu0 %v1519
    %1543 = vmatprep.subr.bf16.mxu0 0
    %1544 = vmatpush1.bf16.msra.mxu0 %v1520
    %1545 = vmatprep.subr.bf16.mxu0 0
    %1546 = vmatpush1.bf16.msra.mxu0 0
    %1547 = vmatprep.subr.bf16.mxu0 0
    %1548 = vmatpush1.bf16.msra.mxu0 0
    %1549 = vmatprep.subr.bf16.mxu0 0
    %1550 = vmatpush1.bf16.msra.mxu0 0
    %1551 = vmatprep.subr.bf16.mxu0 0
    %1552 = vmatpush1.bf16.msra.mxu0 0
    %1553 = vmatprep.subr.bf16.mxu0 0
    %1554 = vmatpush1.bf16.msra.mxu0 0
    %1555 = vmatprep.subr.bf16.mxu0 0
    %1556 = vmatpush1.bf16.msra.mxu0 0
    %1557 = vmatprep.subr.bf16.mxu0 0
    %1558 = vmatpush1.bf16.msra.mxu0 0
    %1559 = vmatprep.subr.bf16.mxu0 0
    %1560 = vmatpush1.bf16.msra.mxu0 0
    %1561 = vmatprep.mubr.bf16.mxu0 0
    %1562 = vmatmul.mubr.bf16.gmra.mrb[0].mxu0 %v1460
    %v1563 = vpop.f32.mrb[0].mxu0
    %v1564 = vadd.f32 %v1480, %v1563
    %v1565 = vpop.f32.mrb[0].mxu0
    %v1566 = vpop.f32.mrb[0].mxu0
    %v1567 = vadd.f32 %v1480, %v1566
    %v1568 = vpop.f32.mrb[0].mxu0
    %1569 = vdwg.mxu0
    %v1570 = vadd.f32 %v1335, %v1564
    %v1571 = vadd.f32 %v1336, %v1567
    %s1572 = scalar_lea.vmem %s2, 8
    %v1573 = vld [vmem:[%s1572] sm:$0x3f]
    %s1574 = scalar_lea.vmem %s3, 1
    %v1575 = vld [vmem:[%s1574] sm:$0x1]
    %v1576 = vsel %vm136, %v1570, 0.0
    %1577 = vadd.xlane.f32.xlu0 %v1576
    %v1578 = vpop.xlane.xlu0 %1577
    %v1579 = vsel %vm136, %v1571, 0.0
    %1580 = vadd.xlane.f32.xlu0 %v1579
    %v1581 = vpop.xlane.xlu0 %1580
    %v1582 = vmul.f32 %v1578, %v143
    %v1583 = vmul.f32 %v1581, %v143
    %v1584 = vsub.f32 %v1570, %v1582
    %v1585 = vsub.f32 %v1571, %v1583
    %v1586 = vmul.f32 %v1584, %v1584
    %v1587 = vmul.f32 %v1585, %v1585
    %v1588 = vsel %vm136, %v1586, 0.0
    %1589 = vadd.xlane.f32.xlu0 %v1588
    %v1590 = vpop.xlane.xlu0 %1589
    %v1591 = vsel %vm136, %v1587, 0.0
    %1592 = vadd.xlane.f32.xlu0 %v1591
    %v1593 = vpop.xlane.xlu0 %1592
    %v1594 = vmul.f32 %v1590, %v143
    %v1595 = vmul.f32 %v1593, %v143
    %v1596 = vadd.f32 %v1594, 1e-05
    %v1597 = vadd.f32 %v1595, 1e-05
    %v1598 = vrsqrt.pop %v1596
    %v1599 = vrsqrt.pop %v1597
    %v1600 = vmul.f32 %v1584, %v1598
    %v1601 = vmul.f32 %v1585, %v1599
    %v1602 = vlaneseq
    %v1603 = vshrl.u32 %v1602, 7
    %v1604 = vsub.s32 0, %v1603
    %v1605 = vrot.slane %v1573, %v1604
    %v1606 = vmul.f32 %v1600, %v1605
    %v1607 = vmul.f32 %v1601, %v1605
    %v1608 = vlaneseq
    %v1609 = vshrl.u32 %v1608, 7
    %v1610 = vsub.s32 1, %v1609
    %v1611 = vrot.slane %v1573, %v1610
    %v1612 = vadd.f32 %v1606, %v1611
    %v1613 = vadd.f32 %v1607, %v1611
    %v1614 = vpack.c.bf16 %v1613, %v1612
    %s1615 = scalar_lea.vmem %s4, 48
    %v1616 = vld [vmem:[%s1615] sm:$0xff]
    %v1617 = vld [vmem:[%s1615 + $0x8] sm:$0xf]
    %v1618 = vld [vmem:[%s1615 + $0xc] sm:$0xff]
    %v1619 = vld [vmem:[%s1615 + $0x14] sm:$0xf]
    %v1620 = vld [vmem:[%s1615 + $0x18] sm:$0xff]
    %v1621 = vld [vmem:[%s1615 + $0x20] sm:$0xf]
    %v1622 = vld [vmem:[%s1615 + $0x24] sm:$0xff]
    %v1623 = vld [vmem:[%s1615 + $0x2c] sm:$0xf]
    %v1632 = vunpack.c.l.b16 %v1616
    %v1633 = vunpack.c.h.b16 %v1616
    %v1634 = vunpack.c.l.b16 %v1617
    %v1635 = vunpack.c.l.b16 %v1618
    %v1636 = vunpack.c.h.b16 %v1618
    %v1637 = vunpack.c.l.b16 %v1619
    %v1638 = vunpack.c.l.b16 %v1620
    %v1639 = vunpack.c.h.b16 %v1620
    %v1640 = vunpack.c.l.b16 %v1621
    %v1641 = vunpack.c.l.b16 %v1622
    %v1642 = vunpack.c.h.b16 %v1622
    %v1643 = vunpack.c.l.b16 %v1623
    %v1644 = vpack.c.b16 %v1635, %v1632
    %v1645 = vpack.c.b16 %v1636, %v1633
    %v1646 = vpack.c.b16 %v1637, %v1634
    %v1647 = vpack.c.b16 %v1641, %v1638
    %v1648 = vpack.c.b16 %v1642, %v1639
    %v1649 = vpack.c.b16 %v1643, %v1640
    %v1657 = vsel %vm136, %v1614, 0
    %1659 = vmatprep.subr.bf16.mxu0 %v1645
    %1660 = vmatpush1.bf16.msra.mxu0 %v1644
    %1661 = vmatprep.subr.bf16.mxu0 %v1648
    %1662 = vmatpush1.bf16.msra.mxu0 %v1647
    %1663 = vmatprep.subr.bf16.mxu0 0
    %1664 = vmatpush1.bf16.msra.mxu0 0
    %1665 = vmatprep.subr.bf16.mxu0 0
    %1666 = vmatpush1.bf16.msra.mxu0 0
    %1667 = vmatprep.subr.bf16.mxu0 0
    %1668 = vmatpush1.bf16.msra.mxu0 0
    %1669 = vmatprep.subr.bf16.mxu0 0
    %1670 = vmatpush1.bf16.msra.mxu0 0
    %1671 = vmatprep.subr.bf16.mxu0 0
    %1672 = vmatpush1.bf16.msra.mxu0 0
    %1673 = vmatprep.subr.bf16.mxu0 0
    %1674 = vmatpush1.bf16.msra.mxu0 0
    %1675 = vmatprep.subr.bf16.mxu0 0
    %1676 = vmatpush1.bf16.msra.mxu0 0
    %1677 = vmatprep.subr.bf16.mxu0 0
    %1678 = vmatpush1.bf16.msra.mxu0 0
    %1679 = vmatprep.subr.bf16.mxu0 0
    %1680 = vmatpush1.bf16.msra.mxu0 0
    %1681 = vmatprep.subr.bf16.mxu0 0
    %1682 = vmatpush1.bf16.msra.mxu0 0
    %1683 = vmatprep.subr.bf16.mxu0 0
    %1684 = vmatpush1.bf16.msra.mxu0 0
    %1685 = vmatprep.subr.bf16.mxu0 0
    %1686 = vmatpush1.bf16.msra.mxu0 0
    %1687 = vmatprep.subr.bf16.mxu0 0
    %1688 = vmatpush1.bf16.msra.mxu0 0
    %1689 = vmatprep.subr.bf16.mxu0 0
    %1690 = vmatpush1.bf16.msra.mxu0 0
    %1691 = vmatprep.mubr.bf16.mxu0 0
    %1692 = vmatmul.mubr.bf16.gmra.mrb[0].mxu0 %v1657
    %v1693 = vpop.f32.mrb[0].mxu0
    %v1694 = vadd.f32 0.0, %v1693
    %v1695 = vpop.f32.mrb[0].mxu0
    %v1696 = vadd.f32 0.0, %v1695
    %v1697 = vpop.f32.mrb[0].mxu0
    %v1698 = vadd.f32 0.0, %v1697
    %v1699 = vpop.f32.mrb[0].mxu0
    %v1700 = vadd.f32 0.0, %v1699
    %1701 = vdwg.mxu0
    %1702 = vmatprep.subr.bf16.mxu0 0
    %1703 = vmatpush1.bf16.msra.mxu0 %v1646
    %1704 = vmatprep.subr.bf16.mxu0 0
    %1705 = vmatpush1.bf16.msra.mxu0 %v1649
    %1706 = vmatprep.subr.bf16.mxu0 0
    %1707 = vmatpush1.bf16.msra.mxu0 0
    %1708 = vmatprep.subr.bf16.mxu0 0
    %1709 = vmatpush1.bf16.msra.mxu0 0
    %1710 = vmatprep.subr.bf16.mxu0 0
    %1711 = vmatpush1.bf16.msra.mxu0 0
    %1712 = vmatprep.subr.bf16.mxu0 0
    %1713 = vmatpush1.bf16.msra.mxu0 0
    %1714 = vmatprep.subr.bf16.mxu0 0
    %1715 = vmatpush1.bf16.msra.mxu0 0
    %1716 = vmatprep.subr.bf16.mxu0 0
    %1717 = vmatpush1.bf16.msra.mxu0 0
    %1718 = vmatprep.subr.bf16.mxu0 0
    %1719 = vmatpush1.bf16.msra.mxu0 0
    %1720 = vmatprep.subr.bf16.mxu0 0
    %1721 = vmatpush1.bf16.msra.mxu0 0
    %1722 = vmatprep.subr.bf16.mxu0 0
    %1723 = vmatpush1.bf16.msra.mxu0 0
    %1724 = vmatprep.subr.bf16.mxu0 0
    %1725 = vmatpush1.bf16.msra.mxu0 0
    %1726 = vmatprep.subr.bf16.mxu0 0
    %1727 = vmatpush1.bf16.msra.mxu0 0
    %1728 = vmatprep.subr.bf16.mxu0 0
    %1729 = vmatpush1.bf16.msra.mxu0 0
    %1730 = vmatprep.subr.bf16.mxu0 0
    %1731 = vmatpush1.bf16.msra.mxu0 0
    %1732 = vmatprep.subr.bf16.mxu0 0
    %1733 = vmatpush1.bf16.msra.mxu0 0
    %1734 = vmatprep.mubr.bf16.mxu0 0
    %1735 = vmatmul.mubr.bf16.gmra.mrb[0].mxu0 %v1657
    %v1736 = vpop.f32.mrb[0].mxu0
    %v1737 = vadd.f32 0.0, %v1736
    %v1738 = vpop.f32.mrb[0].mxu0
    %v1739 = vpop.f32.mrb[0].mxu0
    %v1740 = vadd.f32 0.0, %v1739
    %v1741 = vpop.f32.mrb[0].mxu0
    %1742 = vdwg.mxu0
    %v1743 = vpack.c.bf16 %v1694, %v1694
    %v1744 = vpack.c.bf16 %v1698, %v1698
    %v1745 = vpack.c.bf16 %v1696, %v1696
    %v1746 = vpack.c.bf16 %v1700, %v1700
    %v1748 = vsel %vm136, %v1743, 0
    %v1751 = vsel %vm136, %v1745, 0
    %1753 = vmatprep.subr.bf16.mxu0 0
    %1754 = vmatpush1.bf16.xpose.msra.mxu0 %v1751
    %1755 = vmatprep.subr.bf16.mxu0 0
    %1756 = vmatpush1.bf16.xpose.msra.mxu0 0
    %1757 = vmatprep.subr.bf16.mxu0 0
    %1758 = vmatpush1.bf16.xpose.msra.mxu0 0
    %1759 = vmatprep.subr.bf16.mxu0 0
    %1760 = vmatpush1.bf16.xpose.msra.mxu0 0
    %1761 = vmatprep.subr.bf16.mxu0 0
    %1762 = vmatpush1.bf16.xpose.msra.mxu0 0
    %1763 = vmatprep.subr.bf16.mxu0 0
    %1764 = vmatpush1.bf16.xpose.msra.mxu0 0
    %1765 = vmatprep.subr.bf16.mxu0 0
    %1766 = vmatpush1.bf16.xpose.msra.mxu0 0
    %1767 = vmatprep.subr.bf16.mxu0 0
    %1768 = vmatpush1.bf16.xpose.msra.mxu0 0
    %1769 = vmatprep.subr.bf16.mxu0 0
    %1770 = vmatpush1.bf16.xpose.msra.mxu0 0
    %1771 = vmatprep.subr.bf16.mxu0 0
    %1772 = vmatpush1.bf16.xpose.msra.mxu0 0
    %1773 = vmatprep.subr.bf16.mxu0 0
    %1774 = vmatpush1.bf16.xpose.msra.mxu0 0
    %1775 = vmatprep.subr.bf16.mxu0 0
    %1776 = vmatpush1.bf16.xpose.msra.mxu0 0
    %1777 = vmatprep.subr.bf16.mxu0 0
    %1778 = vmatpush1.bf16.xpose.msra.mxu0 0
    %1779 = vmatprep.subr.bf16.mxu0 0
    %1780 = vmatpush1.bf16.xpose.msra.mxu0 0
    %1781 = vmatprep.subr.bf16.mxu0 0
    %1782 = vmatpush1.bf16.xpose.msra.mxu0 0
    %1783 = vmatprep.subr.bf16.mxu0 0
    %1784 = vmatpush1.bf16.xpose.msra.mxu0 0
    %1785 = vmatprep.mubr.bf16.mxu0 0
    %1786 = vmatmul.mubr.bf16.gmra.mrb[0].mxu0 %v1748
    %v1787 = vpop.f32.mrb[0].mxu0
    %v1788 = vadd.f32 0.0, %v1787
    %v1789 = vpop.f32.mrb[0].mxu0
    %v1790 = vpop.f32.mrb[0].mxu0
    %v1791 = vpop.f32.mrb[0].mxu0
    %1792 = vdwg.mxu0
    %v1794 = vsel %vm136, %v1744, 0
    %v1797 = vsel %vm136, %v1746, 0
    %1799 = vmatprep.subr.bf16.mxu0 0
    %1800 = vmatpush1.bf16.xpose.msra.mxu0 %v1797
    %1801 = vmatprep.subr.bf16.mxu0 0
    %1802 = vmatpush1.bf16.xpose.msra.mxu0 0
    %1803 = vmatprep.subr.bf16.mxu0 0
    %1804 = vmatpush1.bf16.xpose.msra.mxu0 0
    %1805 = vmatprep.subr.bf16.mxu0 0
    %1806 = vmatpush1.bf16.xpose.msra.mxu0 0
    %1807 = vmatprep.subr.bf16.mxu0 0
    %1808 = vmatpush1.bf16.xpose.msra.mxu0 0
    %1809 = vmatprep.subr.bf16.mxu0 0
    %1810 = vmatpush1.bf16.xpose.msra.mxu0 0
    %1811 = vmatprep.subr.bf16.mxu0 0
    %1812 = vmatpush1.bf16.xpose.msra.mxu0 0
    %1813 = vmatprep.subr.bf16.mxu0 0
    %1814 = vmatpush1.bf16.xpose.msra.mxu0 0
    %1815 = vmatprep.subr.bf16.mxu0 0
    %1816 = vmatpush1.bf16.xpose.msra.mxu0 0
    %1817 = vmatprep.subr.bf16.mxu0 0
    %1818 = vmatpush1.bf16.xpose.msra.mxu0 0
    %1819 = vmatprep.subr.bf16.mxu0 0
    %1820 = vmatpush1.bf16.xpose.msra.mxu0 0
    %1821 = vmatprep.subr.bf16.mxu0 0
    %1822 = vmatpush1.bf16.xpose.msra.mxu0 0
    %1823 = vmatprep.subr.bf16.mxu0 0
    %1824 = vmatpush1.bf16.xpose.msra.mxu0 0
    %1825 = vmatprep.subr.bf16.mxu0 0
    %1826 = vmatpush1.bf16.xpose.msra.mxu0 0
    %1827 = vmatprep.subr.bf16.mxu0 0
    %1828 = vmatpush1.bf16.xpose.msra.mxu0 0
    %1829 = vmatprep.subr.bf16.mxu0 0
    %1830 = vmatpush1.bf16.xpose.msra.mxu0 0
    %1831 = vmatprep.mubr.bf16.mxu0 0
    %1832 = vmatmul.mubr.bf16.gmra.mrb[0].mxu0 %v1794
    %v1833 = vpop.f32.mrb[0].mxu0
    %v1834 = vadd.f32 0.0, %v1833
    %v1835 = vpop.f32.mrb[0].mxu0
    %v1836 = vpop.f32.mrb[0].mxu0
    %v1837 = vpop.f32.mrb[0].mxu0
    %1838 = vdwg.mxu0
    %v1839 = vmul.f32 %v1788, 0.17677669
    %v1840 = vmul.f32 %v1834, 0.17677669
    %v1841 = vsel %vm402, %v1839, -inf
    %1842 = vmax.xlane.f32.xlu0 %v1841
    %v1843 = vpop.xlane.xlu0 %1842
    %v1844 = vsel %vm402, %v1840, -inf
    %1845 = vmax.xlane.f32.xlu0 %v1844
    %v1846 = vpop.xlane.xlu0 %1845
    %v1847 = vsub.f32 %v1839, %v1843
    %v1848 = vsub.f32 %v1840, %v1846
    %v1849 = vmul.f32 %v1847, 1.442695
    %v1850 = vpow.pop %v1849
    %v1851 = vmul.f32 %v1848, 1.442695
    %v1852 = vpow.pop %v1851
    %v1853 = vsel %vm402, %v1850, 0.0
    %1854 = vadd.xlane.f32.xlu0 %v1853
    %v1855 = vpop.xlane.xlu0 %1854
    %v1856 = vsel %vm402, %v1852, 0.0
    %1857 = vadd.xlane.f32.xlu0 %v1856
    %v1858 = vpop.xlane.xlu0 %1857
    %v1859 = vrcp.pop %v1855
    %v1860 = vrcp.pop %v1858
    %v1861 = vmul.f32 %v1850, %v1859
    %v1862 = vmul.f32 %v1852, %v1860
    %v1863 = vpack.c.bf16 %v1861, %v1861
    %v1864 = vpack.c.bf16 %v1862, %v1862
    %v1865 = vpack.c.bf16 %v1737, %v1737
    %v1866 = vpack.c.bf16 %v1740, %v1740
    %v1868 = vsel %vm402, %v1863, 0
    %v1871 = vsel %vm432, %v1865, 0
    %1873 = vmatprep.subr.bf16.mxu0 0
    %1874 = vmatpush1.bf16.msra.mxu0 %v1871
    %1875 = vmatprep.subr.bf16.mxu0 0
    %1876 = vmatpush1.bf16.msra.mxu0 0
    %1877 = vmatprep.subr.bf16.mxu0 0
    %1878 = vmatpush1.bf16.msra.mxu0 0
    %1879 = vmatprep.subr.bf16.mxu0 0
    %1880 = vmatpush1.bf16.msra.mxu0 0
    %1881 = vmatprep.subr.bf16.mxu0 0
    %1882 = vmatpush1.bf16.msra.mxu0 0
    %1883 = vmatprep.subr.bf16.mxu0 0
    %1884 = vmatpush1.bf16.msra.mxu0 0
    %1885 = vmatprep.subr.bf16.mxu0 0
    %1886 = vmatpush1.bf16.msra.mxu0 0
    %1887 = vmatprep.subr.bf16.mxu0 0
    %1888 = vmatpush1.bf16.msra.mxu0 0
    %1889 = vmatprep.subr.bf16.mxu0 0
    %1890 = vmatpush1.bf16.msra.mxu0 0
    %1891 = vmatprep.subr.bf16.mxu0 0
    %1892 = vmatpush1.bf16.msra.mxu0 0
    %1893 = vmatprep.subr.bf16.mxu0 0
    %1894 = vmatpush1.bf16.msra.mxu0 0
    %1895 = vmatprep.subr.bf16.mxu0 0
    %1896 = vmatpush1.bf16.msra.mxu0 0
    %1897 = vmatprep.subr.bf16.mxu0 0
    %1898 = vmatpush1.bf16.msra.mxu0 0
    %1899 = vmatprep.subr.bf16.mxu0 0
    %1900 = vmatpush1.bf16.msra.mxu0 0
    %1901 = vmatprep.subr.bf16.mxu0 0
    %1902 = vmatpush1.bf16.msra.mxu0 0
    %1903 = vmatprep.subr.bf16.mxu0 0
    %1904 = vmatpush1.bf16.msra.mxu0 0
    %1905 = vmatprep.mubr.bf16.mxu0 0
    %1906 = vmatmul.mubr.bf16.gmra.mrb[0].mxu0 %v1868
    %v1907 = vpop.f32.mrb[0].mxu0
    %v1908 = vadd.f32 0.0, %v1907
    %v1909 = vpop.f32.mrb[0].mxu0
    %v1910 = vpop.f32.mrb[0].mxu0
    %v1911 = vpop.f32.mrb[0].mxu0
    %1912 = vdwg.mxu0
    %v1914 = vsel %vm402, %v1864, 0
    %v1917 = vsel %vm432, %v1866, 0
    %1919 = vmatprep.subr.bf16.mxu0 0
    %1920 = vmatpush1.bf16.msra.mxu0 %v1917
    %1921 = vmatprep.subr.bf16.mxu0 0
    %1922 = vmatpush1.bf16.msra.mxu0 0
    %1923 = vmatprep.subr.bf16.mxu0 0
    %1924 = vmatpush1.bf16.msra.mxu0 0
    %1925 = vmatprep.subr.bf16.mxu0 0
    %1926 = vmatpush1.bf16.msra.mxu0 0
    %1927 = vmatprep.subr.bf16.mxu0 0
    %1928 = vmatpush1.bf16.msra.mxu0 0
    %1929 = vmatprep.subr.bf16.mxu0 0
    %1930 = vmatpush1.bf16.msra.mxu0 0
    %1931 = vmatprep.subr.bf16.mxu0 0
    %1932 = vmatpush1.bf16.msra.mxu0 0
    %1933 = vmatprep.subr.bf16.mxu0 0
    %1934 = vmatpush1.bf16.msra.mxu0 0
    %1935 = vmatprep.subr.bf16.mxu0 0
    %1936 = vmatpush1.bf16.msra.mxu0 0
    %1937 = vmatprep.subr.bf16.mxu0 0
    %1938 = vmatpush1.bf16.msra.mxu0 0
    %1939 = vmatprep.subr.bf16.mxu0 0
    %1940 = vmatpush1.bf16.msra.mxu0 0
    %1941 = vmatprep.subr.bf16.mxu0 0
    %1942 = vmatpush1.bf16.msra.mxu0 0
    %1943 = vmatprep.subr.bf16.mxu0 0
    %1944 = vmatpush1.bf16.msra.mxu0 0
    %1945 = vmatprep.subr.bf16.mxu0 0
    %1946 = vmatpush1.bf16.msra.mxu0 0
    %1947 = vmatprep.subr.bf16.mxu0 0
    %1948 = vmatpush1.bf16.msra.mxu0 0
    %1949 = vmatprep.subr.bf16.mxu0 0
    %1950 = vmatpush1.bf16.msra.mxu0 0
    %1951 = vmatprep.mubr.bf16.mxu0 0
    %1952 = vmatmul.mubr.bf16.gmra.mrb[0].mxu0 %v1914
    %v1953 = vpop.f32.mrb[0].mxu0
    %v1954 = vadd.f32 0.0, %v1953
    %v1955 = vpop.f32.mrb[0].mxu0
    %v1956 = vpop.f32.mrb[0].mxu0
    %v1957 = vpop.f32.mrb[0].mxu0
    %1958 = vdwg.mxu0
    %1960 = vrot.lane.b32.xlu0 %v1743, 96
    %v1961 = vpop.permute.xlu0 %1960
    %1963 = vrot.lane.b32.xlu0 %v1745, 96
    %v1964 = vpop.permute.xlu0 %1963
    %v1966 = vsel %vm136, %v1961, 0
    %v1969 = vsel %vm136, %v1964, 0
    %1971 = vmatprep.subr.bf16.mxu0 0
    %1972 = vmatpush1.bf16.xpose.msra.mxu0 %v1969
    %1973 = vmatprep.subr.bf16.mxu0 0
    %1974 = vmatpush1.bf16.xpose.msra.mxu0 0
    %1975 = vmatprep.subr.bf16.mxu0 0
    %1976 = vmatpush1.bf16.xpose.msra.mxu0 0
    %1977 = vmatprep.subr.bf16.mxu0 0
    %1978 = vmatpush1.bf16.xpose.msra.mxu0 0
    %1979 = vmatprep.subr.bf16.mxu0 0
    %1980 = vmatpush1.bf16.xpose.msra.mxu0 0
    %1981 = vmatprep.subr.bf16.mxu0 0
    %1982 = vmatpush1.bf16.xpose.msra.mxu0 0
    %1983 = vmatprep.subr.bf16.mxu0 0
    %1984 = vmatpush1.bf16.xpose.msra.mxu0 0
    %1985 = vmatprep.subr.bf16.mxu0 0
    %1986 = vmatpush1.bf16.xpose.msra.mxu0 0
    %1987 = vmatprep.subr.bf16.mxu0 0
    %1988 = vmatpush1.bf16.xpose.msra.mxu0 0
    %1989 = vmatprep.subr.bf16.mxu0 0
    %1990 = vmatpush1.bf16.xpose.msra.mxu0 0
    %1991 = vmatprep.subr.bf16.mxu0 0
    %1992 = vmatpush1.bf16.xpose.msra.mxu0 0
    %1993 = vmatprep.subr.bf16.mxu0 0
    %1994 = vmatpush1.bf16.xpose.msra.mxu0 0
    %1995 = vmatprep.subr.bf16.mxu0 0
    %1996 = vmatpush1.bf16.xpose.msra.mxu0 0
    %1997 = vmatprep.subr.bf16.mxu0 0
    %1998 = vmatpush1.bf16.xpose.msra.mxu0 0
    %1999 = vmatprep.subr.bf16.mxu0 0
    %2000 = vmatpush1.bf16.xpose.msra.mxu0 0
    %2001 = vmatprep.subr.bf16.mxu0 0
    %2002 = vmatpush1.bf16.xpose.msra.mxu0 0
    %2003 = vmatprep.mubr.bf16.mxu0 0
    %2004 = vmatmul.mubr.bf16.gmra.mrb[0].mxu0 %v1966
    %v2005 = vpop.f32.mrb[0].mxu0
    %v2006 = vadd.f32 0.0, %v2005
    %v2007 = vpop.f32.mrb[0].mxu0
    %v2008 = vpop.f32.mrb[0].mxu0
    %v2009 = vpop.f32.mrb[0].mxu0
    %2010 = vdwg.mxu0
    %2012 = vrot.lane.b32.xlu0 %v1744, 96
    %v2013 = vpop.permute.xlu0 %2012
    %2015 = vrot.lane.b32.xlu0 %v1746, 96
    %v2016 = vpop.permute.xlu0 %2015
    %v2018 = vsel %vm136, %v2013, 0
    %v2021 = vsel %vm136, %v2016, 0
    %2023 = vmatprep.subr.bf16.mxu0 0
    %2024 = vmatpush1.bf16.xpose.msra.mxu0 %v2021
    %2025 = vmatprep.subr.bf16.mxu0 0
    %2026 = vmatpush1.bf16.xpose.msra.mxu0 0
    %2027 = vmatprep.subr.bf16.mxu0 0
    %2028 = vmatpush1.bf16.xpose.msra.mxu0 0
    %2029 = vmatprep.subr.bf16.mxu0 0
    %2030 = vmatpush1.bf16.xpose.msra.mxu0 0
    %2031 = vmatprep.subr.bf16.mxu0 0
    %2032 = vmatpush1.bf16.xpose.msra.mxu0 0
    %2033 = vmatprep.subr.bf16.mxu0 0
    %2034 = vmatpush1.bf16.xpose.msra.mxu0 0
    %2035 = vmatprep.subr.bf16.mxu0 0
    %2036 = vmatpush1.bf16.xpose.msra.mxu0 0
    %2037 = vmatprep.subr.bf16.mxu0 0
    %2038 = vmatpush1.bf16.xpose.msra.mxu0 0
    %2039 = vmatprep.subr.bf16.mxu0 0
    %2040 = vmatpush1.bf16.xpose.msra.mxu0 0
    %2041 = vmatprep.subr.bf16.mxu0 0
    %2042 = vmatpush1.bf16.xpose.msra.mxu0 0
    %2043 = vmatprep.subr.bf16.mxu0 0
    %2044 = vmatpush1.bf16.xpose.msra.mxu0 0
    %2045 = vmatprep.subr.bf16.mxu0 0
    %2046 = vmatpush1.bf16.xpose.msra.mxu0 0
    %2047 = vmatprep.subr.bf16.mxu0 0
    %2048 = vmatpush1.bf16.xpose.msra.mxu0 0
    %2049 = vmatprep.subr.bf16.mxu0 0
    %2050 = vmatpush1.bf16.xpose.msra.mxu0 0
    %2051 = vmatprep.subr.bf16.mxu0 0
    %2052 = vmatpush1.bf16.xpose.msra.mxu0 0
    %2053 = vmatprep.subr.bf16.mxu0 0
    %2054 = vmatpush1.bf16.xpose.msra.mxu0 0
    %2055 = vmatprep.mubr.bf16.mxu0 0
    %2056 = vmatmul.mubr.bf16.gmra.mrb[0].mxu0 %v2018
    %v2057 = vpop.f32.mrb[0].mxu0
    %v2058 = vadd.f32 0.0, %v2057
    %v2059 = vpop.f32.mrb[0].mxu0
    %v2060 = vpop.f32.mrb[0].mxu0
    %v2061 = vpop.f32.mrb[0].mxu0
    %2062 = vdwg.mxu0
    %v2063 = vmul.f32 %v2006, 0.17677669
    %v2064 = vmul.f32 %v2058, 0.17677669
    %v2065 = vsel %vm402, %v2063, -inf
    %2066 = vmax.xlane.f32.xlu0 %v2065
    %v2067 = vpop.xlane.xlu0 %2066
    %v2068 = vsel %vm402, %v2064, -inf
    %2069 = vmax.xlane.f32.xlu0 %v2068
    %v2070 = vpop.xlane.xlu0 %2069
    %v2071 = vsub.f32 %v2063, %v2067
    %v2072 = vsub.f32 %v2064, %v2070
    %v2073 = vmul.f32 %v2071, 1.442695
    %v2074 = vpow.pop %v2073
    %v2075 = vmul.f32 %v2072, 1.442695
    %v2076 = vpow.pop %v2075
    %v2077 = vsel %vm402, %v2074, 0.0
    %2078 = vadd.xlane.f32.xlu0 %v2077
    %v2079 = vpop.xlane.xlu0 %2078
    %v2080 = vsel %vm402, %v2076, 0.0
    %2081 = vadd.xlane.f32.xlu0 %v2080
    %v2082 = vpop.xlane.xlu0 %2081
    %v2083 = vrcp.pop %v2079
    %v2084 = vrcp.pop %v2082
    %v2085 = vmul.f32 %v2074, %v2083
    %v2086 = vmul.f32 %v2076, %v2084
    %v2087 = vpack.c.bf16 %v2085, %v2085
    %v2088 = vpack.c.bf16 %v2086, %v2086
    %2090 = vrot.lane.b32.xlu0 %v1865, 96
    %v2091 = vpop.permute.xlu0 %2090
    %v2093 = vsel %vm402, %v2087, 0
    %v2096 = vsel %vm432, %v2091, 0
    %2098 = vmatprep.subr.bf16.mxu0 0
    %2099 = vmatpush1.bf16.msra.mxu0 %v2096
    %2100 = vmatprep.subr.bf16.mxu0 0
    %2101 = vmatpush1.bf16.msra.mxu0 0
    %2102 = vmatprep.subr.bf16.mxu0 0
    %2103 = vmatpush1.bf16.msra.mxu0 0
    %2104 = vmatprep.subr.bf16.mxu0 0
    %2105 = vmatpush1.bf16.msra.mxu0 0
    %2106 = vmatprep.subr.bf16.mxu0 0
    %2107 = vmatpush1.bf16.msra.mxu0 0
    %2108 = vmatprep.subr.bf16.mxu0 0
    %2109 = vmatpush1.bf16.msra.mxu0 0
    %2110 = vmatprep.subr.bf16.mxu0 0
    %2111 = vmatpush1.bf16.msra.mxu0 0
    %2112 = vmatprep.subr.bf16.mxu0 0
    %2113 = vmatpush1.bf16.msra.mxu0 0
    %2114 = vmatprep.subr.bf16.mxu0 0
    %2115 = vmatpush1.bf16.msra.mxu0 0
    %2116 = vmatprep.subr.bf16.mxu0 0
    %2117 = vmatpush1.bf16.msra.mxu0 0
    %2118 = vmatprep.subr.bf16.mxu0 0
    %2119 = vmatpush1.bf16.msra.mxu0 0
    %2120 = vmatprep.subr.bf16.mxu0 0
    %2121 = vmatpush1.bf16.msra.mxu0 0
    %2122 = vmatprep.subr.bf16.mxu0 0
    %2123 = vmatpush1.bf16.msra.mxu0 0
    %2124 = vmatprep.subr.bf16.mxu0 0
    %2125 = vmatpush1.bf16.msra.mxu0 0
    %2126 = vmatprep.subr.bf16.mxu0 0
    %2127 = vmatpush1.bf16.msra.mxu0 0
    %2128 = vmatprep.subr.bf16.mxu0 0
    %2129 = vmatpush1.bf16.msra.mxu0 0
    %2130 = vmatprep.mubr.bf16.mxu0 0
    %2131 = vmatmul.mubr.bf16.gmra.mrb[0].mxu0 %v2093
    %v2132 = vpop.f32.mrb[0].mxu0
    %v2133 = vadd.f32 0.0, %v2132
    %v2134 = vpop.f32.mrb[0].mxu0
    %v2135 = vpop.f32.mrb[0].mxu0
    %v2136 = vpop.f32.mrb[0].mxu0
    %2137 = vdwg.mxu0
    %2139 = vrot.lane.b32.xlu0 %v1866, 96
    %v2140 = vpop.permute.xlu0 %2139
    %v2142 = vsel %vm402, %v2088, 0
    %v2145 = vsel %vm432, %v2140, 0
    %2147 = vmatprep.subr.bf16.mxu0 0
    %2148 = vmatpush1.bf16.msra.mxu0 %v2145
    %2149 = vmatprep.subr.bf16.mxu0 0
    %2150 = vmatpush1.bf16.msra.mxu0 0
    %2151 = vmatprep.subr.bf16.mxu0 0
    %2152 = vmatpush1.bf16.msra.mxu0 0
    %2153 = vmatprep.subr.bf16.mxu0 0
    %2154 = vmatpush1.bf16.msra.mxu0 0
    %2155 = vmatprep.subr.bf16.mxu0 0
    %2156 = vmatpush1.bf16.msra.mxu0 0
    %2157 = vmatprep.subr.bf16.mxu0 0
    %2158 = vmatpush1.bf16.msra.mxu0 0
    %2159 = vmatprep.subr.bf16.mxu0 0
    %2160 = vmatpush1.bf16.msra.mxu0 0
    %2161 = vmatprep.subr.bf16.mxu0 0
    %2162 = vmatpush1.bf16.msra.mxu0 0
    %2163 = vmatprep.subr.bf16.mxu0 0
    %2164 = vmatpush1.bf16.msra.mxu0 0
    %2165 = vmatprep.subr.bf16.mxu0 0
    %2166 = vmatpush1.bf16.msra.mxu0 0
    %2167 = vmatprep.subr.bf16.mxu0 0
    %2168 = vmatpush1.bf16.msra.mxu0 0
    %2169 = vmatprep.subr.bf16.mxu0 0
    %2170 = vmatpush1.bf16.msra.mxu0 0
    %2171 = vmatprep.subr.bf16.mxu0 0
    %2172 = vmatpush1.bf16.msra.mxu0 0
    %2173 = vmatprep.subr.bf16.mxu0 0
    %2174 = vmatpush1.bf16.msra.mxu0 0
    %2175 = vmatprep.subr.bf16.mxu0 0
    %2176 = vmatpush1.bf16.msra.mxu0 0
    %2177 = vmatprep.subr.bf16.mxu0 0
    %2178 = vmatpush1.bf16.msra.mxu0 0
    %2179 = vmatprep.mubr.bf16.mxu0 0
    %2180 = vmatmul.mubr.bf16.gmra.mrb[0].mxu0 %v2142
    %v2181 = vpop.f32.mrb[0].mxu0
    %v2182 = vadd.f32 0.0, %v2181
    %v2183 = vpop.f32.mrb[0].mxu0
    %v2184 = vpop.f32.mrb[0].mxu0
    %v2185 = vpop.f32.mrb[0].mxu0
    %2186 = vdwg.mxu0
    %2187 = vrot.lane.b32.xlu0 %v1743, 64
    %v2188 = vpop.permute.xlu0 %2187
    %2189 = vrot.lane.b32.xlu0 %v1745, 64
    %v2190 = vpop.permute.xlu0 %2189
    %v2192 = vsel %vm136, %v2188, 0
    %v2195 = vsel %vm136, %v2190, 0
    %2197 = vmatprep.subr.bf16.mxu0 0
    %2198 = vmatpush1.bf16.xpose.msra.mxu0 %v2195
    %2199 = vmatprep.subr.bf16.mxu0 0
    %2200 = vmatpush1.bf16.xpose.msra.mxu0 0
    %2201 = vmatprep.subr.bf16.mxu0 0
    %2202 = vmatpush1.bf16.xpose.msra.mxu0 0
    %2203 = vmatprep.subr.bf16.mxu0 0
    %2204 = vmatpush1.bf16.xpose.msra.mxu0 0
    %2205 = vmatprep.subr.bf16.mxu0 0
    %2206 = vmatpush1.bf16.xpose.msra.mxu0 0
    %2207 = vmatprep.subr.bf16.mxu0 0
    %2208 = vmatpush1.bf16.xpose.msra.mxu0 0
    %2209 = vmatprep.subr.bf16.mxu0 0
    %2210 = vmatpush1.bf16.xpose.msra.mxu0 0
    %2211 = vmatprep.subr.bf16.mxu0 0
    %2212 = vmatpush1.bf16.xpose.msra.mxu0 0
    %2213 = vmatprep.subr.bf16.mxu0 0
    %2214 = vmatpush1.bf16.xpose.msra.mxu0 0
    %2215 = vmatprep.subr.bf16.mxu0 0
    %2216 = vmatpush1.bf16.xpose.msra.mxu0 0
    %2217 = vmatprep.subr.bf16.mxu0 0
    %2218 = vmatpush1.bf16.xpose.msra.mxu0 0
    %2219 = vmatprep.subr.bf16.mxu0 0
    %2220 = vmatpush1.bf16.xpose.msra.mxu0 0
    %2221 = vmatprep.subr.bf16.mxu0 0
    %2222 = vmatpush1.bf16.xpose.msra.mxu0 0
    %2223 = vmatprep.subr.bf16.mxu0 0
    %2224 = vmatpush1.bf16.xpose.msra.mxu0 0
    %2225 = vmatprep.subr.bf16.mxu0 0
    %2226 = vmatpush1.bf16.xpose.msra.mxu0 0
    %2227 = vmatprep.subr.bf16.mxu0 0
    %2228 = vmatpush1.bf16.xpose.msra.mxu0 0
    %2229 = vmatprep.mubr.bf16.mxu0 0
    %2230 = vmatmul.mubr.bf16.gmra.mrb[0].mxu0 %v2192
    %v2231 = vpop.f32.mrb[0].mxu0
    %v2232 = vadd.f32 0.0, %v2231
    %v2233 = vpop.f32.mrb[0].mxu0
    %v2234 = vpop.f32.mrb[0].mxu0
    %v2235 = vpop.f32.mrb[0].mxu0
    %2236 = vdwg.mxu0
    %2237 = vrot.lane.b32.xlu0 %v1744, 64
    %v2238 = vpop.permute.xlu0 %2237
    %2239 = vrot.lane.b32.xlu0 %v1746, 64
    %v2240 = vpop.permute.xlu0 %2239
    %v2242 = vsel %vm136, %v2238, 0
    %v2245 = vsel %vm136, %v2240, 0
    %2247 = vmatprep.subr.bf16.mxu0 0
    %2248 = vmatpush1.bf16.xpose.msra.mxu0 %v2245
    %2249 = vmatprep.subr.bf16.mxu0 0
    %2250 = vmatpush1.bf16.xpose.msra.mxu0 0
    %2251 = vmatprep.subr.bf16.mxu0 0
    %2252 = vmatpush1.bf16.xpose.msra.mxu0 0
    %2253 = vmatprep.subr.bf16.mxu0 0
    %2254 = vmatpush1.bf16.xpose.msra.mxu0 0
    %2255 = vmatprep.subr.bf16.mxu0 0
    %2256 = vmatpush1.bf16.xpose.msra.mxu0 0
    %2257 = vmatprep.subr.bf16.mxu0 0
    %2258 = vmatpush1.bf16.xpose.msra.mxu0 0
    %2259 = vmatprep.subr.bf16.mxu0 0
    %2260 = vmatpush1.bf16.xpose.msra.mxu0 0
    %2261 = vmatprep.subr.bf16.mxu0 0
    %2262 = vmatpush1.bf16.xpose.msra.mxu0 0
    %2263 = vmatprep.subr.bf16.mxu0 0
    %2264 = vmatpush1.bf16.xpose.msra.mxu0 0
    %2265 = vmatprep.subr.bf16.mxu0 0
    %2266 = vmatpush1.bf16.xpose.msra.mxu0 0
    %2267 = vmatprep.subr.bf16.mxu0 0
    %2268 = vmatpush1.bf16.xpose.msra.mxu0 0
    %2269 = vmatprep.subr.bf16.mxu0 0
    %2270 = vmatpush1.bf16.xpose.msra.mxu0 0
    %2271 = vmatprep.subr.bf16.mxu0 0
    %2272 = vmatpush1.bf16.xpose.msra.mxu0 0
    %2273 = vmatprep.subr.bf16.mxu0 0
    %2274 = vmatpush1.bf16.xpose.msra.mxu0 0
    %2275 = vmatprep.subr.bf16.mxu0 0
    %2276 = vmatpush1.bf16.xpose.msra.mxu0 0
    %2277 = vmatprep.subr.bf16.mxu0 0
    %2278 = vmatpush1.bf16.xpose.msra.mxu0 0
    %2279 = vmatprep.mubr.bf16.mxu0 0
    %2280 = vmatmul.mubr.bf16.gmra.mrb[0].mxu0 %v2242
    %v2281 = vpop.f32.mrb[0].mxu0
    %v2282 = vadd.f32 0.0, %v2281
    %v2283 = vpop.f32.mrb[0].mxu0
    %v2284 = vpop.f32.mrb[0].mxu0
    %v2285 = vpop.f32.mrb[0].mxu0
    %2286 = vdwg.mxu0
    %v2287 = vmul.f32 %v2232, 0.17677669
    %v2288 = vmul.f32 %v2282, 0.17677669
    %v2289 = vsel %vm402, %v2287, -inf
    %2290 = vmax.xlane.f32.xlu0 %v2289
    %v2291 = vpop.xlane.xlu0 %2290
    %v2292 = vsel %vm402, %v2288, -inf
    %2293 = vmax.xlane.f32.xlu0 %v2292
    %v2294 = vpop.xlane.xlu0 %2293
    %v2295 = vsub.f32 %v2287, %v2291
    %v2296 = vsub.f32 %v2288, %v2294
    %v2297 = vmul.f32 %v2295, 1.442695
    %v2298 = vpow.pop %v2297
    %v2299 = vmul.f32 %v2296, 1.442695
    %v2300 = vpow.pop %v2299
    %v2301 = vsel %vm402, %v2298, 0.0
    %2302 = vadd.xlane.f32.xlu0 %v2301
    %v2303 = vpop.xlane.xlu0 %2302
    %v2304 = vsel %vm402, %v2300, 0.0
    %2305 = vadd.xlane.f32.xlu0 %v2304
    %v2306 = vpop.xlane.xlu0 %2305
    %v2307 = vrcp.pop %v2303
    %v2308 = vrcp.pop %v2306
    %v2309 = vmul.f32 %v2298, %v2307
    %v2310 = vmul.f32 %v2300, %v2308
    %v2311 = vpack.c.bf16 %v2309, %v2309
    %v2312 = vpack.c.bf16 %v2310, %v2310
    %2313 = vrot.lane.b32.xlu0 %v1865, 64
    %v2314 = vpop.permute.xlu0 %2313
    %v2316 = vsel %vm402, %v2311, 0
    %v2319 = vsel %vm432, %v2314, 0
    %2321 = vmatprep.subr.bf16.mxu0 0
    %2322 = vmatpush1.bf16.msra.mxu0 %v2319
    %2323 = vmatprep.subr.bf16.mxu0 0
    %2324 = vmatpush1.bf16.msra.mxu0 0
    %2325 = vmatprep.subr.bf16.mxu0 0
    %2326 = vmatpush1.bf16.msra.mxu0 0
    %2327 = vmatprep.subr.bf16.mxu0 0
    %2328 = vmatpush1.bf16.msra.mxu0 0
    %2329 = vmatprep.subr.bf16.mxu0 0
    %2330 = vmatpush1.bf16.msra.mxu0 0
    %2331 = vmatprep.subr.bf16.mxu0 0
    %2332 = vmatpush1.bf16.msra.mxu0 0
    %2333 = vmatprep.subr.bf16.mxu0 0
    %2334 = vmatpush1.bf16.msra.mxu0 0
    %2335 = vmatprep.subr.bf16.mxu0 0
    %2336 = vmatpush1.bf16.msra.mxu0 0
    %2337 = vmatprep.subr.bf16.mxu0 0
    %2338 = vmatpush1.bf16.msra.mxu0 0
    %2339 = vmatprep.subr.bf16.mxu0 0
    %2340 = vmatpush1.bf16.msra.mxu0 0
    %2341 = vmatprep.subr.bf16.mxu0 0
    %2342 = vmatpush1.bf16.msra.mxu0 0
    %2343 = vmatprep.subr.bf16.mxu0 0
    %2344 = vmatpush1.bf16.msra.mxu0 0
    %2345 = vmatprep.subr.bf16.mxu0 0
    %2346 = vmatpush1.bf16.msra.mxu0 0
    %2347 = vmatprep.subr.bf16.mxu0 0
    %2348 = vmatpush1.bf16.msra.mxu0 0
    %2349 = vmatprep.subr.bf16.mxu0 0
    %2350 = vmatpush1.bf16.msra.mxu0 0
    %2351 = vmatprep.subr.bf16.mxu0 0
    %2352 = vmatpush1.bf16.msra.mxu0 0
    %2353 = vmatprep.mubr.bf16.mxu0 0
    %2354 = vmatmul.mubr.bf16.gmra.mrb[0].mxu0 %v2316
    %v2355 = vpop.f32.mrb[0].mxu0
    %v2356 = vadd.f32 0.0, %v2355
    %v2357 = vpop.f32.mrb[0].mxu0
    %v2358 = vpop.f32.mrb[0].mxu0
    %v2359 = vpop.f32.mrb[0].mxu0
    %2360 = vdwg.mxu0
    %2361 = vrot.lane.b32.xlu0 %v1866, 64
    %v2362 = vpop.permute.xlu0 %2361
    %v2364 = vsel %vm402, %v2312, 0
    %v2367 = vsel %vm432, %v2362, 0
    %2369 = vmatprep.subr.bf16.mxu0 0
    %2370 = vmatpush1.bf16.msra.mxu0 %v2367
    %2371 = vmatprep.subr.bf16.mxu0 0
    %2372 = vmatpush1.bf16.msra.mxu0 0
    %2373 = vmatprep.subr.bf16.mxu0 0
    %2374 = vmatpush1.bf16.msra.mxu0 0
    %2375 = vmatprep.subr.bf16.mxu0 0
    %2376 = vmatpush1.bf16.msra.mxu0 0
    %2377 = vmatprep.subr.bf16.mxu0 0
    %2378 = vmatpush1.bf16.msra.mxu0 0
    %2379 = vmatprep.subr.bf16.mxu0 0
    %2380 = vmatpush1.bf16.msra.mxu0 0
    %2381 = vmatprep.subr.bf16.mxu0 0
    %2382 = vmatpush1.bf16.msra.mxu0 0
    %2383 = vmatprep.subr.bf16.mxu0 0
    %2384 = vmatpush1.bf16.msra.mxu0 0
    %2385 = vmatprep.subr.bf16.mxu0 0
    %2386 = vmatpush1.bf16.msra.mxu0 0
    %2387 = vmatprep.subr.bf16.mxu0 0
    %2388 = vmatpush1.bf16.msra.mxu0 0
    %2389 = vmatprep.subr.bf16.mxu0 0
    %2390 = vmatpush1.bf16.msra.mxu0 0
    %2391 = vmatprep.subr.bf16.mxu0 0
    %2392 = vmatpush1.bf16.msra.mxu0 0
    %2393 = vmatprep.subr.bf16.mxu0 0
    %2394 = vmatpush1.bf16.msra.mxu0 0
    %2395 = vmatprep.subr.bf16.mxu0 0
    %2396 = vmatpush1.bf16.msra.mxu0 0
    %2397 = vmatprep.subr.bf16.mxu0 0
    %2398 = vmatpush1.bf16.msra.mxu0 0
    %2399 = vmatprep.subr.bf16.mxu0 0
    %2400 = vmatpush1.bf16.msra.mxu0 0
    %2401 = vmatprep.mubr.bf16.mxu0 0
    %2402 = vmatmul.mubr.bf16.gmra.mrb[0].mxu0 %v2364
    %v2403 = vpop.f32.mrb[0].mxu0
    %v2404 = vadd.f32 0.0, %v2403
    %v2405 = vpop.f32.mrb[0].mxu0
    %v2406 = vpop.f32.mrb[0].mxu0
    %v2407 = vpop.f32.mrb[0].mxu0
    %2408 = vdwg.mxu0
    %2409 = vrot.lane.b32.xlu0 %v1743, 32
    %v2410 = vpop.permute.xlu0 %2409
    %2411 = vrot.lane.b32.xlu0 %v1745, 32
    %v2412 = vpop.permute.xlu0 %2411
    %v2414 = vsel %vm136, %v2410, 0
    %v2417 = vsel %vm136, %v2412, 0
    %2419 = vmatprep.subr.bf16.mxu0 0
    %2420 = vmatpush1.bf16.xpose.msra.mxu0 %v2417
    %2421 = vmatprep.subr.bf16.mxu0 0
    %2422 = vmatpush1.bf16.xpose.msra.mxu0 0
    %2423 = vmatprep.subr.bf16.mxu0 0
    %2424 = vmatpush1.bf16.xpose.msra.mxu0 0
    %2425 = vmatprep.subr.bf16.mxu0 0
    %2426 = vmatpush1.bf16.xpose.msra.mxu0 0
    %2427 = vmatprep.subr.bf16.mxu0 0
    %2428 = vmatpush1.bf16.xpose.msra.mxu0 0
    %2429 = vmatprep.subr.bf16.mxu0 0
    %2430 = vmatpush1.bf16.xpose.msra.mxu0 0
    %2431 = vmatprep.subr.bf16.mxu0 0
    %2432 = vmatpush1.bf16.xpose.msra.mxu0 0
    %2433 = vmatprep.subr.bf16.mxu0 0
    %2434 = vmatpush1.bf16.xpose.msra.mxu0 0
    %2435 = vmatprep.subr.bf16.mxu0 0
    %2436 = vmatpush1.bf16.xpose.msra.mxu0 0
    %2437 = vmatprep.subr.bf16.mxu0 0
    %2438 = vmatpush1.bf16.xpose.msra.mxu0 0
    %2439 = vmatprep.subr.bf16.mxu0 0
    %2440 = vmatpush1.bf16.xpose.msra.mxu0 0
    %2441 = vmatprep.subr.bf16.mxu0 0
    %2442 = vmatpush1.bf16.xpose.msra.mxu0 0
    %2443 = vmatprep.subr.bf16.mxu0 0
    %2444 = vmatpush1.bf16.xpose.msra.mxu0 0
    %2445 = vmatprep.subr.bf16.mxu0 0
    %2446 = vmatpush1.bf16.xpose.msra.mxu0 0
    %2447 = vmatprep.subr.bf16.mxu0 0
    %2448 = vmatpush1.bf16.xpose.msra.mxu0 0
    %2449 = vmatprep.subr.bf16.mxu0 0
    %2450 = vmatpush1.bf16.xpose.msra.mxu0 0
    %2451 = vmatprep.mubr.bf16.mxu0 0
    %2452 = vmatmul.mubr.bf16.gmra.mrb[0].mxu0 %v2414
    %v2453 = vpop.f32.mrb[0].mxu0
    %v2454 = vadd.f32 0.0, %v2453
    %v2455 = vpop.f32.mrb[0].mxu0
    %v2456 = vpop.f32.mrb[0].mxu0
    %v2457 = vpop.f32.mrb[0].mxu0
    %2458 = vdwg.mxu0
    %2459 = vrot.lane.b32.xlu0 %v1744, 32
    %v2460 = vpop.permute.xlu0 %2459
    %2461 = vrot.lane.b32.xlu0 %v1746, 32
    %v2462 = vpop.permute.xlu0 %2461
    %v2464 = vsel %vm136, %v2460, 0
    %v2467 = vsel %vm136, %v2462, 0
    %2469 = vmatprep.subr.bf16.mxu0 0
    %2470 = vmatpush1.bf16.xpose.msra.mxu0 %v2467
    %2471 = vmatprep.subr.bf16.mxu0 0
    %2472 = vmatpush1.bf16.xpose.msra.mxu0 0
    %2473 = vmatprep.subr.bf16.mxu0 0
    %2474 = vmatpush1.bf16.xpose.msra.mxu0 0
    %2475 = vmatprep.subr.bf16.mxu0 0
    %2476 = vmatpush1.bf16.xpose.msra.mxu0 0
    %2477 = vmatprep.subr.bf16.mxu0 0
    %2478 = vmatpush1.bf16.xpose.msra.mxu0 0
    %2479 = vmatprep.subr.bf16.mxu0 0
    %2480 = vmatpush1.bf16.xpose.msra.mxu0 0
    %2481 = vmatprep.subr.bf16.mxu0 0
    %2482 = vmatpush1.bf16.xpose.msra.mxu0 0
    %2483 = vmatprep.subr.bf16.mxu0 0
    %2484 = vmatpush1.bf16.xpose.msra.mxu0 0
    %2485 = vmatprep.subr.bf16.mxu0 0
    %2486 = vmatpush1.bf16.xpose.msra.mxu0 0
    %2487 = vmatprep.subr.bf16.mxu0 0
    %2488 = vmatpush1.bf16.xpose.msra.mxu0 0
    %2489 = vmatprep.subr.bf16.mxu0 0
    %2490 = vmatpush1.bf16.xpose.msra.mxu0 0
    %2491 = vmatprep.subr.bf16.mxu0 0
    %2492 = vmatpush1.bf16.xpose.msra.mxu0 0
    %2493 = vmatprep.subr.bf16.mxu0 0
    %2494 = vmatpush1.bf16.xpose.msra.mxu0 0
    %2495 = vmatprep.subr.bf16.mxu0 0
    %2496 = vmatpush1.bf16.xpose.msra.mxu0 0
    %2497 = vmatprep.subr.bf16.mxu0 0
    %2498 = vmatpush1.bf16.xpose.msra.mxu0 0
    %2499 = vmatprep.subr.bf16.mxu0 0
    %2500 = vmatpush1.bf16.xpose.msra.mxu0 0
    %2501 = vmatprep.mubr.bf16.mxu0 0
    %2502 = vmatmul.mubr.bf16.gmra.mrb[0].mxu0 %v2464
    %v2503 = vpop.f32.mrb[0].mxu0
    %v2504 = vadd.f32 0.0, %v2503
    %v2505 = vpop.f32.mrb[0].mxu0
    %v2506 = vpop.f32.mrb[0].mxu0
    %v2507 = vpop.f32.mrb[0].mxu0
    %2508 = vdwg.mxu0
    %v2509 = vmul.f32 %v2454, 0.17677669
    %v2510 = vmul.f32 %v2504, 0.17677669
    %v2511 = vsel %vm402, %v2509, -inf
    %2512 = vmax.xlane.f32.xlu0 %v2511
    %v2513 = vpop.xlane.xlu0 %2512
    %v2514 = vsel %vm402, %v2510, -inf
    %2515 = vmax.xlane.f32.xlu0 %v2514
    %v2516 = vpop.xlane.xlu0 %2515
    %v2517 = vsub.f32 %v2509, %v2513
    %v2518 = vsub.f32 %v2510, %v2516
    %v2519 = vmul.f32 %v2517, 1.442695
    %v2520 = vpow.pop %v2519
    %v2521 = vmul.f32 %v2518, 1.442695
    %v2522 = vpow.pop %v2521
    %v2523 = vsel %vm402, %v2520, 0.0
    %2524 = vadd.xlane.f32.xlu0 %v2523
    %v2525 = vpop.xlane.xlu0 %2524
    %v2526 = vsel %vm402, %v2522, 0.0
    %2527 = vadd.xlane.f32.xlu0 %v2526
    %v2528 = vpop.xlane.xlu0 %2527
    %v2529 = vrcp.pop %v2525
    %v2530 = vrcp.pop %v2528
    %v2531 = vmul.f32 %v2520, %v2529
    %v2532 = vmul.f32 %v2522, %v2530
    %v2533 = vpack.c.bf16 %v2531, %v2531
    %v2534 = vpack.c.bf16 %v2532, %v2532
    %2535 = vrot.lane.b32.xlu0 %v1865, 32
    %v2536 = vpop.permute.xlu0 %2535
    %v2538 = vsel %vm402, %v2533, 0
    %v2541 = vsel %vm432, %v2536, 0
    %2543 = vmatprep.subr.bf16.mxu0 0
    %2544 = vmatpush1.bf16.msra.mxu0 %v2541
    %2545 = vmatprep.subr.bf16.mxu0 0
    %2546 = vmatpush1.bf16.msra.mxu0 0
    %2547 = vmatprep.subr.bf16.mxu0 0
    %2548 = vmatpush1.bf16.msra.mxu0 0
    %2549 = vmatprep.subr.bf16.mxu0 0
    %2550 = vmatpush1.bf16.msra.mxu0 0
    %2551 = vmatprep.subr.bf16.mxu0 0
    %2552 = vmatpush1.bf16.msra.mxu0 0
    %2553 = vmatprep.subr.bf16.mxu0 0
    %2554 = vmatpush1.bf16.msra.mxu0 0
    %2555 = vmatprep.subr.bf16.mxu0 0
    %2556 = vmatpush1.bf16.msra.mxu0 0
    %2557 = vmatprep.subr.bf16.mxu0 0
    %2558 = vmatpush1.bf16.msra.mxu0 0
    %2559 = vmatprep.subr.bf16.mxu0 0
    %2560 = vmatpush1.bf16.msra.mxu0 0
    %2561 = vmatprep.subr.bf16.mxu0 0
    %2562 = vmatpush1.bf16.msra.mxu0 0
    %2563 = vmatprep.subr.bf16.mxu0 0
    %2564 = vmatpush1.bf16.msra.mxu0 0
    %2565 = vmatprep.subr.bf16.mxu0 0
    %2566 = vmatpush1.bf16.msra.mxu0 0
    %2567 = vmatprep.subr.bf16.mxu0 0
    %2568 = vmatpush1.bf16.msra.mxu0 0
    %2569 = vmatprep.subr.bf16.mxu0 0
    %2570 = vmatpush1.bf16.msra.mxu0 0
    %2571 = vmatprep.subr.bf16.mxu0 0
    %2572 = vmatpush1.bf16.msra.mxu0 0
    %2573 = vmatprep.subr.bf16.mxu0 0
    %2574 = vmatpush1.bf16.msra.mxu0 0
    %2575 = vmatprep.mubr.bf16.mxu0 0
    %2576 = vmatmul.mubr.bf16.gmra.mrb[0].mxu0 %v2538
    %v2577 = vpop.f32.mrb[0].mxu0
    %v2578 = vadd.f32 0.0, %v2577
    %v2579 = vpop.f32.mrb[0].mxu0
    %v2580 = vpop.f32.mrb[0].mxu0
    %v2581 = vpop.f32.mrb[0].mxu0
    %2582 = vdwg.mxu0
    %2583 = vrot.lane.b32.xlu0 %v1866, 32
    %v2584 = vpop.permute.xlu0 %2583
    %v2586 = vsel %vm402, %v2534, 0
    %v2589 = vsel %vm432, %v2584, 0
    %2591 = vmatprep.subr.bf16.mxu0 0
    %2592 = vmatpush1.bf16.msra.mxu0 %v2589
    %2593 = vmatprep.subr.bf16.mxu0 0
    %2594 = vmatpush1.bf16.msra.mxu0 0
    %2595 = vmatprep.subr.bf16.mxu0 0
    %2596 = vmatpush1.bf16.msra.mxu0 0
    %2597 = vmatprep.subr.bf16.mxu0 0
    %2598 = vmatpush1.bf16.msra.mxu0 0
    %2599 = vmatprep.subr.bf16.mxu0 0
    %2600 = vmatpush1.bf16.msra.mxu0 0
    %2601 = vmatprep.subr.bf16.mxu0 0
    %2602 = vmatpush1.bf16.msra.mxu0 0
    %2603 = vmatprep.subr.bf16.mxu0 0
    %2604 = vmatpush1.bf16.msra.mxu0 0
    %2605 = vmatprep.subr.bf16.mxu0 0
    %2606 = vmatpush1.bf16.msra.mxu0 0
    %2607 = vmatprep.subr.bf16.mxu0 0
    %2608 = vmatpush1.bf16.msra.mxu0 0
    %2609 = vmatprep.subr.bf16.mxu0 0
    %2610 = vmatpush1.bf16.msra.mxu0 0
    %2611 = vmatprep.subr.bf16.mxu0 0
    %2612 = vmatpush1.bf16.msra.mxu0 0
    %2613 = vmatprep.subr.bf16.mxu0 0
    %2614 = vmatpush1.bf16.msra.mxu0 0
    %2615 = vmatprep.subr.bf16.mxu0 0
    %2616 = vmatpush1.bf16.msra.mxu0 0
    %2617 = vmatprep.subr.bf16.mxu0 0
    %2618 = vmatpush1.bf16.msra.mxu0 0
    %2619 = vmatprep.subr.bf16.mxu0 0
    %2620 = vmatpush1.bf16.msra.mxu0 0
    %2621 = vmatprep.subr.bf16.mxu0 0
    %2622 = vmatpush1.bf16.msra.mxu0 0
    %2623 = vmatprep.mubr.bf16.mxu0 0
    %2624 = vmatmul.mubr.bf16.gmra.mrb[0].mxu0 %v2586
    %v2625 = vpop.f32.mrb[0].mxu0
    %v2626 = vadd.f32 0.0, %v2625
    %v2627 = vpop.f32.mrb[0].mxu0
    %v2628 = vpop.f32.mrb[0].mxu0
    %v2629 = vpop.f32.mrb[0].mxu0
    %2630 = vdwg.mxu0
    %2633 = vrot.lane.b32.xlu0 %v2133, 32
    %v2634 = vpop.permute.xlu0 %2633
    %2635 = vrot.lane.b32.xlu0 %v2182, 32
    %v2636 = vpop.permute.xlu0 %2635
    %2641 = vrot.lane.b32.xlu0 %v2356, 64
    %v2642 = vpop.permute.xlu0 %2641
    %2643 = vrot.lane.b32.xlu0 %v2404, 64
    %v2644 = vpop.permute.xlu0 %2643
    %2649 = vrot.lane.b32.xlu0 %v2578, 96
    %v2650 = vpop.permute.xlu0 %2649
    %2651 = vrot.lane.b32.xlu0 %v2626, 96
    %v2652 = vpop.permute.xlu0 %2651
    %v2655 = vsel %vm136, %v1908, %v2634
    %v2656 = vsel %vm136, %v1954, %v2636
    %v2657 = vsel %vm89, %v2655, %v2642
    %v2658 = vsel %vm89, %v2656, %v2644
    %v2659 = vsel %vm1222, %v2657, %v2650
    %v2660 = vsel %vm1222, %v2658, %v2652
    %v2661 = vpack.c.bf16 %v2660, %v2659
    %s2662 = scalar_lea.vmem %s5, 64
    %v2663 = vld [vmem:[%s2662] sm:$0xf]
    %v2664 = vld [vmem:[%s2662 + $0x4] sm:$0xf]
    %v2665 = vld [vmem:[%s2662 + $0x8] sm:$0xf]
    %v2666 = vld [vmem:[%s2662 + $0xc] sm:$0xf]
    %v2667 = vld [vmem:[%s2662 + $0x10] sm:$0xf]
    %v2668 = vld [vmem:[%s2662 + $0x14] sm:$0xf]
    %v2669 = vld [vmem:[%s2662 + $0x18] sm:$0xf]
    %v2670 = vld [vmem:[%s2662 + $0x1c] sm:$0xf]
    %v2671 = vld [vmem:[%s2662 + $0x20] sm:$0xf]
    %v2672 = vld [vmem:[%s2662 + $0x24] sm:$0xf]
    %v2673 = vld [vmem:[%s2662 + $0x28] sm:$0xf]
    %v2674 = vld [vmem:[%s2662 + $0x2c] sm:$0xf]
    %v2675 = vld [vmem:[%s2662 + $0x30] sm:$0xf]
    %v2676 = vld [vmem:[%s2662 + $0x34] sm:$0xf]
    %v2677 = vld [vmem:[%s2662 + $0x38] sm:$0xf]
    %v2678 = vld [vmem:[%s2662 + $0x3c] sm:$0xf]
    %v2679 = vlaneseq
    %v2680 = vshrl.u32 %v2679, 7
    %v2681 = vsub.s32 4, %v2680
    %v2682 = vrot.slane %v1573, %v2681
    %v2699 = vunpack.c.l.b16 %v2663
    %v2700 = vunpack.c.l.b16 %v2664
    %v2701 = vunpack.c.l.b16 %v2665
    %v2702 = vunpack.c.l.b16 %v2666
    %v2703 = vunpack.c.l.b16 %v2667
    %v2704 = vunpack.c.l.b16 %v2668
    %v2705 = vunpack.c.l.b16 %v2669
    %v2706 = vunpack.c.l.b16 %v2670
    %v2707 = vunpack.c.l.b16 %v2671
    %v2708 = vunpack.c.l.b16 %v2672
    %v2709 = vunpack.c.l.b16 %v2673
    %v2710 = vunpack.c.l.b16 %v2674
    %v2711 = vunpack.c.l.b16 %v2675
    %v2712 = vunpack.c.l.b16 %v2676
    %v2713 = vunpack.c.l.b16 %v2677
    %v2714 = vunpack.c.l.b16 %v2678
    %v2715 = vpack.c.b16 %v2700, %v2699
    %v2716 = vpack.c.b16 %v2702, %v2701
    %v2717 = vpack.c.b16 %v2704, %v2703
    %v2718 = vpack.c.b16 %v2706, %v2705
    %v2719 = vpack.c.b16 %v2708, %v2707
    %v2720 = vpack.c.b16 %v2710, %v2709
    %v2721 = vpack.c.b16 %v2712, %v2711
    %v2722 = vpack.c.b16 %v2714, %v2713
    %2731 = vmatprep.subr.bf16.mxu0 0
    %2732 = vmatpush1.bf16.msra.mxu0 %v2715
    %2733 = vmatprep.subr.bf16.mxu0 0
    %2734 = vmatpush1.bf16.msra.mxu0 %v2716
    %2735 = vmatprep.subr.bf16.mxu0 0
    %2736 = vmatpush1.bf16.msra.mxu0 %v2717
    %2737 = vmatprep.subr.bf16.mxu0 0
    %2738 = vmatpush1.bf16.msra.mxu0 %v2718
    %2739 = vmatprep.subr.bf16.mxu0 0
    %2740 = vmatpush1.bf16.msra.mxu0 %v2719
    %2741 = vmatprep.subr.bf16.mxu0 0
    %2742 = vmatpush1.bf16.msra.mxu0 %v2720
    %2743 = vmatprep.subr.bf16.mxu0 0
    %2744 = vmatpush1.bf16.msra.mxu0 %v2721
    %2745 = vmatprep.subr.bf16.mxu0 0
    %2746 = vmatpush1.bf16.msra.mxu0 %v2722
    %2747 = vmatprep.subr.bf16.mxu0 0
    %2748 = vmatpush1.bf16.msra.mxu0 0
    %2749 = vmatprep.subr.bf16.mxu0 0
    %2750 = vmatpush1.bf16.msra.mxu0 0
    %2751 = vmatprep.subr.bf16.mxu0 0
    %2752 = vmatpush1.bf16.msra.mxu0 0
    %2753 = vmatprep.subr.bf16.mxu0 0
    %2754 = vmatpush1.bf16.msra.mxu0 0
    %2755 = vmatprep.subr.bf16.mxu0 0
    %2756 = vmatpush1.bf16.msra.mxu0 0
    %2757 = vmatprep.subr.bf16.mxu0 0
    %2758 = vmatpush1.bf16.msra.mxu0 0
    %2759 = vmatprep.subr.bf16.mxu0 0
    %2760 = vmatpush1.bf16.msra.mxu0 0
    %2761 = vmatprep.subr.bf16.mxu0 0
    %2762 = vmatpush1.bf16.msra.mxu0 0
    %2763 = vmatprep.mubr.bf16.mxu0 0
    %2764 = vmatmul.mubr.bf16.gmra.mrb[0].mxu0 %v2661
    %v2765 = vpop.f32.mrb[0].mxu0
    %v2766 = vadd.f32 %v2682, %v2765
    %v2767 = vpop.f32.mrb[0].mxu0
    %v2768 = vpop.f32.mrb[0].mxu0
    %v2769 = vadd.f32 %v2682, %v2768
    %v2770 = vpop.f32.mrb[0].mxu0
    %2771 = vdwg.mxu0
    %v2772 = vadd.f32 %v1570, %v2766
    %v2773 = vadd.f32 %v1571, %v2769
    %v2774 = vsel %vm136, %v2772, 0.0
    %2775 = vadd.xlane.f32.xlu0 %v2774
    %v2776 = vpop.xlane.xlu0 %2775
    %v2777 = vsel %vm136, %v2773, 0.0
    %2778 = vadd.xlane.f32.xlu0 %v2777
    %v2779 = vpop.xlane.xlu0 %2778
    %v2780 = vmul.f32 %v2776, %v143
    %v2781 = vmul.f32 %v2779, %v143
    %v2782 = vsub.f32 %v2772, %v2780
    %v2783 = vsub.f32 %v2773, %v2781
    %v2784 = vmul.f32 %v2782, %v2782
    %v2785 = vmul.f32 %v2783, %v2783
    %v2786 = vsel %vm136, %v2784, 0.0
    %2787 = vadd.xlane.f32.xlu0 %v2786
    %v2788 = vpop.xlane.xlu0 %2787
    %v2789 = vsel %vm136, %v2785, 0.0
    %2790 = vadd.xlane.f32.xlu0 %v2789
    %v2791 = vpop.xlane.xlu0 %2790
    %v2792 = vmul.f32 %v2788, %v143
    %v2793 = vmul.f32 %v2791, %v143
    %v2794 = vadd.f32 %v2792, 1e-05
    %v2795 = vadd.f32 %v2793, 1e-05
    %v2796 = vrsqrt.pop %v2794
    %v2797 = vrsqrt.pop %v2795
    %v2798 = vmul.f32 %v2782, %v2796
    %v2799 = vmul.f32 %v2783, %v2797
    %v2800 = vlaneseq
    %v2801 = vshrl.u32 %v2800, 7
    %v2802 = vsub.s32 2, %v2801
    %v2803 = vrot.slane %v1573, %v2802
    %v2804 = vmul.f32 %v2798, %v2803
    %v2805 = vmul.f32 %v2799, %v2803
    %v2806 = vlaneseq
    %v2807 = vshrl.u32 %v2806, 7
    %v2808 = vsub.s32 3, %v2807
    %v2809 = vrot.slane %v1573, %v2808
    %v2810 = vadd.f32 %v2804, %v2809
    %v2811 = vadd.f32 %v2805, %v2809
    %v2812 = vpack.c.bf16 %v2811, %v2810
    %s2813 = scalar_lea.vmem %s6, 16
    %v2814 = vld [vmem:[%s2813] sm:$0xf]
    %v2815 = vld [vmem:[%s2813 + $0x4] sm:$0xf]
    %v2816 = vld [vmem:[%s2813 + $0x8] sm:$0xf]
    %v2817 = vld [vmem:[%s2813 + $0xc] sm:$0xf]
    %v2819 = vlaneseq
    %v2820 = vshrl.u32 %v2819, 7
    %v2821 = vsub.s32 0, %v2820
    %v2822 = vrot.slane %v1575, %v2821
    %v2828 = vunpack.c.l.b16 %v2814
    %v2829 = vunpack.c.l.b16 %v2815
    %v2830 = vunpack.c.l.b16 %v2816
    %v2831 = vunpack.c.l.b16 %v2817
    %v2832 = vpack.c.b16 %v2829, %v2828
    %v2833 = vpack.c.b16 %v2831, %v2830
    %v2837 = vsel %vm136, %v2812, 0
    %2839 = vmatprep.subr.bf16.mxu0 0
    %2840 = vmatpush1.bf16.msra.mxu0 %v2832
    %2841 = vmatprep.subr.bf16.mxu0 0
    %2842 = vmatpush1.bf16.msra.mxu0 %v2833
    %2843 = vmatprep.subr.bf16.mxu0 0
    %2844 = vmatpush1.bf16.msra.mxu0 0
    %2845 = vmatprep.subr.bf16.mxu0 0
    %2846 = vmatpush1.bf16.msra.mxu0 0
    %2847 = vmatprep.subr.bf16.mxu0 0
    %2848 = vmatpush1.bf16.msra.mxu0 0
    %2849 = vmatprep.subr.bf16.mxu0 0
    %2850 = vmatpush1.bf16.msra.mxu0 0
    %2851 = vmatprep.subr.bf16.mxu0 0
    %2852 = vmatpush1.bf16.msra.mxu0 0
    %2853 = vmatprep.subr.bf16.mxu0 0
    %2854 = vmatpush1.bf16.msra.mxu0 0
    %2855 = vmatprep.subr.bf16.mxu0 0
    %2856 = vmatpush1.bf16.msra.mxu0 0
    %2857 = vmatprep.subr.bf16.mxu0 0
    %2858 = vmatpush1.bf16.msra.mxu0 0
    %2859 = vmatprep.subr.bf16.mxu0 0
    %2860 = vmatpush1.bf16.msra.mxu0 0
    %2861 = vmatprep.subr.bf16.mxu0 0
    %2862 = vmatpush1.bf16.msra.mxu0 0
    %2863 = vmatprep.subr.bf16.mxu0 0
    %2864 = vmatpush1.bf16.msra.mxu0 0
    %2865 = vmatprep.subr.bf16.mxu0 0
    %2866 = vmatpush1.bf16.msra.mxu0 0
    %2867 = vmatprep.subr.bf16.mxu0 0
    %2868 = vmatpush1.bf16.msra.mxu0 0
    %2869 = vmatprep.subr.bf16.mxu0 0
    %2870 = vmatpush1.bf16.msra.mxu0 0
    %2871 = vmatprep.mubr.bf16.mxu0 0
    %2872 = vmatmul.mubr.bf16.gmra.mrb[0].mxu0 %v2837
    %v2873 = vpop.f32.mrb[0].mxu0
    %v2874 = vadd.f32 %v2822, %v2873
    %v2875 = vpop.f32.mrb[0].mxu0
    %v2876 = vpop.f32.mrb[0].mxu0
    %v2877 = vadd.f32 %v2822, %v2876
    %v2878 = vpop.f32.mrb[0].mxu0
    %2879 = vdwg.mxu0
    %v2880 = vmul.f32 %v2874, 0.5
    %v2881 = vmul.f32 %v2877, 0.5
    %v2882 = vmul.f32 %v2874, 0.044715
    %v2883 = vmul.f32 %v2877, 0.044715
    %v2884 = vmul.f32 %v2882, %v2874
    %v2885 = vmul.f32 %v2883, %v2877
    %v2886 = vmul.f32 %v2884, %v2874
    %v2887 = vmul.f32 %v2885, %v2877
    %v2888 = vadd.f32 %v2874, %v2886
    %v2889 = vadd.f32 %v2877, %v2887
    %v2890 = vmul.f32 %v2888, 0.7978846
    %v2891 = vmul.f32 %v2889, 0.7978846
    %v2892 = vtanh.pop %v2890
    %v2893 = vtanh.pop %v2891
    %v2894 = vadd.f32 %v2892, 1.0
    %v2895 = vadd.f32 %v2893, 1.0
    %v2896 = vmul.f32 %v2880, %v2894
    %v2897 = vmul.f32 %v2881, %v2895
    %v2898 = vpack.c.bf16 %v2897, %v2896
    %s2899 = scalar_lea.vmem %s7, 64
    %v2900 = vld [vmem:[%s2899] sm:$0xf]
    %v2901 = vld [vmem:[%s2899 + $0x4] sm:$0xf]
    %v2902 = vld [vmem:[%s2899 + $0x8] sm:$0xf]
    %v2903 = vld [vmem:[%s2899 + $0xc] sm:$0xf]
    %v2904 = vld [vmem:[%s2899 + $0x10] sm:$0xf]
    %v2905 = vld [vmem:[%s2899 + $0x14] sm:$0xf]
    %v2906 = vld [vmem:[%s2899 + $0x18] sm:$0xf]
    %v2907 = vld [vmem:[%s2899 + $0x1c] sm:$0xf]
    %v2908 = vld [vmem:[%s2899 + $0x20] sm:$0xf]
    %v2909 = vld [vmem:[%s2899 + $0x24] sm:$0xf]
    %v2910 = vld [vmem:[%s2899 + $0x28] sm:$0xf]
    %v2911 = vld [vmem:[%s2899 + $0x2c] sm:$0xf]
    %v2912 = vld [vmem:[%s2899 + $0x30] sm:$0xf]
    %v2913 = vld [vmem:[%s2899 + $0x34] sm:$0xf]
    %v2914 = vld [vmem:[%s2899 + $0x38] sm:$0xf]
    %v2915 = vld [vmem:[%s2899 + $0x3c] sm:$0xf]
    %v2916 = vlaneseq
    %v2917 = vshrl.u32 %v2916, 7
    %v2918 = vsub.s32 5, %v2917
    %v2919 = vrot.slane %v1573, %v2918
    %v2936 = vunpack.c.l.b16 %v2900
    %v2937 = vunpack.c.l.b16 %v2901
    %v2938 = vunpack.c.l.b16 %v2902
    %v2939 = vunpack.c.l.b16 %v2903
    %v2940 = vunpack.c.l.b16 %v2904
    %v2941 = vunpack.c.l.b16 %v2905
    %v2942 = vunpack.c.l.b16 %v2906
    %v2943 = vunpack.c.l.b16 %v2907
    %v2944 = vunpack.c.l.b16 %v2908
    %v2945 = vunpack.c.l.b16 %v2909
    %v2946 = vunpack.c.l.b16 %v2910
    %v2947 = vunpack.c.l.b16 %v2911
    %v2948 = vunpack.c.l.b16 %v2912
    %v2949 = vunpack.c.l.b16 %v2913
    %v2950 = vunpack.c.l.b16 %v2914
    %v2951 = vunpack.c.l.b16 %v2915
    %v2952 = vpack.c.b16 %v2937, %v2936
    %v2953 = vpack.c.b16 %v2939, %v2938
    %v2954 = vpack.c.b16 %v2941, %v2940
    %v2955 = vpack.c.b16 %v2943, %v2942
    %v2956 = vpack.c.b16 %v2945, %v2944
    %v2957 = vpack.c.b16 %v2947, %v2946
    %v2958 = vpack.c.b16 %v2949, %v2948
    %v2959 = vpack.c.b16 %v2951, %v2950
    %2968 = vmatprep.subr.bf16.mxu0 0
    %2969 = vmatpush1.bf16.msra.mxu0 %v2952
    %2970 = vmatprep.subr.bf16.mxu0 0
    %2971 = vmatpush1.bf16.msra.mxu0 %v2953
    %2972 = vmatprep.subr.bf16.mxu0 0
    %2973 = vmatpush1.bf16.msra.mxu0 %v2954
    %2974 = vmatprep.subr.bf16.mxu0 0
    %2975 = vmatpush1.bf16.msra.mxu0 %v2955
    %2976 = vmatprep.subr.bf16.mxu0 0
    %2977 = vmatpush1.bf16.msra.mxu0 %v2956
    %2978 = vmatprep.subr.bf16.mxu0 0
    %2979 = vmatpush1.bf16.msra.mxu0 %v2957
    %2980 = vmatprep.subr.bf16.mxu0 0
    %2981 = vmatpush1.bf16.msra.mxu0 %v2958
    %2982 = vmatprep.subr.bf16.mxu0 0
    %2983 = vmatpush1.bf16.msra.mxu0 %v2959
    %2984 = vmatprep.subr.bf16.mxu0 0
    %2985 = vmatpush1.bf16.msra.mxu0 0
    %2986 = vmatprep.subr.bf16.mxu0 0
    %2987 = vmatpush1.bf16.msra.mxu0 0
    %2988 = vmatprep.subr.bf16.mxu0 0
    %2989 = vmatpush1.bf16.msra.mxu0 0
    %2990 = vmatprep.subr.bf16.mxu0 0
    %2991 = vmatpush1.bf16.msra.mxu0 0
    %2992 = vmatprep.subr.bf16.mxu0 0
    %2993 = vmatpush1.bf16.msra.mxu0 0
    %2994 = vmatprep.subr.bf16.mxu0 0
    %2995 = vmatpush1.bf16.msra.mxu0 0
    %2996 = vmatprep.subr.bf16.mxu0 0
    %2997 = vmatpush1.bf16.msra.mxu0 0
    %2998 = vmatprep.subr.bf16.mxu0 0
    %2999 = vmatpush1.bf16.msra.mxu0 0
    %3000 = vmatprep.mubr.bf16.mxu0 0
    %3001 = vmatmul.mubr.bf16.gmra.mrb[0].mxu0 %v2898
    %v3002 = vpop.f32.mrb[0].mxu0
    %v3003 = vadd.f32 %v2919, %v3002
    %v3004 = vpop.f32.mrb[0].mxu0
    %v3005 = vpop.f32.mrb[0].mxu0
    %v3006 = vadd.f32 %v2919, %v3005
    %v3007 = vpop.f32.mrb[0].mxu0
    %3008 = vdwg.mxu0
    %v3009 = vadd.f32 %v2772, %v3003
    %v3010 = vadd.f32 %v2773, %v3006
    %v3011 = vld [vmem:[%s8] sm:$0xf]
    %v3012 = vsel %vm136, %v3009, 0.0
    %3013 = vadd.xlane.f32.xlu0 %v3012
    %v3014 = vpop.xlane.xlu0 %3013
    %v3015 = vsel %vm136, %v3010, 0.0
    %3016 = vadd.xlane.f32.xlu0 %v3015
    %v3017 = vpop.xlane.xlu0 %3016
    %v3018 = vmul.f32 %v3014, %v143
    %v3019 = vmul.f32 %v3017, %v143
    %v3020 = vsub.f32 %v3009, %v3018
    %v3021 = vsub.f32 %v3010, %v3019
    %v3022 = vmul.f32 %v3020, %v3020
    %v3023 = vmul.f32 %v3021, %v3021
    %v3024 = vsel %vm136, %v3022, 0.0
    %3025 = vadd.xlane.f32.xlu0 %v3024
    %v3026 = vpop.xlane.xlu0 %3025
    %v3027 = vsel %vm136, %v3023, 0.0
    %3028 = vadd.xlane.f32.xlu0 %v3027
    %v3029 = vpop.xlane.xlu0 %3028
    %v3030 = vmul.f32 %v3026, %v143
    %v3031 = vmul.f32 %v3029, %v143
    %v3032 = vadd.f32 %v3030, 1e-05
    %v3033 = vadd.f32 %v3031, 1e-05
    %v3034 = vrsqrt.pop %v3032
    %v3035 = vrsqrt.pop %v3033
    %v3036 = vmul.f32 %v3020, %v3034
    %v3037 = vmul.f32 %v3021, %v3035
    %v3038 = vlaneseq
    %v3039 = vshrl.u32 %v3038, 7
    %v3040 = vsub.s32 0, %v3039
    %v3041 = vrot.slane %v3011, %v3040
    %v3042 = vmul.f32 %v3036, %v3041
    %v3043 = vmul.f32 %v3037, %v3041
    %v3044 = vlaneseq
    %v3045 = vshrl.u32 %v3044, 7
    %v3046 = vsub.s32 1, %v3045
    %v3047 = vrot.slane %v3011, %v3046
    %v3048 = vadd.f32 %v3042, %v3047
    %v3049 = vadd.f32 %v3043, %v3047
    %v3050 = vsel %vm136, %v3048, 0.0
    %3051 = vadd.xlane.f32.xlu0 %v3050
    %v3052 = vpop.xlane.xlu0 %3051
    %v3053 = vsel %vm136, %v3049, 0.0
    %3054 = vadd.xlane.f32.xlu0 %v3053
    %v3055 = vpop.xlane.xlu0 %3054
    %v3056 = vmul.f32 %v3052, %v143
    %v3057 = vmul.f32 %v3055, %v143
    %v3058 = vsub.f32 %v3048, %v3056
    %v3059 = vsub.f32 %v3049, %v3057
    %v3060 = vmul.f32 %v3058, %v3058
    %v3061 = vmul.f32 %v3059, %v3059
    %v3062 = vsel %vm136, %v3060, 0.0
    %3063 = vadd.xlane.f32.xlu0 %v3062
    %v3064 = vpop.xlane.xlu0 %3063
    %v3065 = vsel %vm136, %v3061, 0.0
    %3066 = vadd.xlane.f32.xlu0 %v3065
    %v3067 = vpop.xlane.xlu0 %3066
    %v3068 = vmul.f32 %v3064, %v143
    %v3069 = vmul.f32 %v3067, %v143
    %v3070 = vadd.f32 %v3068, 1e-05
    %v3071 = vadd.f32 %v3069, 1e-05
    %v3072 = vrsqrt.pop %v3070
    %v3073 = vrsqrt.pop %v3071
    %v3074 = vmul.f32 %v3058, %v3072
    %v3075 = vmul.f32 %v3059, %v3073
    %v3076 = vlaneseq
    %v3077 = vshrl.u32 %v3076, 7
    %v3078 = vsub.s32 2, %v3077
    %v3079 = vrot.slane %v3011, %v3078
    %v3080 = vmul.f32 %v3074, %v3079
    %v3081 = vmul.f32 %v3075, %v3079
    %v3082 = vlaneseq
    %v3083 = vshrl.u32 %v3082, 7
    %v3084 = vsub.s32 3, %v3083
    %v3085 = vrot.slane %v3011, %v3084
    %v3086 = vadd.f32 %v3080, %v3085
    %v3087 = vadd.f32 %v3081, %v3085
    %v3088 = vpack.c.bf16 %v3087, %v3086
    %v3089 = vld [vmem:[%s9] sm:$0xf]
    %v3090 = vld [vmem:[%s9 + $0x4] sm:$0xf]
    %v3091 = vld [vmem:[%s9 + $0x8] sm:$0xf]
    %v3092 = vld [vmem:[%s9 + $0xc] sm:$0xf]
    %v3093 = vld [vmem:[%s10] sm:$0x1]
    %v3095 = vlaneseq
    %v3096 = vshrl.u32 %v3095, 7
    %v3097 = vsub.s32 0, %v3096
    %v3098 = vrot.slane %v3093, %v3097
    %v3104 = vunpack.c.l.b16 %v3089
    %v3105 = vunpack.c.l.b16 %v3090
    %v3106 = vunpack.c.l.b16 %v3091
    %v3107 = vunpack.c.l.b16 %v3092
    %v3108 = vpack.c.b16 %v3105, %v3104
    %v3109 = vpack.c.b16 %v3107, %v3106
    %v3113 = vsel %vm136, %v3088, 0
    %3115 = vmatprep.subr.bf16.mxu0 0
    %3116 = vmatpush1.bf16.msra.mxu0 %v3108
    %3117 = vmatprep.subr.bf16.mxu0 0
    %3118 = vmatpush1.bf16.msra.mxu0 %v3109
    %3119 = vmatprep.subr.bf16.mxu0 0
    %3120 = vmatpush1.bf16.msra.mxu0 0
    %3121 = vmatprep.subr.bf16.mxu0 0
    %3122 = vmatpush1.bf16.msra.mxu0 0
    %3123 = vmatprep.subr.bf16.mxu0 0
    %3124 = vmatpush1.bf16.msra.mxu0 0
    %3125 = vmatprep.subr.bf16.mxu0 0
    %3126 = vmatpush1.bf16.msra.mxu0 0
    %3127 = vmatprep.subr.bf16.mxu0 0
    %3128 = vmatpush1.bf16.msra.mxu0 0
    %3129 = vmatprep.subr.bf16.mxu0 0
    %3130 = vmatpush1.bf16.msra.mxu0 0
    %3131 = vmatprep.subr.bf16.mxu0 0
    %3132 = vmatpush1.bf16.msra.mxu0 0
    %3133 = vmatprep.subr.bf16.mxu0 0
    %3134 = vmatpush1.bf16.msra.mxu0 0
    %3135 = vmatprep.subr.bf16.mxu0 0
    %3136 = vmatpush1.bf16.msra.mxu0 0
    %3137 = vmatprep.subr.bf16.mxu0 0
    %3138 = vmatpush1.bf16.msra.mxu0 0
    %3139 = vmatprep.subr.bf16.mxu0 0
    %3140 = vmatpush1.bf16.msra.mxu0 0
    %3141 = vmatprep.subr.bf16.mxu0 0
    %3142 = vmatpush1.bf16.msra.mxu0 0
    %3143 = vmatprep.subr.bf16.mxu0 0
    %3144 = vmatpush1.bf16.msra.mxu0 0
    %3145 = vmatprep.subr.bf16.mxu0 0
    %3146 = vmatpush1.bf16.msra.mxu0 0
    %3147 = vmatprep.mubr.bf16.mxu0 0
    %3148 = vmatmul.mubr.bf16.gmra.mrb[0].mxu0 %v3113
    %v3149 = vpop.f32.mrb[0].mxu0
    %v3150 = vadd.f32 %v3098, %v3149
    %v3151 = vpop.f32.mrb[0].mxu0
    %v3152 = vpop.f32.mrb[0].mxu0
    %v3153 = vadd.f32 %v3098, %v3152
    %v3154 = vpop.f32.mrb[0].mxu0
    %3155 = vdwg.mxu0
    %3156 = vmax.xlane.f32.xlu0 %v3150
    %v3157 = vpop.xlane.xlu0 %3156
    %3158 = vmax.xlane.f32.xlu0 %v3153
    %v3159 = vpop.xlane.xlu0 %3158
    %v3160 = vsub.f32 %v3150, %v3157
    %v3161 = vsub.f32 %v3153, %v3159
    %v3162 = vmul.f32 %v3160, 1.442695
    %v3163 = vpow.pop %v3162
    %v3164 = vmul.f32 %v3161, 1.442695
    %v3165 = vpow.pop %v3164
    %3166 = vadd.xlane.f32.xlu0 %v3163
    %v3167 = vpop.xlane.xlu0 %3166
    %3168 = vadd.xlane.f32.xlu0 %v3165
    %v3169 = vpop.xlane.xlu0 %3168
    %v3170 = vrcp.pop %v3167
    %v3171 = vmul.f32 %v3163, %v3170
    %v3172 = vrcp.pop %v3169
    %v3173 = vmul.f32 %v3165, %v3172
    %3174 = vst [vmem:[#allocation2] sm:$0xff] %v3171
    %3175 = vst [vmem:[#allocation2 + $0x8] sm:$0xff] %v3173
    // Predicated region
    $region46: #{tpu_custom_call.1} parent=1 // pred_check
      _
    $region47: #{tpu_custom_call.1} parent=1 // pred_check_branch
      %3177 = sbr.rel (0) target = $region49
    $region48: #{tpu_custom_call.1} parent=1 // pred_region
      %s3179 = ssub.s32 256, 256
      %3180 = vsyncadd [#allocation3], %s3179
      %s3181 = sshll.u32 [#allocation2], 4
      %s3182 = int_to_ptr.vmem [resolvable:$true] %s3181
      %3187 = dma.vmem_to_hbm [thread:$0]  %s3182, 256, %s11, [#allocation3], 128, 128, 8
    $region49: #{tpu_custom_call.1} parent=1 // pred_fallthru
      _
    // Predicated region
    $region50: #{tpu_custom_call.1} parent=1 // pred_check
      _
    $region51: #{tpu_custom_call.1} parent=1 // pred_check_branch
      %3189 = sbr.rel (0) target = $region53
    $region52: #{tpu_custom_call.1} parent=1 // pred_region
      %3190 = dma.done [#allocation3], 256
    $region53: #{tpu_custom_call.1} parent=1 // pred_fallthru
      _
    %3191 = vsyncpa [#allocation3], 1

</llo_original>
